<compile_context>
chip_gen: v5e
topology: v5e:2x2
jax: 0.10.0
libtpu: 0.0.40
codegen_flags: <defaults>
</compile_context>

<pallas_src>
import jax
import jax.numpy as jnp
from jax.experimental import pallas as pl
from jax.experimental.pallas import tpu as pltpu

EMB = 512
IN_FEAT = EMB * 3   # 1536
HID = 512
OUT = 1


def _round_up(x, m):
    return (x + m - 1) // m * m


def mlp_kernel(bb_ref, img_ref, txt_ref,
               w1_ref, b1_ref, w2_ref, b2_ref, w3_ref, b3_ref,
               out_ref):
    # fc1 split over K (replaces torch.cat): each static slice of w1_ref is a
    # zero-cost view; three bf16 MXU dots accumulate into one f32 (tb, 512).
    # Activations are cast to bf16 in-register right before each dot.
    h1 = jnp.dot(bb_ref[...].astype(jnp.bfloat16), w1_ref[0:EMB, :],
                 preferred_element_type=jnp.float32)
    h1 += jnp.dot(img_ref[...].astype(jnp.bfloat16), w1_ref[EMB:2 * EMB, :],
                  preferred_element_type=jnp.float32)
    h1 += jnp.dot(txt_ref[...].astype(jnp.bfloat16), w1_ref[2 * EMB:3 * EMB, :],
                  preferred_element_type=jnp.float32)
    h1 = jnp.maximum(h1 + b1_ref[...], 0.0)
    # Dropout(p=0.4): eval-mode identity (inference).
    # TODO(synk): training-mode dropout would need pltpu.prng_seed/prng_random_bits.

    # fc2 + ReLU (bf16 weights, f32 accumulation).
    h2 = jnp.dot(h1.astype(jnp.bfloat16), w2_ref[...],
                 preferred_element_type=jnp.float32)
    h2 = jnp.maximum(h2 + b2_ref[...], 0.0)

    # fc3: output dim is 1 -> VPU multiply + lane (XLU) reduction, keeping the
    # MXU free of a 128x-padded N=1 matmul.
    logit = jnp.sum(h2 * w3_ref[...], axis=-1, keepdims=True)   # (tb, 1)
    # NOTE: the review's lane-dense (1, tb) output layout is deliberately not
    # applied: turning the lane-reduced column into a lane-dense row needs an
    # extra sublane->lane relayout/transpose (or an M=1 MXU matmul, ~+12% MXU
    # work on MXU-bound v5e) to save only a handful of masked stores per step.
    out_ref[...] = logit + b3_ref[0, 0]


def custom_classifier(bb_embed, img_emb, text_emb, params, *, block_b=1024):
    """params:
         w1t (1536, 512) bf16, b1 (1, 512) f32,
         w2t (512, 512)  bf16, b2 (1, 512) f32,
         w3row (1, 512)  f32,  b3 (1, 1)   f32 (SMEM scalar).
       Inputs may be f32 or bf16 (B, 512). Returns (B, 1) f32 logits."""
    B = bb_embed.shape[0]
    w1t, b1 = params["w1t"], params["b1"]
    w2t, b2 = params["w2t"], params["b2"]
    w3row, b3 = params["w3row"], params["b3"]

    # Batch tile: as large as possible (amortize per-step overhead), but
    # (a) a multiple of 8 sublanes and (b) capped so the grid keeps >= 2
    # "parallel" steps (v7x megacore) whenever the batch is big enough to split.
    tb = min(block_b, max(8, _round_up(pl.cdiv(B, 2), 8)))
    if tb >= B:
        tb = B                       # single full block (always a legal shape)
    grid_n = pl.cdiv(B, tb)          # partial last block is clipped by Pallas

    act_spec = pl.BlockSpec((tb, EMB), lambda i: (i, 0))
    # Constant index_map -> VMEM-resident across the grid; single-buffered
    # since the block never changes (no double buffer needed).
    resident = lambda shape: pl.BlockSpec(shape, lambda i: (0, 0),
                                          pipeline_mode=pl.Buffered(1))

    return pl.pallas_call(
        mlp_kernel,
        out_shape=jax.ShapeDtypeStruct((B, OUT), jnp.float32),
        grid=(grid_n,),
        in_specs=[
            act_spec, act_spec, act_spec,
            resident(w1t.shape), resident(b1.shape),
            resident(w2t.shape), resident(b2.shape),
            resident(w3row.shape),
            pl.BlockSpec(memory_space=pltpu.MemorySpace.SMEM),   # b3 scalar
        ],
        out_specs=pl.BlockSpec((tb, OUT), lambda i: (i, 0)),
        compiler_params=pltpu.CompilerParams(
            dimension_semantics=("parallel",),
            # Budgeted for v7x (64 MiB physical / 32 MiB scoped default):
            # tb=1024 -> 3 x 2 MiB f32 activation tiles double-buffered
            # (12 MiB) + ~2 MiB single-buffered bf16 weights + scratch << 32 MiB.
            vmem_limit_bytes=32 * 1024 * 1024,
        ),
    )(bb_embed, img_emb, text_emb, w1t, b1, w2t, b2, w3row, b3)


def init_params(key):
    """Deterministic init mirroring nn.Linear (uniform(-1/sqrt(fan_in), +)).
    Returns (kernel_params, f32_reference_params)."""
    k1, k2, k3, k4, k5, k6 = jax.random.split(key, 6)

    def lin(kw, kb, fan_in, fan_out):
        bound = 1.0 / jnp.sqrt(fan_in)
        w = jax.random.uniform(kw, (fan_out, fan_in), jnp.float32, -bound, bound)
        b = jax.random.uniform(kb, (fan_out,), jnp.float32, -bound, bound)
        return w, b

    w1, b1 = lin(k1, k2, IN_FEAT, HID)   # fc1: (512, 1536), (512,)
    w2, b2 = lin(k3, k4, HID, HID)       # fc2: (512, 512),  (512,)
    w3, b3 = lin(k5, k6, HID, OUT)       # fc3: (1, 512),    (1,)

    kernel_params = {
        "w1t": w1.T.astype(jnp.bfloat16),        # (1536, 512) bf16
        "b1": b1.reshape(1, HID),                # (1, 512)    f32
        "w2t": w2.T.astype(jnp.bfloat16),        # (512, 512)  bf16
        "b2": b2.reshape(1, HID),                # (1, 512)    f32
        "w3row": w3.reshape(1, HID),             # (1, 512)    f32
        "b3": b3.reshape(1, 1),                  # (1, 1)      f32 (SMEM)
    }
    ref_params = {"w1": w1, "b1": b1, "w2": w2, "b2": b2, "w3": w3, "b3": b3}
    return kernel_params, ref_params


if __name__ == "__main__":
    key = jax.random.PRNGKey(0)
    kp, ka, kb, kc = jax.random.split(key, 4)

    B = 8  # small, sublane-friendly batch
    bb_embed = jax.random.normal(ka, (B, EMB), jnp.float32)
    img_emb = jax.random.normal(kb, (B, EMB), jnp.float32)
    text_emb = jax.random.normal(kc, (B, EMB), jnp.float32)

    params, ref_p = init_params(kp)

    out = custom_classifier(bb_embed, img_emb, text_emb, params)
    out = jax.block_until_ready(out)

    # Reference in plain f32 JAX (eval-mode dropout = identity). Tolerance is
    # loosened because the kernel uses bf16 weights/activations (f32 accum).
    x = jnp.concatenate([bb_embed, img_emb, text_emb], axis=1)
    h1 = jnp.maximum(x @ ref_p["w1"].T + ref_p["b1"], 0.0)
    h2 = jnp.maximum(h1 @ ref_p["w2"].T + ref_p["b2"], 0.0)
    ref = h2 @ ref_p["w3"].T + ref_p["b3"]

    assert out.shape == (B, 1)
    assert jnp.allclose(out, ref, atol=2e-2, rtol=2e-2), (
        f"max abs err {jnp.max(jnp.abs(out - ref))}")

    print("KERNEL_OK")
</pallas_src>

<mosaic_0001>
module attributes {stable_mosaic.version = 11 : i64} {
  func.func @mlp_kernel(%arg0: i32, %arg1: memref<8x512xf32, #tpu.memory_space<vmem>>, %arg2: memref<8x512xf32, #tpu.memory_space<vmem>>, %arg3: memref<8x512xf32, #tpu.memory_space<vmem>>, %arg4: memref<1536x512xbf16, #tpu.memory_space<vmem>>, %arg5: memref<1x512xf32, #tpu.memory_space<vmem>>, %arg6: memref<512x512xbf16, #tpu.memory_space<vmem>>, %arg7: memref<1x512xf32, #tpu.memory_space<vmem>>, %arg8: memref<1x512xf32, #tpu.memory_space<vmem>>, %arg9: memref<1x1xf32, #tpu.memory_space<smem>>, %arg10: memref<8x1xf32, #tpu.memory_space<vmem>>) attributes {dimension_semantics = [#tpu.dimension_semantics<parallel>], iteration_bounds = array<i64: 1>, scalar_prefetch = 0 : i64, scratch_operands = 0 : i64, tpu.core_type = #tpu.core_type<tc>, window_params = [{transform_indices = @transform_0, window_bounds = array<i64: 8, 512>}, {transform_indices = @transform_1, window_bounds = array<i64: 8, 512>}, {transform_indices = @transform_2, window_bounds = array<i64: 8, 512>}, {pipeline_mode = #tpu.pipeline_mode<synchronous>, transform_indices = @transform_3, window_bounds = array<i64: 1536, 512>}, {pipeline_mode = #tpu.pipeline_mode<synchronous>, transform_indices = @transform_4, window_bounds = array<i64: 1, 512>}, {pipeline_mode = #tpu.pipeline_mode<synchronous>, transform_indices = @transform_5, window_bounds = array<i64: 512, 512>}, {pipeline_mode = #tpu.pipeline_mode<synchronous>, transform_indices = @transform_6, window_bounds = array<i64: 1, 512>}, {pipeline_mode = #tpu.pipeline_mode<synchronous>, transform_indices = @transform_7, window_bounds = array<i64: 1, 512>}, {transform_indices = @transform_8, window_bounds = array<i64: 1, 1>}, {transform_indices = @transform_9, window_bounds = array<i64: 8, 1>}]} {
    %c0 = arith.constant 0 : index
    %c0_0 = arith.constant 0 : index
    %0 = vector.load %arg1[%c0, %c0_0] : memref<8x512xf32, #tpu.memory_space<vmem>>, vector<8x512xf32>
    %1 = arith.truncf %0 : vector<8x512xf32> to vector<8x512xbf16>
    %c0_1 = arith.constant 0 : index
    %c0_2 = arith.constant 0 : index
    %2 = vector.load %arg4[%c0_1, %c0_2] : memref<1536x512xbf16, #tpu.memory_space<vmem>>, vector<512x512xbf16>
    %cst = arith.constant dense<0.000000e+00> : vector<8x512xf32>
    %3 = tpu.matmul %1, %2, %cst {dimension_numbers = #tpu.dot_dimension_numbers<[1], [0], [0], [1], [0, 0, 1, 1], [], []>} : vector<8x512xbf16>, vector<512x512xbf16>, vector<8x512xf32> -> vector<8x512xf32>
    %c0_3 = arith.constant 0 : index
    %c0_4 = arith.constant 0 : index
    %4 = vector.load %arg2[%c0_3, %c0_4] : memref<8x512xf32, #tpu.memory_space<vmem>>, vector<8x512xf32>
    %5 = arith.truncf %4 : vector<8x512xf32> to vector<8x512xbf16>
    %c512 = arith.constant 512 : index
    %c0_5 = arith.constant 0 : index
    %6 = vector.load %arg4[%c512, %c0_5] : memref<1536x512xbf16, #tpu.memory_space<vmem>>, vector<512x512xbf16>
    %cst_6 = arith.constant dense<0.000000e+00> : vector<8x512xf32>
    %7 = tpu.matmul %5, %6, %cst_6 {dimension_numbers = #tpu.dot_dimension_numbers<[1], [0], [0], [1], [0, 0, 1, 1], [], []>} : vector<8x512xbf16>, vector<512x512xbf16>, vector<8x512xf32> -> vector<8x512xf32>
    %8 = arith.addf %3, %7 : vector<8x512xf32>
    %c0_7 = arith.constant 0 : index
    %c0_8 = arith.constant 0 : index
    %9 = vector.load %arg3[%c0_7, %c0_8] : memref<8x512xf32, #tpu.memory_space<vmem>>, vector<8x512xf32>
    %10 = arith.truncf %9 : vector<8x512xf32> to vector<8x512xbf16>
    %c1024 = arith.constant 1024 : index
    %c0_9 = arith.constant 0 : index
    %11 = vector.load %arg4[%c1024, %c0_9] : memref<1536x512xbf16, #tpu.memory_space<vmem>>, vector<512x512xbf16>
    %cst_10 = arith.constant dense<0.000000e+00> : vector<8x512xf32>
    %12 = tpu.matmul %10, %11, %cst_10 {dimension_numbers = #tpu.dot_dimension_numbers<[1], [0], [0], [1], [0, 0, 1, 1], [], []>} : vector<8x512xbf16>, vector<512x512xbf16>, vector<8x512xf32> -> vector<8x512xf32>
    %13 = arith.addf %8, %12 : vector<8x512xf32>
    %c0_11 = arith.constant 0 : index
    %c0_12 = arith.constant 0 : index
    %14 = vector.load %arg5[%c0_11, %c0_12] : memref<1x512xf32, #tpu.memory_space<vmem>>, vector<1x512xf32>
    %15 = vector.broadcast %14 : vector<1x512xf32> to vector<8x512xf32>
    %16 = arith.addf %13, %15 : vector<8x512xf32>
    %cst_13 = arith.constant 0.000000e+00 : f32
    %17 = vector.broadcast %cst_13 : f32 to vector<8x512xf32>
    %18 = arith.maximumf %16, %17 : vector<8x512xf32>
    %19 = arith.truncf %18 : vector<8x512xf32> to vector<8x512xbf16>
    %c0_14 = arith.constant 0 : index
    %c0_15 = arith.constant 0 : index
    %20 = vector.load %arg6[%c0_14, %c0_15] : memref<512x512xbf16, #tpu.memory_space<vmem>>, vector<512x512xbf16>
    %cst_16 = arith.constant dense<0.000000e+00> : vector<8x512xf32>
    %21 = tpu.matmul %19, %20, %cst_16 {dimension_numbers = #tpu.dot_dimension_numbers<[1], [0], [0], [1], [0, 0, 1, 1], [], []>} : vector<8x512xbf16>, vector<512x512xbf16>, vector<8x512xf32> -> vector<8x512xf32>
    %c0_17 = arith.constant 0 : index
    %c0_18 = arith.constant 0 : index
    %22 = vector.load %arg7[%c0_17, %c0_18] : memref<1x512xf32, #tpu.memory_space<vmem>>, vector<1x512xf32>
    %23 = vector.broadcast %22 : vector<1x512xf32> to vector<8x512xf32>
    %24 = arith.addf %21, %23 : vector<8x512xf32>
    %cst_19 = arith.constant 0.000000e+00 : f32
    %25 = vector.broadcast %cst_19 : f32 to vector<8x512xf32>
    %26 = arith.maximumf %24, %25 : vector<8x512xf32>
    %c0_20 = arith.constant 0 : index
    %c0_21 = arith.constant 0 : index
    %27 = vector.load %arg8[%c0_20, %c0_21] : memref<1x512xf32, #tpu.memory_space<vmem>>, vector<1x512xf32>
    %28 = vector.broadcast %27 : vector<1x512xf32> to vector<8x512xf32>
    %29 = arith.mulf %26, %28 : vector<8x512xf32>
    %cst_22 = arith.constant dense<0.000000e+00> : vector<8xf32>
    %30 = vector.multi_reduction <add>, %29, %cst_22 [1] : vector<8x512xf32> to vector<8xf32>
    %31 = vector.shape_cast %30 : vector<8xf32> to vector<8x1xf32>
    %c0_23 = arith.constant 0 : index
    %c0_24 = arith.constant 0 : index
    %32 = memref.load %arg9[%c0_23, %c0_24] : memref<1x1xf32, #tpu.memory_space<smem>>
    %33 = vector.broadcast %32 : f32 to vector<8x1xf32>
    %34 = arith.addf %31, %33 : vector<8x1xf32>
    %c0_25 = arith.constant 0 : index
    %c0_26 = arith.constant 0 : index
    %35 = vector.load %arg10[%c0_25, %c0_26] : memref<8x1xf32, #tpu.memory_space<vmem>>, vector<8x1xf32>
    tpu.vector_store %arg10[%c0_25, %c0_26], %34 {strides = array<i32>} : memref<8x1xf32, #tpu.memory_space<vmem>>, vector<8x1xf32>,
    return
  }
  func.func @transform_0(%arg0: i32) -> (i32, i32) {
    %c0_i32 = arith.constant 0 : i32
    %c0_i32_0 = arith.constant 0 : i32
    return %arg0, %c0_i32 : i32, i32
  }
  func.func @transform_1(%arg0: i32) -> (i32, i32) {
    %c0_i32 = arith.constant 0 : i32
    %c0_i32_0 = arith.constant 0 : i32
    return %arg0, %c0_i32 : i32, i32
  }
  func.func @transform_2(%arg0: i32) -> (i32, i32) {
    %c0_i32 = arith.constant 0 : i32
    %c0_i32_0 = arith.constant 0 : i32
    return %arg0, %c0_i32 : i32, i32
  }
  func.func @transform_3(%arg0: i32) -> (i32, i32) {
    %c0_i32 = arith.constant 0 : i32
    %c0_i32_0 = arith.constant 0 : i32
    %c0_i32_1 = arith.constant 0 : i32
    return %c0_i32, %c0_i32_0 : i32, i32
  }
  func.func @transform_4(%arg0: i32) -> (i32, i32) {
    %c0_i32 = arith.constant 0 : i32
    %c0_i32_0 = arith.constant 0 : i32
    %c0_i32_1 = arith.constant 0 : i32
    return %c0_i32, %c0_i32_0 : i32, i32
  }
  func.func @transform_5(%arg0: i32) -> (i32, i32) {
    %c0_i32 = arith.constant 0 : i32
    %c0_i32_0 = arith.constant 0 : i32
    %c0_i32_1 = arith.constant 0 : i32
    return %c0_i32, %c0_i32_0 : i32, i32
  }
  func.func @transform_6(%arg0: i32) -> (i32, i32) {
    %c0_i32 = arith.constant 0 : i32
    %c0_i32_0 = arith.constant 0 : i32
    %c0_i32_1 = arith.constant 0 : i32
    return %c0_i32, %c0_i32_0 : i32, i32
  }
  func.func @transform_7(%arg0: i32) -> (i32, i32) {
    %c0_i32 = arith.constant 0 : i32
    %c0_i32_0 = arith.constant 0 : i32
    %c0_i32_1 = arith.constant 0 : i32
    return %c0_i32, %c0_i32_0 : i32, i32
  }
  func.func @transform_8(%arg0: i32) -> (i32, i32) {
    %c0_i32 = arith.constant 0 : i32
    %c0_i32_0 = arith.constant 0 : i32
    %c0_i32_1 = arith.constant 0 : i32
    return %c0_i32, %c0_i32_0 : i32, i32
  }
  func.func @transform_9(%arg0: i32) -> (i32, i32) {
    %c0_i32 = arith.constant 0 : i32
    %c0_i32_0 = arith.constant 0 : i32
    return %arg0, %c0_i32 : i32, i32
  }
}

</mosaic_0001>

<llo_original>
// kernel: tpu_custom_call.1
$region0: #{tpu_custom_call.1}
  #allocation0 [shape = 'u32[]', space=smem, size = 0x4, offset = 0x4, fixed_abs, tag = 'smem constant byte address 0x4 - core index']
  #allocation1 [shape = 'u32[72,128]{1,0:T(1,128)}', space=vmem, size = 0x9000, scoped, tag = 'internal scratch']
  #allocation2 [shape = 'f32[1,1]{1,0:T(1,128)S(6)}', space=smem, size = 0x200, scoped, tag = 'scoped memory for tpu_custom_call.1']
  %s0 = inlined_call_operand.hbm [shape: f32[8,512], index: 0, kind: input, shape index: {}]
  %s1 = inlined_call_operand.hbm [shape: f32[8,512], index: 1, kind: input, shape index: {}]
  %s2 = inlined_call_operand.hbm [shape: f32[8,512], index: 2, kind: input, shape index: {}]
  %s3 = inlined_call_operand.hbm [shape: bf16[1536,512], index: 3, kind: input, shape index: {}]
  %s4 = inlined_call_operand.hbm [shape: f32[1,512], index: 4, kind: input, shape index: {}]
  %s5 = inlined_call_operand.hbm [shape: bf16[512,512], index: 5, kind: input, shape index: {}]
  %s6 = inlined_call_operand.hbm [shape: f32[1,512], index: 6, kind: input, shape index: {}]
  %s7 = inlined_call_operand.hbm [shape: f32[1,512], index: 7, kind: input, shape index: {}]
  %s8 = inlined_call_operand.<no memory space> [shape: f32[1,1], index: 8, kind: input, shape index: {}]
  %s9 = inlined_call_operand.vmem [shape: f32[8,1], index: 9, kind: output, shape index: {}]
  %s10 = sld [smem:[#allocation0]]
  $region78: #{tpu_custom_call.1} parent=0
    _
  %s12 = ssub.s32 1, %s10
  %s13 = scalar_select 0, %s12, %s10
  %14 = sst [smem:[#allocation2]] %s8
  $region1: #{tpu_custom_call.1} parent=0
    #allocation3 [shape = 'u8[16384]{0}', space=vmem, size = 0x4000, scoped, tag = 'input window, operand 0, single buffered']
    #allocation4 [shape = 's32[1]{0}', space=sflag, size = 0x4, scoped, tag = 'scoped memory for tpu_custom_call.1']
    #allocation5 [shape = 'u8[16384]{0}', space=vmem, size = 0x4000, scoped, tag = 'input window, operand 1, single buffered']
    #allocation6 [shape = 's32[1]{0}', space=sflag, size = 0x4, scoped, tag = 'scoped memory for tpu_custom_call.1']
    #allocation7 [shape = 'u8[16384]{0}', space=vmem, size = 0x4000, scoped, tag = 'input window, operand 2, single buffered']
    #allocation8 [shape = 'u8[1572864]{0}', space=vmem, size = 0x180000, scoped, tag = 'input window, operand 3, single buffered']
    #allocation9 [shape = 's32[1]{0}', space=sflag, size = 0x4, scoped, tag = 'scoped memory for tpu_custom_call.1']
    #allocation10 [shape = 'u8[2048]{0}', space=vmem, size = 0x800, scoped, tag = 'input window, operand 4, single buffered']
    #allocation11 [shape = 'u8[524288]{0}', space=vmem, size = 0x80000, scoped, tag = 'input window, operand 5, single buffered']
    #allocation12 [shape = 's32[1]{0}', space=sflag, size = 0x4, scoped, tag = 'scoped memory for tpu_custom_call.1']
    #allocation13 [shape = 'u8[2048]{0}', space=vmem, size = 0x800, scoped, tag = 'input window, operand 6, single buffered']
    #allocation14 [shape = 'u8[2048]{0}', space=vmem, size = 0x800, scoped, tag = 'input window, operand 7, single buffered']
    #allocation15 [shape = 's32[1]{0}', space=sflag, size = 0x4, scoped, tag = 'scoped memory for tpu_custom_call.1']
    %15 = vsyncpa [#allocation4], 0
    %16 = vsyncpa [#allocation6], 0
    %17 = vsyncpa [#allocation9], 0
    %18 = vsyncpa [#allocation12], 0
    %19 = vsyncpa [#allocation15], 0
    // Predicated region
    $region2: #{tpu_custom_call.1} parent=1 // pred_check
      _
    $region3: #{tpu_custom_call.1} parent=1 // pred_check_branch
      %21 = sbr.rel (0) target = $region5
    $region4: #{tpu_custom_call.1} parent=1 // pred_region
      %23 = vsyncadd [#allocation4], 0
      %s25 = sshll.u32 %s0, 4
      %s26 = int_to_ptr.hbm [resolvable:$true] %s25
      %s27 = sshll.u32 [#allocation3], 4
      %s28 = int_to_ptr.vmem [resolvable:$true] %s27
      %30 = dma.hbm_to_vmem [thread:$0]  %s26, 512, %s28, [#allocation4]
    $region5: #{tpu_custom_call.1} parent=1 // pred_fallthru
      _
    // Predicated region
    $region6: #{tpu_custom_call.1} parent=1 // pred_check
      _
    $region7: #{tpu_custom_call.1} parent=1 // pred_check_branch
      %32 = sbr.rel (0) target = $region9
    $region8: #{tpu_custom_call.1} parent=1 // pred_region
      %34 = vsyncadd [#allocation6], 0
      %s36 = sshll.u32 %s1, 4
      %s37 = int_to_ptr.hbm [resolvable:$true] %s36
      %s38 = sshll.u32 [#allocation5], 4
      %s39 = int_to_ptr.vmem [resolvable:$true] %s38
      %41 = dma.hbm_to_vmem [thread:$0]  %s37, 512, %s39, [#allocation6]
    $region9: #{tpu_custom_call.1} parent=1 // pred_fallthru
      _
    // Predicated region
    $region10: #{tpu_custom_call.1} parent=1 // pred_check
      _
    $region11: #{tpu_custom_call.1} parent=1 // pred_check_branch
      %43 = sbr.rel (0) target = $region13
    $region12: #{tpu_custom_call.1} parent=1 // pred_region
      %45 = vsyncadd [#allocation6], 0
      %s47 = sshll.u32 %s2, 4
      %s48 = int_to_ptr.hbm [resolvable:$true] %s47
      %s49 = sshll.u32 [#allocation7], 4
      %s50 = int_to_ptr.vmem [resolvable:$true] %s49
      %52 = dma.hbm_to_vmem [thread:$0]  %s48, 512, %s50, [#allocation6]
    $region13: #{tpu_custom_call.1} parent=1 // pred_fallthru
      _
    // Predicated region
    $region14: #{tpu_custom_call.1} parent=1 // pred_check
      _
    $region15: #{tpu_custom_call.1} parent=1 // pred_check_branch
      %54 = sbr.rel (0) target = $region17
    $region16: #{tpu_custom_call.1} parent=1 // pred_region
      %56 = vsyncadd [#allocation9], 0
      %s57 = sshll.u32 %s3, 4
      %s58 = int_to_ptr.hbm [resolvable:$true] %s57
      %s59 = sshll.u32 [#allocation8], 4
      %s60 = int_to_ptr.vmem [resolvable:$true] %s59
      %65 = dma.hbm_to_vmem [thread:$0]  %s58, 49152, %s60, [#allocation9], 256, 256, 16
    $region17: #{tpu_custom_call.1} parent=1 // pred_fallthru
      _
    // Predicated region
    $region18: #{tpu_custom_call.1} parent=1 // pred_check
      _
    $region19: #{tpu_custom_call.1} parent=1 // pred_check_branch
      %67 = sbr.rel (0) target = $region21
    $region20: #{tpu_custom_call.1} parent=1 // pred_region
      %69 = vsyncadd [#allocation9], 0
      %s71 = sshll.u32 %s4, 4
      %s72 = int_to_ptr.hbm [resolvable:$true] %s71
      %s73 = sshll.u32 [#allocation10], 4
      %s74 = int_to_ptr.vmem [resolvable:$true] %s73
      %76 = dma.hbm_to_vmem [thread:$0]  %s72, 64, %s74, [#allocation9]
    $region21: #{tpu_custom_call.1} parent=1 // pred_fallthru
      _
    // Predicated region
    $region22: #{tpu_custom_call.1} parent=1 // pred_check
      _
    $region23: #{tpu_custom_call.1} parent=1 // pred_check_branch
      %78 = sbr.rel (0) target = $region25
    $region24: #{tpu_custom_call.1} parent=1 // pred_region
      %80 = vsyncadd [#allocation12], 0
      %s81 = sshll.u32 %s5, 4
      %s82 = int_to_ptr.hbm [resolvable:$true] %s81
      %s83 = sshll.u32 [#allocation11], 4
      %s84 = int_to_ptr.vmem [resolvable:$true] %s83
      %89 = dma.hbm_to_vmem [thread:$0]  %s82, 16384, %s84, [#allocation12], 256, 256, 16
    $region25: #{tpu_custom_call.1} parent=1 // pred_fallthru
      _
    // Predicated region
    $region26: #{tpu_custom_call.1} parent=1 // pred_check
      _
    $region27: #{tpu_custom_call.1} parent=1 // pred_check_branch
      %91 = sbr.rel (0) target = $region29
    $region28: #{tpu_custom_call.1} parent=1 // pred_region
      %93 = vsyncadd [#allocation12], 0
      %s95 = sshll.u32 %s6, 4
      %s96 = int_to_ptr.hbm [resolvable:$true] %s95
      %s97 = sshll.u32 [#allocation13], 4
      %s98 = int_to_ptr.vmem [resolvable:$true] %s97
      %100 = dma.hbm_to_vmem [thread:$0]  %s96, 64, %s98, [#allocation12]
    $region29: #{tpu_custom_call.1} parent=1 // pred_fallthru
      _
    // Predicated region
    $region30: #{tpu_custom_call.1} parent=1 // pred_check
      _
    $region31: #{tpu_custom_call.1} parent=1 // pred_check_branch
      %102 = sbr.rel (0) target = $region33
    $region32: #{tpu_custom_call.1} parent=1 // pred_region
      %104 = vsyncadd [#allocation15], 0
      %s106 = sshll.u32 %s7, 4
      %s107 = int_to_ptr.hbm [resolvable:$true] %s106
      %s108 = sshll.u32 [#allocation14], 4
      %s109 = int_to_ptr.vmem [resolvable:$true] %s108
      %111 = dma.hbm_to_vmem [thread:$0]  %s107, 64, %s109, [#allocation15]
    $region33: #{tpu_custom_call.1} parent=1 // pred_fallthru
      _
    // Predicated region
    $region34: #{tpu_custom_call.1} parent=1 // pred_check
      _
    $region35: #{tpu_custom_call.1} parent=1 // pred_check_branch
      %113 = sbr.rel (0) target = $region37
    $region36: #{tpu_custom_call.1} parent=1 // pred_region
      _
    $region37: #{tpu_custom_call.1} parent=1 // pred_fallthru
      _
    // Predicated region
    $region38: #{tpu_custom_call.1} parent=1 // pred_check
      _
    $region39: #{tpu_custom_call.1} parent=1 // pred_check_branch
      %115 = sbr.rel (0) target = $region41
    $region40: #{tpu_custom_call.1} parent=1 // pred_region
      %117 = dma.done [#allocation4], 512
    $region41: #{tpu_custom_call.1} parent=1 // pred_fallthru
      _
    // Predicated region
    $region42: #{tpu_custom_call.1} parent=1 // pred_check
      _
    $region43: #{tpu_custom_call.1} parent=1 // pred_check_branch
      %119 = sbr.rel (0) target = $region45
    $region44: #{tpu_custom_call.1} parent=1 // pred_region
      %121 = dma.done [#allocation6], 512
    $region45: #{tpu_custom_call.1} parent=1 // pred_fallthru
      _
    // Predicated region
    $region46: #{tpu_custom_call.1} parent=1 // pred_check
      _
    $region47: #{tpu_custom_call.1} parent=1 // pred_check_branch
      %123 = sbr.rel (0) target = $region49
    $region48: #{tpu_custom_call.1} parent=1 // pred_region
      %125 = dma.done [#allocation6], 512
    $region49: #{tpu_custom_call.1} parent=1 // pred_fallthru
      _
    // Predicated region
    $region50: #{tpu_custom_call.1} parent=1 // pred_check
      _
    $region51: #{tpu_custom_call.1} parent=1 // pred_check_branch
      %127 = sbr.rel (0) target = $region53
    $region52: #{tpu_custom_call.1} parent=1 // pred_region
      %129 = dma.done [#allocation9], 49152
    $region53: #{tpu_custom_call.1} parent=1 // pred_fallthru
      _
    // Predicated region
    $region54: #{tpu_custom_call.1} parent=1 // pred_check
      _
    $region55: #{tpu_custom_call.1} parent=1 // pred_check_branch
      %131 = sbr.rel (0) target = $region57
    $region56: #{tpu_custom_call.1} parent=1 // pred_region
      %133 = dma.done [#allocation9], 64
    $region57: #{tpu_custom_call.1} parent=1 // pred_fallthru
      _
    // Predicated region
    $region58: #{tpu_custom_call.1} parent=1 // pred_check
      _
    $region59: #{tpu_custom_call.1} parent=1 // pred_check_branch
      %135 = sbr.rel (0) target = $region61
    $region60: #{tpu_custom_call.1} parent=1 // pred_region
      %137 = dma.done [#allocation12], 16384
    $region61: #{tpu_custom_call.1} parent=1 // pred_fallthru
      _
    // Predicated region
    $region62: #{tpu_custom_call.1} parent=1 // pred_check
      _
    $region63: #{tpu_custom_call.1} parent=1 // pred_check_branch
      %139 = sbr.rel (0) target = $region65
    $region64: #{tpu_custom_call.1} parent=1 // pred_region
      %141 = dma.done [#allocation12], 64
    $region65: #{tpu_custom_call.1} parent=1 // pred_fallthru
      _
    // Predicated region
    $region66: #{tpu_custom_call.1} parent=1 // pred_check
      _
    $region67: #{tpu_custom_call.1} parent=1 // pred_check_branch
      %143 = sbr.rel (0) target = $region69
    $region68: #{tpu_custom_call.1} parent=1 // pred_region
      %145 = dma.done [#allocation15], 64
    $region69: #{tpu_custom_call.1} parent=1 // pred_fallthru
      _
    %v146 = vld [vmem:[#allocation3] sm:$0xff]
    %v147 = vld [vmem:[#allocation3 + $0x8] sm:$0xff]
    %v148 = vld [vmem:[#allocation3 + $0x10] sm:$0xff]
    %v149 = vld [vmem:[#allocation3 + $0x18] sm:$0xff]
    %v150 = vpack.c.bf16 %v146, %v146
    %v151 = vpack.c.bf16 %v147, %v147
    %v152 = vpack.c.bf16 %v148, %v148
    %v153 = vpack.c.bf16 %v149, %v149
    %v154 = vld [vmem:[#allocation8] sm:$0xff]
    %v155 = vld [vmem:[#allocation8 + $0x8] sm:$0xff]
    %v156 = vld [vmem:[#allocation8 + $0x10] sm:$0xff]
    %v157 = vld [vmem:[#allocation8 + $0x18] sm:$0xff]
    %v158 = vld [vmem:[#allocation8 + $0x20] sm:$0xff]
    %v159 = vld [vmem:[#allocation8 + $0x28] sm:$0xff]
    %v160 = vld [vmem:[#allocation8 + $0x30] sm:$0xff]
    %v161 = vld [vmem:[#allocation8 + $0x38] sm:$0xff]
    %v162 = vld [vmem:[#allocation8 + $0x40] sm:$0xff]
    %v163 = vld [vmem:[#allocation8 + $0x48] sm:$0xff]
    %v164 = vld [vmem:[#allocation8 + $0x50] sm:$0xff]
    %v165 = vld [vmem:[#allocation8 + $0x58] sm:$0xff]
    %v166 = vld [vmem:[#allocation8 + $0x60] sm:$0xff]
    %v167 = vld [vmem:[#allocation8 + $0x68] sm:$0xff]
    %v168 = vld [vmem:[#allocation8 + $0x70] sm:$0xff]
    %v169 = vld [vmem:[#allocation8 + $0x78] sm:$0xff]
    %v170 = vld [vmem:[#allocation8 + $0x80] sm:$0xff]
    %v171 = vld [vmem:[#allocation8 + $0x88] sm:$0xff]
    %v172 = vld [vmem:[#allocation8 + $0x90] sm:$0xff]
    %v173 = vld [vmem:[#allocation8 + $0x98] sm:$0xff]
    %v174 = vld [vmem:[#allocation8 + $0xa0] sm:$0xff]
    %v175 = vld [vmem:[#allocation8 + $0xa8] sm:$0xff]
    %v176 = vld [vmem:[#allocation8 + $0xb0] sm:$0xff]
    %v177 = vld [vmem:[#allocation8 + $0xb8] sm:$0xff]
    %v178 = vld [vmem:[#allocation8 + $0xc0] sm:$0xff]
    %v179 = vld [vmem:[#allocation8 + $0xc8] sm:$0xff]
    %v180 = vld [vmem:[#allocation8 + $0xd0] sm:$0xff]
    %v181 = vld [vmem:[#allocation8 + $0xd8] sm:$0xff]
    %v182 = vld [vmem:[#allocation8 + $0xe0] sm:$0xff]
    %v183 = vld [vmem:[#allocation8 + $0xe8] sm:$0xff]
    %v184 = vld [vmem:[#allocation8 + $0xf0] sm:$0xff]
    %v185 = vld [vmem:[#allocation8 + $0xf8] sm:$0xff]
    %v186 = vld [vmem:[#allocation8 + $0x100] sm:$0xff]
    %v187 = vld [vmem:[#allocation8 + $0x108] sm:$0xff]
    %v188 = vld [vmem:[#allocation8 + $0x110] sm:$0xff]
    %v189 = vld [vmem:[#allocation8 + $0x118] sm:$0xff]
    %v190 = vld [vmem:[#allocation8 + $0x120] sm:$0xff]
    %v191 = vld [vmem:[#allocation8 + $0x128] sm:$0xff]
    %v192 = vld [vmem:[#allocation8 + $0x130] sm:$0xff]
    %v193 = vld [vmem:[#allocation8 + $0x138] sm:$0xff]
    %v194 = vld [vmem:[#allocation8 + $0x140] sm:$0xff]
    %v195 = vld [vmem:[#allocation8 + $0x148] sm:$0xff]
    %v196 = vld [vmem:[#allocation8 + $0x150] sm:$0xff]
    %v197 = vld [vmem:[#allocation8 + $0x158] sm:$0xff]
    %v198 = vld [vmem:[#allocation8 + $0x160] sm:$0xff]
    %v199 = vld [vmem:[#allocation8 + $0x168] sm:$0xff]
    %v200 = vld [vmem:[#allocation8 + $0x170] sm:$0xff]
    %v201 = vld [vmem:[#allocation8 + $0x178] sm:$0xff]
    %v202 = vld [vmem:[#allocation8 + $0x180] sm:$0xff]
    %v203 = vld [vmem:[#allocation8 + $0x188] sm:$0xff]
    %v204 = vld [vmem:[#allocation8 + $0x190] sm:$0xff]
    %v205 = vld [vmem:[#allocation8 + $0x198] sm:$0xff]
    %v206 = vld [vmem:[#allocation8 + $0x1a0] sm:$0xff]
    %v207 = vld [vmem:[#allocation8 + $0x1a8] sm:$0xff]
    %v208 = vld [vmem:[#allocation8 + $0x1b0] sm:$0xff]
    %v209 = vld [vmem:[#allocation8 + $0x1b8] sm:$0xff]
    %v210 = vld [vmem:[#allocation8 + $0x1c0] sm:$0xff]
    %v211 = vld [vmem:[#allocation8 + $0x1c8] sm:$0xff]
    %v212 = vld [vmem:[#allocation8 + $0x1d0] sm:$0xff]
    %v213 = vld [vmem:[#allocation8 + $0x1d8] sm:$0xff]
    %v214 = vld [vmem:[#allocation8 + $0x1e0] sm:$0xff]
    %v215 = vld [vmem:[#allocation8 + $0x1e8] sm:$0xff]
    %v216 = vld [vmem:[#allocation8 + $0x1f0] sm:$0xff]
    %v217 = vld [vmem:[#allocation8 + $0x1f8] sm:$0xff]
    %v218 = vld [vmem:[#allocation8 + $0x200] sm:$0xff]
    %v219 = vld [vmem:[#allocation8 + $0x208] sm:$0xff]
    %v220 = vld [vmem:[#allocation8 + $0x210] sm:$0xff]
    %v221 = vld [vmem:[#allocation8 + $0x218] sm:$0xff]
    %v222 = vld [vmem:[#allocation8 + $0x220] sm:$0xff]
    %v223 = vld [vmem:[#allocation8 + $0x228] sm:$0xff]
    %v224 = vld [vmem:[#allocation8 + $0x230] sm:$0xff]
    %v225 = vld [vmem:[#allocation8 + $0x238] sm:$0xff]
    %v226 = vld [vmem:[#allocation8 + $0x240] sm:$0xff]
    %v227 = vld [vmem:[#allocation8 + $0x248] sm:$0xff]
    %v228 = vld [vmem:[#allocation8 + $0x250] sm:$0xff]
    %v229 = vld [vmem:[#allocation8 + $0x258] sm:$0xff]
    %v230 = vld [vmem:[#allocation8 + $0x260] sm:$0xff]
    %v231 = vld [vmem:[#allocation8 + $0x268] sm:$0xff]
    %v232 = vld [vmem:[#allocation8 + $0x270] sm:$0xff]
    %v233 = vld [vmem:[#allocation8 + $0x278] sm:$0xff]
    %v234 = vld [vmem:[#allocation8 + $0x280] sm:$0xff]
    %v235 = vld [vmem:[#allocation8 + $0x288] sm:$0xff]
    %v236 = vld [vmem:[#allocation8 + $0x290] sm:$0xff]
    %v237 = vld [vmem:[#allocation8 + $0x298] sm:$0xff]
    %v238 = vld [vmem:[#allocation8 + $0x2a0] sm:$0xff]
    %v239 = vld [vmem:[#allocation8 + $0x2a8] sm:$0xff]
    %v240 = vld [vmem:[#allocation8 + $0x2b0] sm:$0xff]
    %v241 = vld [vmem:[#allocation8 + $0x2b8] sm:$0xff]
    %v242 = vld [vmem:[#allocation8 + $0x2c0] sm:$0xff]
    %v243 = vld [vmem:[#allocation8 + $0x2c8] sm:$0xff]
    %v244 = vld [vmem:[#allocation8 + $0x2d0] sm:$0xff]
    %v245 = vld [vmem:[#allocation8 + $0x2d8] sm:$0xff]
    %v246 = vld [vmem:[#allocation8 + $0x2e0] sm:$0xff]
    %v247 = vld [vmem:[#allocation8 + $0x2e8] sm:$0xff]
    %v248 = vld [vmem:[#allocation8 + $0x2f0] sm:$0xff]
    %v249 = vld [vmem:[#allocation8 + $0x2f8] sm:$0xff]
    %v250 = vld [vmem:[#allocation8 + $0x300] sm:$0xff]
    %v251 = vld [vmem:[#allocation8 + $0x308] sm:$0xff]
    %v252 = vld [vmem:[#allocation8 + $0x310] sm:$0xff]
    %v253 = vld [vmem:[#allocation8 + $0x318] sm:$0xff]
    %v254 = vld [vmem:[#allocation8 + $0x320] sm:$0xff]
    %v255 = vld [vmem:[#allocation8 + $0x328] sm:$0xff]
    %v256 = vld [vmem:[#allocation8 + $0x330] sm:$0xff]
    %v257 = vld [vmem:[#allocation8 + $0x338] sm:$0xff]
    %v258 = vld [vmem:[#allocation8 + $0x340] sm:$0xff]
    %v259 = vld [vmem:[#allocation8 + $0x348] sm:$0xff]
    %v260 = vld [vmem:[#allocation8 + $0x350] sm:$0xff]
    %v261 = vld [vmem:[#allocation8 + $0x358] sm:$0xff]
    %v262 = vld [vmem:[#allocation8 + $0x360] sm:$0xff]
    %v263 = vld [vmem:[#allocation8 + $0x368] sm:$0xff]
    %v264 = vld [vmem:[#allocation8 + $0x370] sm:$0xff]
    %v265 = vld [vmem:[#allocation8 + $0x378] sm:$0xff]
    %v266 = vld [vmem:[#allocation8 + $0x380] sm:$0xff]
    %v267 = vld [vmem:[#allocation8 + $0x388] sm:$0xff]
    %v268 = vld [vmem:[#allocation8 + $0x390] sm:$0xff]
    %v269 = vld [vmem:[#allocation8 + $0x398] sm:$0xff]
    %v270 = vld [vmem:[#allocation8 + $0x3a0] sm:$0xff]
    %v271 = vld [vmem:[#allocation8 + $0x3a8] sm:$0xff]
    %v272 = vld [vmem:[#allocation8 + $0x3b0] sm:$0xff]
    %v273 = vld [vmem:[#allocation8 + $0x3b8] sm:$0xff]
    %v274 = vld [vmem:[#allocation8 + $0x3c0] sm:$0xff]
    %v275 = vld [vmem:[#allocation8 + $0x3c8] sm:$0xff]
    %v276 = vld [vmem:[#allocation8 + $0x3d0] sm:$0xff]
    %v277 = vld [vmem:[#allocation8 + $0x3d8] sm:$0xff]
    %v278 = vld [vmem:[#allocation8 + $0x3e0] sm:$0xff]
    %v279 = vld [vmem:[#allocation8 + $0x3e8] sm:$0xff]
    %v280 = vld [vmem:[#allocation8 + $0x3f0] sm:$0xff]
    %v281 = vld [vmem:[#allocation8 + $0x3f8] sm:$0xff]
    %v282 = vld [vmem:[#allocation5] sm:$0xff]
    %v283 = vld [vmem:[#allocation5 + $0x8] sm:$0xff]
    %v284 = vld [vmem:[#allocation5 + $0x10] sm:$0xff]
    %v285 = vld [vmem:[#allocation5 + $0x18] sm:$0xff]
    %v286 = vpack.c.bf16 %v282, %v282
    %v287 = vpack.c.bf16 %v283, %v283
    %v288 = vpack.c.bf16 %v284, %v284
    %v289 = vpack.c.bf16 %v285, %v285
    %v290 = vld [vmem:[#allocation8 + $0x400] sm:$0xff]
    %v291 = vld [vmem:[#allocation8 + $0x408] sm:$0xff]
    %v292 = vld [vmem:[#allocation8 + $0x410] sm:$0xff]
    %v293 = vld [vmem:[#allocation8 + $0x418] sm:$0xff]
    %v294 = vld [vmem:[#allocation8 + $0x420] sm:$0xff]
    %v295 = vld [vmem:[#allocation8 + $0x428] sm:$0xff]
    %v296 = vld [vmem:[#allocation8 + $0x430] sm:$0xff]
    %v297 = vld [vmem:[#allocation8 + $0x438] sm:$0xff]
    %v298 = vld [vmem:[#allocation8 + $0x440] sm:$0xff]
    %v299 = vld [vmem:[#allocation8 + $0x448] sm:$0xff]
    %v300 = vld [vmem:[#allocation8 + $0x450] sm:$0xff]
    %v301 = vld [vmem:[#allocation8 + $0x458] sm:$0xff]
    %v302 = vld [vmem:[#allocation8 + $0x460] sm:$0xff]
    %v303 = vld [vmem:[#allocation8 + $0x468] sm:$0xff]
    %v304 = vld [vmem:[#allocation8 + $0x470] sm:$0xff]
    %v305 = vld [vmem:[#allocation8 + $0x478] sm:$0xff]
    %v306 = vld [vmem:[#allocation8 + $0x480] sm:$0xff]
    %v307 = vld [vmem:[#allocation8 + $0x488] sm:$0xff]
    %v308 = vld [vmem:[#allocation8 + $0x490] sm:$0xff]
    %v309 = vld [vmem:[#allocation8 + $0x498] sm:$0xff]
    %v310 = vld [vmem:[#allocation8 + $0x4a0] sm:$0xff]
    %v311 = vld [vmem:[#allocation8 + $0x4a8] sm:$0xff]
    %v312 = vld [vmem:[#allocation8 + $0x4b0] sm:$0xff]
    %v313 = vld [vmem:[#allocation8 + $0x4b8] sm:$0xff]
    %v314 = vld [vmem:[#allocation8 + $0x4c0] sm:$0xff]
    %v315 = vld [vmem:[#allocation8 + $0x4c8] sm:$0xff]
    %v316 = vld [vmem:[#allocation8 + $0x4d0] sm:$0xff]
    %v317 = vld [vmem:[#allocation8 + $0x4d8] sm:$0xff]
    %v318 = vld [vmem:[#allocation8 + $0x4e0] sm:$0xff]
    %v319 = vld [vmem:[#allocation8 + $0x4e8] sm:$0xff]
    %v320 = vld [vmem:[#allocation8 + $0x4f0] sm:$0xff]
    %v321 = vld [vmem:[#allocation8 + $0x4f8] sm:$0xff]
    %v322 = vld [vmem:[#allocation8 + $0x500] sm:$0xff]
    %v323 = vld [vmem:[#allocation8 + $0x508] sm:$0xff]
    %v324 = vld [vmem:[#allocation8 + $0x510] sm:$0xff]
    %v325 = vld [vmem:[#allocation8 + $0x518] sm:$0xff]
    %v326 = vld [vmem:[#allocation8 + $0x520] sm:$0xff]
    %v327 = vld [vmem:[#allocation8 + $0x528] sm:$0xff]
    %v328 = vld [vmem:[#allocation8 + $0x530] sm:$0xff]
    %v329 = vld [vmem:[#allocation8 + $0x538] sm:$0xff]
    %v330 = vld [vmem:[#allocation8 + $0x540] sm:$0xff]
    %v331 = vld [vmem:[#allocation8 + $0x548] sm:$0xff]
    %v332 = vld [vmem:[#allocation8 + $0x550] sm:$0xff]
    %v333 = vld [vmem:[#allocation8 + $0x558] sm:$0xff]
    %v334 = vld [vmem:[#allocation8 + $0x560] sm:$0xff]
    %v335 = vld [vmem:[#allocation8 + $0x568] sm:$0xff]
    %v336 = vld [vmem:[#allocation8 + $0x570] sm:$0xff]
    %v337 = vld [vmem:[#allocation8 + $0x578] sm:$0xff]
    %v338 = vld [vmem:[#allocation8 + $0x580] sm:$0xff]
    %v339 = vld [vmem:[#allocation8 + $0x588] sm:$0xff]
    %v340 = vld [vmem:[#allocation8 + $0x590] sm:$0xff]
    %v341 = vld [vmem:[#allocation8 + $0x598] sm:$0xff]
    %v342 = vld [vmem:[#allocation8 + $0x5a0] sm:$0xff]
    %v343 = vld [vmem:[#allocation8 + $0x5a8] sm:$0xff]
    %v344 = vld [vmem:[#allocation8 + $0x5b0] sm:$0xff]
    %v345 = vld [vmem:[#allocation8 + $0x5b8] sm:$0xff]
    %v346 = vld [vmem:[#allocation8 + $0x5c0] sm:$0xff]
    %v347 = vld [vmem:[#allocation8 + $0x5c8] sm:$0xff]
    %v348 = vld [vmem:[#allocation8 + $0x5d0] sm:$0xff]
    %v349 = vld [vmem:[#allocation8 + $0x5d8] sm:$0xff]
    %v350 = vld [vmem:[#allocation8 + $0x5e0] sm:$0xff]
    %v351 = vld [vmem:[#allocation8 + $0x5e8] sm:$0xff]
    %v352 = vld [vmem:[#allocation8 + $0x5f0] sm:$0xff]
    %v353 = vld [vmem:[#allocation8 + $0x5f8] sm:$0xff]
    %v354 = vld [vmem:[#allocation8 + $0x600] sm:$0xff]
    %v355 = vld [vmem:[#allocation8 + $0x608] sm:$0xff]
    %v356 = vld [vmem:[#allocation8 + $0x610] sm:$0xff]
    %v357 = vld [vmem:[#allocation8 + $0x618] sm:$0xff]
    %v358 = vld [vmem:[#allocation8 + $0x620] sm:$0xff]
    %v359 = vld [vmem:[#allocation8 + $0x628] sm:$0xff]
    %v360 = vld [vmem:[#allocation8 + $0x630] sm:$0xff]
    %v361 = vld [vmem:[#allocation8 + $0x638] sm:$0xff]
    %v362 = vld [vmem:[#allocation8 + $0x640] sm:$0xff]
    %v363 = vld [vmem:[#allocation8 + $0x648] sm:$0xff]
    %v364 = vld [vmem:[#allocation8 + $0x650] sm:$0xff]
    %v365 = vld [vmem:[#allocation8 + $0x658] sm:$0xff]
    %v366 = vld [vmem:[#allocation8 + $0x660] sm:$0xff]
    %v367 = vld [vmem:[#allocation8 + $0x668] sm:$0xff]
    %v368 = vld [vmem:[#allocation8 + $0x670] sm:$0xff]
    %v369 = vld [vmem:[#allocation8 + $0x678] sm:$0xff]
    %v370 = vld [vmem:[#allocation8 + $0x680] sm:$0xff]
    %v371 = vld [vmem:[#allocation8 + $0x688] sm:$0xff]
    %v372 = vld [vmem:[#allocation8 + $0x690] sm:$0xff]
    %v373 = vld [vmem:[#allocation8 + $0x698] sm:$0xff]
    %v374 = vld [vmem:[#allocation8 + $0x6a0] sm:$0xff]
    %v375 = vld [vmem:[#allocation8 + $0x6a8] sm:$0xff]
    %v376 = vld [vmem:[#allocation8 + $0x6b0] sm:$0xff]
    %v377 = vld [vmem:[#allocation8 + $0x6b8] sm:$0xff]
    %v378 = vld [vmem:[#allocation8 + $0x6c0] sm:$0xff]
    %v379 = vld [vmem:[#allocation8 + $0x6c8] sm:$0xff]
    %v380 = vld [vmem:[#allocation8 + $0x6d0] sm:$0xff]
    %v381 = vld [vmem:[#allocation8 + $0x6d8] sm:$0xff]
    %v382 = vld [vmem:[#allocation8 + $0x6e0] sm:$0xff]
    %v383 = vld [vmem:[#allocation8 + $0x6e8] sm:$0xff]
    %v384 = vld [vmem:[#allocation8 + $0x6f0] sm:$0xff]
    %v385 = vld [vmem:[#allocation8 + $0x6f8] sm:$0xff]
    %v386 = vld [vmem:[#allocation8 + $0x700] sm:$0xff]
    %v387 = vld [vmem:[#allocation8 + $0x708] sm:$0xff]
    %v388 = vld [vmem:[#allocation8 + $0x710] sm:$0xff]
    %v389 = vld [vmem:[#allocation8 + $0x718] sm:$0xff]
    %v390 = vld [vmem:[#allocation8 + $0x720] sm:$0xff]
    %v391 = vld [vmem:[#allocation8 + $0x728] sm:$0xff]
    %v392 = vld [vmem:[#allocation8 + $0x730] sm:$0xff]
    %v393 = vld [vmem:[#allocation8 + $0x738] sm:$0xff]
    %v394 = vld [vmem:[#allocation8 + $0x740] sm:$0xff]
    %v395 = vld [vmem:[#allocation8 + $0x748] sm:$0xff]
    %v396 = vld [vmem:[#allocation8 + $0x750] sm:$0xff]
    %v397 = vld [vmem:[#allocation8 + $0x758] sm:$0xff]
    %v398 = vld [vmem:[#allocation8 + $0x760] sm:$0xff]
    %v399 = vld [vmem:[#allocation8 + $0x768] sm:$0xff]
    %v400 = vld [vmem:[#allocation8 + $0x770] sm:$0xff]
    %v401 = vld [vmem:[#allocation8 + $0x778] sm:$0xff]
    %v402 = vld [vmem:[#allocation8 + $0x780] sm:$0xff]
    %v403 = vld [vmem:[#allocation8 + $0x788] sm:$0xff]
    %v404 = vld [vmem:[#allocation8 + $0x790] sm:$0xff]
    %v405 = vld [vmem:[#allocation8 + $0x798] sm:$0xff]
    %v406 = vld [vmem:[#allocation8 + $0x7a0] sm:$0xff]
    %v407 = vld [vmem:[#allocation8 + $0x7a8] sm:$0xff]
    %v408 = vld [vmem:[#allocation8 + $0x7b0] sm:$0xff]
    %v409 = vld [vmem:[#allocation8 + $0x7b8] sm:$0xff]
    %v410 = vld [vmem:[#allocation8 + $0x7c0] sm:$0xff]
    %v411 = vld [vmem:[#allocation8 + $0x7c8] sm:$0xff]
    %v412 = vld [vmem:[#allocation8 + $0x7d0] sm:$0xff]
    %v413 = vld [vmem:[#allocation8 + $0x7d8] sm:$0xff]
    %v414 = vld [vmem:[#allocation8 + $0x7e0] sm:$0xff]
    %v415 = vld [vmem:[#allocation8 + $0x7e8] sm:$0xff]
    %v416 = vld [vmem:[#allocation8 + $0x7f0] sm:$0xff]
    %v417 = vld [vmem:[#allocation8 + $0x7f8] sm:$0xff]
    %v546 = vunpack.c.l.b16 %v290
    %v547 = vunpack.c.h.b16 %v290
    %v548 = vunpack.c.l.b16 %v291
    %v549 = vunpack.c.h.b16 %v291
    %v550 = vunpack.c.l.b16 %v292
    %v551 = vunpack.c.h.b16 %v292
    %v552 = vunpack.c.l.b16 %v293
    %v553 = vunpack.c.h.b16 %v293
    %v554 = vunpack.c.l.b16 %v294
    %v555 = vunpack.c.h.b16 %v294
    %v556 = vunpack.c.l.b16 %v295
    %v557 = vunpack.c.h.b16 %v295
    %v558 = vunpack.c.l.b16 %v296
    %v559 = vunpack.c.h.b16 %v296
    %v560 = vunpack.c.l.b16 %v297
    %v561 = vunpack.c.h.b16 %v297
    %v562 = vunpack.c.l.b16 %v298
    %v563 = vunpack.c.h.b16 %v298
    %v564 = vunpack.c.l.b16 %v299
    %v565 = vunpack.c.h.b16 %v299
    %v566 = vunpack.c.l.b16 %v300
    %v567 = vunpack.c.h.b16 %v300
    %v568 = vunpack.c.l.b16 %v301
    %v569 = vunpack.c.h.b16 %v301
    %v570 = vunpack.c.l.b16 %v302
    %v571 = vunpack.c.h.b16 %v302
    %v572 = vunpack.c.l.b16 %v303
    %v573 = vunpack.c.h.b16 %v303
    %v574 = vunpack.c.l.b16 %v304
    %v575 = vunpack.c.h.b16 %v304
    %v576 = vunpack.c.l.b16 %v305
    %v577 = vunpack.c.h.b16 %v305
    %v578 = vunpack.c.l.b16 %v306
    %v579 = vunpack.c.h.b16 %v306
    %v580 = vunpack.c.l.b16 %v307
    %v581 = vunpack.c.h.b16 %v307
    %v582 = vunpack.c.l.b16 %v308
    %v583 = vunpack.c.h.b16 %v308
    %v584 = vunpack.c.l.b16 %v309
    %v585 = vunpack.c.h.b16 %v309
    %v586 = vunpack.c.l.b16 %v310
    %v587 = vunpack.c.h.b16 %v310
    %v588 = vunpack.c.l.b16 %v311
    %v589 = vunpack.c.h.b16 %v311
    %v590 = vunpack.c.l.b16 %v312
    %v591 = vunpack.c.h.b16 %v312
    %v592 = vunpack.c.l.b16 %v313
    %v593 = vunpack.c.h.b16 %v313
    %v594 = vunpack.c.l.b16 %v314
    %v595 = vunpack.c.h.b16 %v314
    %v596 = vunpack.c.l.b16 %v315
    %v597 = vunpack.c.h.b16 %v315
    %v598 = vunpack.c.l.b16 %v316
    %v599 = vunpack.c.h.b16 %v316
    %v600 = vunpack.c.l.b16 %v317
    %v601 = vunpack.c.h.b16 %v317
    %v602 = vunpack.c.l.b16 %v318
    %v603 = vunpack.c.h.b16 %v318
    %v604 = vunpack.c.l.b16 %v319
    %v605 = vunpack.c.h.b16 %v319
    %v606 = vunpack.c.l.b16 %v320
    %v607 = vunpack.c.h.b16 %v320
    %v608 = vunpack.c.l.b16 %v321
    %v609 = vunpack.c.h.b16 %v321
    %v610 = vunpack.c.l.b16 %v322
    %v611 = vunpack.c.h.b16 %v322
    %v612 = vunpack.c.l.b16 %v323
    %v613 = vunpack.c.h.b16 %v323
    %v614 = vunpack.c.l.b16 %v324
    %v615 = vunpack.c.h.b16 %v324
    %v616 = vunpack.c.l.b16 %v325
    %v617 = vunpack.c.h.b16 %v325
    %v618 = vunpack.c.l.b16 %v326
    %v619 = vunpack.c.h.b16 %v326
    %v620 = vunpack.c.l.b16 %v327
    %v621 = vunpack.c.h.b16 %v327
    %v622 = vunpack.c.l.b16 %v328
    %v623 = vunpack.c.h.b16 %v328
    %v624 = vunpack.c.l.b16 %v329
    %v625 = vunpack.c.h.b16 %v329
    %v626 = vunpack.c.l.b16 %v330
    %v627 = vunpack.c.h.b16 %v330
    %v628 = vunpack.c.l.b16 %v331
    %v629 = vunpack.c.h.b16 %v331
    %v630 = vunpack.c.l.b16 %v332
    %v631 = vunpack.c.h.b16 %v332
    %v632 = vunpack.c.l.b16 %v333
    %v633 = vunpack.c.h.b16 %v333
    %v634 = vunpack.c.l.b16 %v334
    %v635 = vunpack.c.h.b16 %v334
    %v636 = vunpack.c.l.b16 %v335
    %v637 = vunpack.c.h.b16 %v335
    %v638 = vunpack.c.l.b16 %v336
    %v639 = vunpack.c.h.b16 %v336
    %v640 = vunpack.c.l.b16 %v337
    %v641 = vunpack.c.h.b16 %v337
    %v642 = vunpack.c.l.b16 %v338
    %v643 = vunpack.c.h.b16 %v338
    %v644 = vunpack.c.l.b16 %v339
    %v645 = vunpack.c.h.b16 %v339
    %v646 = vunpack.c.l.b16 %v340
    %v647 = vunpack.c.h.b16 %v340
    %v648 = vunpack.c.l.b16 %v341
    %v649 = vunpack.c.h.b16 %v341
    %v650 = vunpack.c.l.b16 %v342
    %v651 = vunpack.c.h.b16 %v342
    %v652 = vunpack.c.l.b16 %v343
    %v653 = vunpack.c.h.b16 %v343
    %v654 = vunpack.c.l.b16 %v344
    %v655 = vunpack.c.h.b16 %v344
    %v656 = vunpack.c.l.b16 %v345
    %v657 = vunpack.c.h.b16 %v345
    %v658 = vunpack.c.l.b16 %v346
    %v659 = vunpack.c.h.b16 %v346
    %v660 = vunpack.c.l.b16 %v347
    %v661 = vunpack.c.h.b16 %v347
    %v662 = vunpack.c.l.b16 %v348
    %v663 = vunpack.c.h.b16 %v348
    %v664 = vunpack.c.l.b16 %v349
    %v665 = vunpack.c.h.b16 %v349
    %v666 = vunpack.c.l.b16 %v350
    %v667 = vunpack.c.h.b16 %v350
    %v668 = vunpack.c.l.b16 %v351
    %v669 = vunpack.c.h.b16 %v351
    %v670 = vunpack.c.l.b16 %v352
    %v671 = vunpack.c.h.b16 %v352
    %v672 = vunpack.c.l.b16 %v353
    %v673 = vunpack.c.h.b16 %v353
    %v674 = vunpack.c.l.b16 %v354
    %v675 = vunpack.c.h.b16 %v354
    %v676 = vunpack.c.l.b16 %v355
    %v677 = vunpack.c.h.b16 %v355
    %v678 = vunpack.c.l.b16 %v356
    %v679 = vunpack.c.h.b16 %v356
    %v680 = vunpack.c.l.b16 %v357
    %v681 = vunpack.c.h.b16 %v357
    %v682 = vunpack.c.l.b16 %v358
    %v683 = vunpack.c.h.b16 %v358
    %v684 = vunpack.c.l.b16 %v359
    %v685 = vunpack.c.h.b16 %v359
    %v686 = vunpack.c.l.b16 %v360
    %v687 = vunpack.c.h.b16 %v360
    %v688 = vunpack.c.l.b16 %v361
    %v689 = vunpack.c.h.b16 %v361
    %v690 = vunpack.c.l.b16 %v362
    %v691 = vunpack.c.h.b16 %v362
    %v692 = vunpack.c.l.b16 %v363
    %v693 = vunpack.c.h.b16 %v363
    %v694 = vunpack.c.l.b16 %v364
    %v695 = vunpack.c.h.b16 %v364
    %v696 = vunpack.c.l.b16 %v365
    %v697 = vunpack.c.h.b16 %v365
    %v698 = vunpack.c.l.b16 %v366
    %v699 = vunpack.c.h.b16 %v366
    %v700 = vunpack.c.l.b16 %v367
    %v701 = vunpack.c.h.b16 %v367
    %v702 = vunpack.c.l.b16 %v368
    %v703 = vunpack.c.h.b16 %v368
    %v704 = vunpack.c.l.b16 %v369
    %v705 = vunpack.c.h.b16 %v369
    %v706 = vunpack.c.l.b16 %v370
    %v707 = vunpack.c.h.b16 %v370
    %v708 = vunpack.c.l.b16 %v371
    %v709 = vunpack.c.h.b16 %v371
    %v710 = vunpack.c.l.b16 %v372
    %v711 = vunpack.c.h.b16 %v372
    %v712 = vunpack.c.l.b16 %v373
    %v713 = vunpack.c.h.b16 %v373
    %v714 = vunpack.c.l.b16 %v374
    %v715 = vunpack.c.h.b16 %v374
    %v716 = vunpack.c.l.b16 %v375
    %v717 = vunpack.c.h.b16 %v375
    %v718 = vunpack.c.l.b16 %v376
    %v719 = vunpack.c.h.b16 %v376
    %v720 = vunpack.c.l.b16 %v377
    %v721 = vunpack.c.h.b16 %v377
    %v722 = vunpack.c.l.b16 %v378
    %v723 = vunpack.c.h.b16 %v378
    %v724 = vunpack.c.l.b16 %v379
    %v725 = vunpack.c.h.b16 %v379
    %v726 = vunpack.c.l.b16 %v380
    %v727 = vunpack.c.h.b16 %v380
    %v728 = vunpack.c.l.b16 %v381
    %v729 = vunpack.c.h.b16 %v381
    %v730 = vunpack.c.l.b16 %v382
    %v731 = vunpack.c.h.b16 %v382
    %v732 = vunpack.c.l.b16 %v383
    %v733 = vunpack.c.h.b16 %v383
    %v734 = vunpack.c.l.b16 %v384
    %v735 = vunpack.c.h.b16 %v384
    %v736 = vunpack.c.l.b16 %v385
    %v737 = vunpack.c.h.b16 %v385
    %v738 = vunpack.c.l.b16 %v386
    %v739 = vunpack.c.h.b16 %v386
    %v740 = vunpack.c.l.b16 %v387
    %v741 = vunpack.c.h.b16 %v387
    %v742 = vunpack.c.l.b16 %v388
    %v743 = vunpack.c.h.b16 %v388
    %v744 = vunpack.c.l.b16 %v389
    %v745 = vunpack.c.h.b16 %v389
    %v746 = vunpack.c.l.b16 %v390
    %v747 = vunpack.c.h.b16 %v390
    %v748 = vunpack.c.l.b16 %v391
    %v749 = vunpack.c.h.b16 %v391
    %v750 = vunpack.c.l.b16 %v392
    %v751 = vunpack.c.h.b16 %v392
    %v752 = vunpack.c.l.b16 %v393
    %v753 = vunpack.c.h.b16 %v393
    %v754 = vunpack.c.l.b16 %v394
    %v755 = vunpack.c.h.b16 %v394
    %v756 = vunpack.c.l.b16 %v395
    %v757 = vunpack.c.h.b16 %v395
    %v758 = vunpack.c.l.b16 %v396
    %v759 = vunpack.c.h.b16 %v396
    %v760 = vunpack.c.l.b16 %v397
    %v761 = vunpack.c.h.b16 %v397
    %v762 = vunpack.c.l.b16 %v398
    %v763 = vunpack.c.h.b16 %v398
    %v764 = vunpack.c.l.b16 %v399
    %v765 = vunpack.c.h.b16 %v399
    %v766 = vunpack.c.l.b16 %v400
    %v767 = vunpack.c.h.b16 %v400
    %v768 = vunpack.c.l.b16 %v401
    %v769 = vunpack.c.h.b16 %v401
    %v770 = vunpack.c.l.b16 %v402
    %v771 = vunpack.c.h.b16 %v402
    %v772 = vunpack.c.l.b16 %v403
    %v773 = vunpack.c.h.b16 %v403
    %v774 = vunpack.c.l.b16 %v404
    %v775 = vunpack.c.h.b16 %v404
    %v776 = vunpack.c.l.b16 %v405
    %v777 = vunpack.c.h.b16 %v405
    %v778 = vunpack.c.l.b16 %v406
    %v779 = vunpack.c.h.b16 %v406
    %v780 = vunpack.c.l.b16 %v407
    %v781 = vunpack.c.h.b16 %v407
    %v782 = vunpack.c.l.b16 %v408
    %v783 = vunpack.c.h.b16 %v408
    %v784 = vunpack.c.l.b16 %v409
    %v785 = vunpack.c.h.b16 %v409
    %v786 = vunpack.c.l.b16 %v410
    %v787 = vunpack.c.h.b16 %v410
    %v788 = vunpack.c.l.b16 %v411
    %v789 = vunpack.c.h.b16 %v411
    %v790 = vunpack.c.l.b16 %v412
    %v791 = vunpack.c.h.b16 %v412
    %v792 = vunpack.c.l.b16 %v413
    %v793 = vunpack.c.h.b16 %v413
    %v794 = vunpack.c.l.b16 %v414
    %v795 = vunpack.c.h.b16 %v414
    %v796 = vunpack.c.l.b16 %v415
    %v797 = vunpack.c.h.b16 %v415
    %v798 = vunpack.c.l.b16 %v416
    %v799 = vunpack.c.h.b16 %v416
    %v800 = vunpack.c.l.b16 %v417
    %v801 = vunpack.c.h.b16 %v417
    %v802 = vpack.c.b16 %v550, %v546
    %v803 = vpack.c.b16 %v551, %v547
    %v804 = vpack.c.b16 %v552, %v548
    %v805 = vpack.c.b16 %v553, %v549
    %v806 = vpack.c.b16 %v558, %v554
    %v807 = vpack.c.b16 %v559, %v555
    %v808 = vpack.c.b16 %v560, %v556
    %v809 = vpack.c.b16 %v561, %v557
    %v810 = vpack.c.b16 %v566, %v562
    %v811 = vpack.c.b16 %v567, %v563
    %v812 = vpack.c.b16 %v568, %v564
    %v813 = vpack.c.b16 %v569, %v565
    %v814 = vpack.c.b16 %v574, %v570
    %v815 = vpack.c.b16 %v575, %v571
    %v816 = vpack.c.b16 %v576, %v572
    %v817 = vpack.c.b16 %v577, %v573
    %v818 = vpack.c.b16 %v582, %v578
    %v819 = vpack.c.b16 %v583, %v579
    %v820 = vpack.c.b16 %v584, %v580
    %v821 = vpack.c.b16 %v585, %v581
    %v822 = vpack.c.b16 %v590, %v586
    %v823 = vpack.c.b16 %v591, %v587
    %v824 = vpack.c.b16 %v592, %v588
    %v825 = vpack.c.b16 %v593, %v589
    %v826 = vpack.c.b16 %v598, %v594
    %v827 = vpack.c.b16 %v599, %v595
    %v828 = vpack.c.b16 %v600, %v596
    %v829 = vpack.c.b16 %v601, %v597
    %v830 = vpack.c.b16 %v606, %v602
    %v831 = vpack.c.b16 %v607, %v603
    %v832 = vpack.c.b16 %v608, %v604
    %v833 = vpack.c.b16 %v609, %v605
    %v834 = vpack.c.b16 %v614, %v610
    %v835 = vpack.c.b16 %v615, %v611
    %v836 = vpack.c.b16 %v616, %v612
    %v837 = vpack.c.b16 %v617, %v613
    %v838 = vpack.c.b16 %v622, %v618
    %v839 = vpack.c.b16 %v623, %v619
    %v840 = vpack.c.b16 %v624, %v620
    %v841 = vpack.c.b16 %v625, %v621
    %v842 = vpack.c.b16 %v630, %v626
    %v843 = vpack.c.b16 %v631, %v627
    %v844 = vpack.c.b16 %v632, %v628
    %v845 = vpack.c.b16 %v633, %v629
    %v846 = vpack.c.b16 %v638, %v634
    %v847 = vpack.c.b16 %v639, %v635
    %v848 = vpack.c.b16 %v640, %v636
    %v849 = vpack.c.b16 %v641, %v637
    %v850 = vpack.c.b16 %v646, %v642
    %v851 = vpack.c.b16 %v647, %v643
    %v852 = vpack.c.b16 %v648, %v644
    %v853 = vpack.c.b16 %v649, %v645
    %v854 = vpack.c.b16 %v654, %v650
    %v855 = vpack.c.b16 %v655, %v651
    %v856 = vpack.c.b16 %v656, %v652
    %v857 = vpack.c.b16 %v657, %v653
    %v858 = vpack.c.b16 %v662, %v658
    %v859 = vpack.c.b16 %v663, %v659
    %v860 = vpack.c.b16 %v664, %v660
    %v861 = vpack.c.b16 %v665, %v661
    %v862 = vpack.c.b16 %v670, %v666
    %v863 = vpack.c.b16 %v671, %v667
    %v864 = vpack.c.b16 %v672, %v668
    %v865 = vpack.c.b16 %v673, %v669
    %v866 = vpack.c.b16 %v678, %v674
    %v867 = vpack.c.b16 %v679, %v675
    %v868 = vpack.c.b16 %v680, %v676
    %v869 = vpack.c.b16 %v681, %v677
    %v870 = vpack.c.b16 %v686, %v682
    %v871 = vpack.c.b16 %v687, %v683
    %v872 = vpack.c.b16 %v688, %v684
    %v873 = vpack.c.b16 %v689, %v685
    %v874 = vpack.c.b16 %v694, %v690
    %v875 = vpack.c.b16 %v695, %v691
    %v876 = vpack.c.b16 %v696, %v692
    %v877 = vpack.c.b16 %v697, %v693
    %v878 = vpack.c.b16 %v702, %v698
    %v879 = vpack.c.b16 %v703, %v699
    %v880 = vpack.c.b16 %v704, %v700
    %v881 = vpack.c.b16 %v705, %v701
    %v882 = vpack.c.b16 %v710, %v706
    %v883 = vpack.c.b16 %v711, %v707
    %v884 = vpack.c.b16 %v712, %v708
    %v885 = vpack.c.b16 %v713, %v709
    %v886 = vpack.c.b16 %v718, %v714
    %v887 = vpack.c.b16 %v719, %v715
    %v888 = vpack.c.b16 %v720, %v716
    %v889 = vpack.c.b16 %v721, %v717
    %v890 = vpack.c.b16 %v726, %v722
    %v891 = vpack.c.b16 %v727, %v723
    %v892 = vpack.c.b16 %v728, %v724
    %v893 = vpack.c.b16 %v729, %v725
    %v894 = vpack.c.b16 %v734, %v730
    %v895 = vpack.c.b16 %v735, %v731
    %v896 = vpack.c.b16 %v736, %v732
    %v897 = vpack.c.b16 %v737, %v733
    %v898 = vpack.c.b16 %v742, %v738
    %v899 = vpack.c.b16 %v743, %v739
    %v900 = vpack.c.b16 %v744, %v740
    %v901 = vpack.c.b16 %v745, %v741
    %v902 = vpack.c.b16 %v750, %v746
    %v903 = vpack.c.b16 %v751, %v747
    %v904 = vpack.c.b16 %v752, %v748
    %v905 = vpack.c.b16 %v753, %v749
    %v906 = vpack.c.b16 %v758, %v754
    %v907 = vpack.c.b16 %v759, %v755
    %v908 = vpack.c.b16 %v760, %v756
    %v909 = vpack.c.b16 %v761, %v757
    %v910 = vpack.c.b16 %v766, %v762
    %v911 = vpack.c.b16 %v767, %v763
    %v912 = vpack.c.b16 %v768, %v764
    %v913 = vpack.c.b16 %v769, %v765
    %v914 = vpack.c.b16 %v774, %v770
    %v915 = vpack.c.b16 %v775, %v771
    %v916 = vpack.c.b16 %v776, %v772
    %v917 = vpack.c.b16 %v777, %v773
    %v918 = vpack.c.b16 %v782, %v778
    %v919 = vpack.c.b16 %v783, %v779
    %v920 = vpack.c.b16 %v784, %v780
    %v921 = vpack.c.b16 %v785, %v781
    %v922 = vpack.c.b16 %v790, %v786
    %v923 = vpack.c.b16 %v791, %v787
    %v924 = vpack.c.b16 %v792, %v788
    %v925 = vpack.c.b16 %v793, %v789
    %v926 = vpack.c.b16 %v798, %v794
    %v927 = vpack.c.b16 %v799, %v795
    %v928 = vpack.c.b16 %v800, %v796
    %v929 = vpack.c.b16 %v801, %v797
    %1058 = vmatpush.bf16.msra.mxu0 %v830
    %1059 = vmatpush.bf16.msra.mxu0 %v826
    %1060 = vmatpush.bf16.msra.mxu0 %v822
    %1061 = vmatpush.bf16.msra.mxu0 %v818
    %1062 = vmatpush.bf16.msra.mxu0 %v814
    %1063 = vmatpush.bf16.msra.mxu0 %v810
    %1064 = vmatpush.bf16.msra.mxu0 %v806
    %1065 = vmatpush.bf16.msra.mxu0 %v802
    %1066 = vmatmul.bf16.gmra.mxu0 %v286
    %v1067 = vpop.f32.mrf.mxu0
    %v1068 = vadd.f32 0.0, %v1067
    %v1069 = vpop.f32.mrf.mxu0
    %1070 = vdwg.mxu0
    %1071 = vmatpush.bf16.msra.mxu0 %v862
    %1072 = vmatpush.bf16.msra.mxu0 %v858
    %1073 = vmatpush.bf16.msra.mxu0 %v854
    %1074 = vmatpush.bf16.msra.mxu0 %v850
    %1075 = vmatpush.bf16.msra.mxu0 %v846
    %1076 = vmatpush.bf16.msra.mxu0 %v842
    %1077 = vmatpush.bf16.msra.mxu0 %v838
    %1078 = vmatpush.bf16.msra.mxu0 %v834
    %1079 = vmatmul.bf16.gmra.mxu0 %v287
    %v1080 = vpop.f32.mrf.mxu0
    %v1081 = vadd.f32 %v1068, %v1080
    %v1082 = vpop.f32.mrf.mxu0
    %1083 = vdwg.mxu0
    %1084 = vmatpush.bf16.msra.mxu0 %v894
    %1085 = vmatpush.bf16.msra.mxu0 %v890
    %1086 = vmatpush.bf16.msra.mxu0 %v886
    %1087 = vmatpush.bf16.msra.mxu0 %v882
    %1088 = vmatpush.bf16.msra.mxu0 %v878
    %1089 = vmatpush.bf16.msra.mxu0 %v874
    %1090 = vmatpush.bf16.msra.mxu0 %v870
    %1091 = vmatpush.bf16.msra.mxu0 %v866
    %1092 = vmatmul.bf16.gmra.mxu0 %v288
    %v1093 = vpop.f32.mrf.mxu0
    %v1094 = vadd.f32 %v1081, %v1093
    %v1095 = vpop.f32.mrf.mxu0
    %1096 = vdwg.mxu0
    %1097 = vmatpush.bf16.msra.mxu0 %v926
    %1098 = vmatpush.bf16.msra.mxu0 %v922
    %1099 = vmatpush.bf16.msra.mxu0 %v918
    %1100 = vmatpush.bf16.msra.mxu0 %v914
    %1101 = vmatpush.bf16.msra.mxu0 %v910
    %1102 = vmatpush.bf16.msra.mxu0 %v906
    %1103 = vmatpush.bf16.msra.mxu0 %v902
    %1104 = vmatpush.bf16.msra.mxu0 %v898
    %1105 = vmatmul.bf16.gmra.mxu0 %v289
    %v1106 = vpop.f32.mrf.mxu0
    %v1107 = vadd.f32 %v1094, %v1106
    %v1108 = vpop.f32.mrf.mxu0
    %1109 = vdwg.mxu0
    %1110 = vmatpush.bf16.msra.mxu0 %v831
    %1111 = vmatpush.bf16.msra.mxu0 %v827
    %1112 = vmatpush.bf16.msra.mxu0 %v823
    %1113 = vmatpush.bf16.msra.mxu0 %v819
    %1114 = vmatpush.bf16.msra.mxu0 %v815
    %1115 = vmatpush.bf16.msra.mxu0 %v811
    %1116 = vmatpush.bf16.msra.mxu0 %v807
    %1117 = vmatpush.bf16.msra.mxu0 %v803
    %1118 = vmatmul.bf16.gmra.mxu0 %v286
    %v1119 = vpop.f32.mrf.mxu0
    %v1120 = vadd.f32 0.0, %v1119
    %v1121 = vpop.f32.mrf.mxu0
    %1122 = vdwg.mxu0
    %1123 = vmatpush.bf16.msra.mxu0 %v863
    %1124 = vmatpush.bf16.msra.mxu0 %v859
    %1125 = vmatpush.bf16.msra.mxu0 %v855
    %1126 = vmatpush.bf16.msra.mxu0 %v851
    %1127 = vmatpush.bf16.msra.mxu0 %v847
    %1128 = vmatpush.bf16.msra.mxu0 %v843
    %1129 = vmatpush.bf16.msra.mxu0 %v839
    %1130 = vmatpush.bf16.msra.mxu0 %v835
    %1131 = vmatmul.bf16.gmra.mxu0 %v287
    %v1132 = vpop.f32.mrf.mxu0
    %v1133 = vadd.f32 %v1120, %v1132
    %v1134 = vpop.f32.mrf.mxu0
    %1135 = vdwg.mxu0
    %1136 = vmatpush.bf16.msra.mxu0 %v895
    %1137 = vmatpush.bf16.msra.mxu0 %v891
    %1138 = vmatpush.bf16.msra.mxu0 %v887
    %1139 = vmatpush.bf16.msra.mxu0 %v883
    %1140 = vmatpush.bf16.msra.mxu0 %v879
    %1141 = vmatpush.bf16.msra.mxu0 %v875
    %1142 = vmatpush.bf16.msra.mxu0 %v871
    %1143 = vmatpush.bf16.msra.mxu0 %v867
    %1144 = vmatmul.bf16.gmra.mxu0 %v288
    %v1145 = vpop.f32.mrf.mxu0
    %v1146 = vadd.f32 %v1133, %v1145
    %v1147 = vpop.f32.mrf.mxu0
    %1148 = vdwg.mxu0
    %1149 = vmatpush.bf16.msra.mxu0 %v927
    %1150 = vmatpush.bf16.msra.mxu0 %v923
    %1151 = vmatpush.bf16.msra.mxu0 %v919
    %1152 = vmatpush.bf16.msra.mxu0 %v915
    %1153 = vmatpush.bf16.msra.mxu0 %v911
    %1154 = vmatpush.bf16.msra.mxu0 %v907
    %1155 = vmatpush.bf16.msra.mxu0 %v903
    %1156 = vmatpush.bf16.msra.mxu0 %v899
    %1157 = vmatmul.bf16.gmra.mxu0 %v289
    %v1158 = vpop.f32.mrf.mxu0
    %v1159 = vadd.f32 %v1146, %v1158
    %v1160 = vpop.f32.mrf.mxu0
    %1161 = vdwg.mxu0
    %1162 = vmatpush.bf16.msra.mxu0 %v832
    %1163 = vmatpush.bf16.msra.mxu0 %v828
    %1164 = vmatpush.bf16.msra.mxu0 %v824
    %1165 = vmatpush.bf16.msra.mxu0 %v820
    %1166 = vmatpush.bf16.msra.mxu0 %v816
    %1167 = vmatpush.bf16.msra.mxu0 %v812
    %1168 = vmatpush.bf16.msra.mxu0 %v808
    %1169 = vmatpush.bf16.msra.mxu0 %v804
    %1170 = vmatmul.bf16.gmra.mxu0 %v286
    %v1171 = vpop.f32.mrf.mxu0
    %v1172 = vadd.f32 0.0, %v1171
    %v1173 = vpop.f32.mrf.mxu0
    %1174 = vdwg.mxu0
    %1175 = vmatpush.bf16.msra.mxu0 %v864
    %1176 = vmatpush.bf16.msra.mxu0 %v860
    %1177 = vmatpush.bf16.msra.mxu0 %v856
    %1178 = vmatpush.bf16.msra.mxu0 %v852
    %1179 = vmatpush.bf16.msra.mxu0 %v848
    %1180 = vmatpush.bf16.msra.mxu0 %v844
    %1181 = vmatpush.bf16.msra.mxu0 %v840
    %1182 = vmatpush.bf16.msra.mxu0 %v836
    %1183 = vmatmul.bf16.gmra.mxu0 %v287
    %v1184 = vpop.f32.mrf.mxu0
    %v1185 = vadd.f32 %v1172, %v1184
    %v1186 = vpop.f32.mrf.mxu0
    %1187 = vdwg.mxu0
    %1188 = vmatpush.bf16.msra.mxu0 %v896
    %1189 = vmatpush.bf16.msra.mxu0 %v892
    %1190 = vmatpush.bf16.msra.mxu0 %v888
    %1191 = vmatpush.bf16.msra.mxu0 %v884
    %1192 = vmatpush.bf16.msra.mxu0 %v880
    %1193 = vmatpush.bf16.msra.mxu0 %v876
    %1194 = vmatpush.bf16.msra.mxu0 %v872
    %1195 = vmatpush.bf16.msra.mxu0 %v868
    %1196 = vmatmul.bf16.gmra.mxu0 %v288
    %v1197 = vpop.f32.mrf.mxu0
    %v1198 = vadd.f32 %v1185, %v1197
    %v1199 = vpop.f32.mrf.mxu0
    %1200 = vdwg.mxu0
    %1201 = vmatpush.bf16.msra.mxu0 %v928
    %1202 = vmatpush.bf16.msra.mxu0 %v924
    %1203 = vmatpush.bf16.msra.mxu0 %v920
    %1204 = vmatpush.bf16.msra.mxu0 %v916
    %1205 = vmatpush.bf16.msra.mxu0 %v912
    %1206 = vmatpush.bf16.msra.mxu0 %v908
    %1207 = vmatpush.bf16.msra.mxu0 %v904
    %1208 = vmatpush.bf16.msra.mxu0 %v900
    %1209 = vmatmul.bf16.gmra.mxu0 %v289
    %v1210 = vpop.f32.mrf.mxu0
    %v1211 = vadd.f32 %v1198, %v1210
    %v1212 = vpop.f32.mrf.mxu0
    %1213 = vdwg.mxu0
    %1214 = vmatpush.bf16.msra.mxu0 %v833
    %1215 = vmatpush.bf16.msra.mxu0 %v829
    %1216 = vmatpush.bf16.msra.mxu0 %v825
    %1217 = vmatpush.bf16.msra.mxu0 %v821
    %1218 = vmatpush.bf16.msra.mxu0 %v817
    %1219 = vmatpush.bf16.msra.mxu0 %v813
    %1220 = vmatpush.bf16.msra.mxu0 %v809
    %1221 = vmatpush.bf16.msra.mxu0 %v805
    %1222 = vmatmul.bf16.gmra.mxu0 %v286
    %v1223 = vpop.f32.mrf.mxu0
    %v1224 = vadd.f32 0.0, %v1223
    %v1225 = vpop.f32.mrf.mxu0
    %1226 = vdwg.mxu0
    %1227 = vmatpush.bf16.msra.mxu0 %v865
    %1228 = vmatpush.bf16.msra.mxu0 %v861
    %1229 = vmatpush.bf16.msra.mxu0 %v857
    %1230 = vmatpush.bf16.msra.mxu0 %v853
    %1231 = vmatpush.bf16.msra.mxu0 %v849
    %1232 = vmatpush.bf16.msra.mxu0 %v845
    %1233 = vmatpush.bf16.msra.mxu0 %v841
    %1234 = vmatpush.bf16.msra.mxu0 %v837
    %1235 = vmatmul.bf16.gmra.mxu0 %v287
    %v1236 = vpop.f32.mrf.mxu0
    %v1237 = vadd.f32 %v1224, %v1236
    %v1238 = vpop.f32.mrf.mxu0
    %1239 = vdwg.mxu0
    %1240 = vmatpush.bf16.msra.mxu0 %v897
    %1241 = vmatpush.bf16.msra.mxu0 %v893
    %1242 = vmatpush.bf16.msra.mxu0 %v889
    %1243 = vmatpush.bf16.msra.mxu0 %v885
    %1244 = vmatpush.bf16.msra.mxu0 %v881
    %1245 = vmatpush.bf16.msra.mxu0 %v877
    %1246 = vmatpush.bf16.msra.mxu0 %v873
    %1247 = vmatpush.bf16.msra.mxu0 %v869
    %1248 = vmatmul.bf16.gmra.mxu0 %v288
    %v1249 = vpop.f32.mrf.mxu0
    %v1250 = vadd.f32 %v1237, %v1249
    %v1251 = vpop.f32.mrf.mxu0
    %1252 = vdwg.mxu0
    %1253 = vmatpush.bf16.msra.mxu0 %v929
    %1254 = vmatpush.bf16.msra.mxu0 %v925
    %1255 = vmatpush.bf16.msra.mxu0 %v921
    %1256 = vmatpush.bf16.msra.mxu0 %v917
    %1257 = vmatpush.bf16.msra.mxu0 %v913
    %1258 = vmatpush.bf16.msra.mxu0 %v909
    %1259 = vmatpush.bf16.msra.mxu0 %v905
    %1260 = vmatpush.bf16.msra.mxu0 %v901
    %1261 = vmatmul.bf16.gmra.mxu0 %v289
    %v1262 = vpop.f32.mrf.mxu0
    %v1263 = vadd.f32 %v1250, %v1262
    %v1264 = vpop.f32.mrf.mxu0
    %1265 = vdwg.mxu0
    %v1394 = vunpack.c.l.b16 %v154
    %v1395 = vunpack.c.h.b16 %v154
    %v1396 = vunpack.c.l.b16 %v155
    %v1397 = vunpack.c.h.b16 %v155
    %v1398 = vunpack.c.l.b16 %v156
    %v1399 = vunpack.c.h.b16 %v156
    %v1400 = vunpack.c.l.b16 %v157
    %v1401 = vunpack.c.h.b16 %v157
    %v1402 = vunpack.c.l.b16 %v158
    %v1403 = vunpack.c.h.b16 %v158
    %v1404 = vunpack.c.l.b16 %v159
    %v1405 = vunpack.c.h.b16 %v159
    %v1406 = vunpack.c.l.b16 %v160
    %v1407 = vunpack.c.h.b16 %v160
    %v1408 = vunpack.c.l.b16 %v161
    %v1409 = vunpack.c.h.b16 %v161
    %v1410 = vunpack.c.l.b16 %v162
    %v1411 = vunpack.c.h.b16 %v162
    %v1412 = vunpack.c.l.b16 %v163
    %v1413 = vunpack.c.h.b16 %v163
    %v1414 = vunpack.c.l.b16 %v164
    %v1415 = vunpack.c.h.b16 %v164
    %v1416 = vunpack.c.l.b16 %v165
    %v1417 = vunpack.c.h.b16 %v165
    %v1418 = vunpack.c.l.b16 %v166
    %v1419 = vunpack.c.h.b16 %v166
    %v1420 = vunpack.c.l.b16 %v167
    %v1421 = vunpack.c.h.b16 %v167
    %v1422 = vunpack.c.l.b16 %v168
    %v1423 = vunpack.c.h.b16 %v168
    %v1424 = vunpack.c.l.b16 %v169
    %v1425 = vunpack.c.h.b16 %v169
    %v1426 = vunpack.c.l.b16 %v170
    %v1427 = vunpack.c.h.b16 %v170
    %v1428 = vunpack.c.l.b16 %v171
    %v1429 = vunpack.c.h.b16 %v171
    %v1430 = vunpack.c.l.b16 %v172
    %v1431 = vunpack.c.h.b16 %v172
    %v1432 = vunpack.c.l.b16 %v173
    %v1433 = vunpack.c.h.b16 %v173
    %v1434 = vunpack.c.l.b16 %v174
    %v1435 = vunpack.c.h.b16 %v174
    %v1436 = vunpack.c.l.b16 %v175
    %v1437 = vunpack.c.h.b16 %v175
    %v1438 = vunpack.c.l.b16 %v176
    %v1439 = vunpack.c.h.b16 %v176
    %v1440 = vunpack.c.l.b16 %v177
    %v1441 = vunpack.c.h.b16 %v177
    %v1442 = vunpack.c.l.b16 %v178
    %v1443 = vunpack.c.h.b16 %v178
    %v1444 = vunpack.c.l.b16 %v179
    %v1445 = vunpack.c.h.b16 %v179
    %v1446 = vunpack.c.l.b16 %v180
    %v1447 = vunpack.c.h.b16 %v180
    %v1448 = vunpack.c.l.b16 %v181
    %v1449 = vunpack.c.h.b16 %v181
    %v1450 = vunpack.c.l.b16 %v182
    %v1451 = vunpack.c.h.b16 %v182
    %v1452 = vunpack.c.l.b16 %v183
    %v1453 = vunpack.c.h.b16 %v183
    %v1454 = vunpack.c.l.b16 %v184
    %v1455 = vunpack.c.h.b16 %v184
    %v1456 = vunpack.c.l.b16 %v185
    %v1457 = vunpack.c.h.b16 %v185
    %v1458 = vunpack.c.l.b16 %v186
    %v1459 = vunpack.c.h.b16 %v186
    %v1460 = vunpack.c.l.b16 %v187
    %v1461 = vunpack.c.h.b16 %v187
    %v1462 = vunpack.c.l.b16 %v188
    %v1463 = vunpack.c.h.b16 %v188
    %v1464 = vunpack.c.l.b16 %v189
    %v1465 = vunpack.c.h.b16 %v189
    %v1466 = vunpack.c.l.b16 %v190
    %v1467 = vunpack.c.h.b16 %v190
    %v1468 = vunpack.c.l.b16 %v191
    %v1469 = vunpack.c.h.b16 %v191
    %v1470 = vunpack.c.l.b16 %v192
    %v1471 = vunpack.c.h.b16 %v192
    %v1472 = vunpack.c.l.b16 %v193
    %v1473 = vunpack.c.h.b16 %v193
    %v1474 = vunpack.c.l.b16 %v194
    %v1475 = vunpack.c.h.b16 %v194
    %v1476 = vunpack.c.l.b16 %v195
    %v1477 = vunpack.c.h.b16 %v195
    %v1478 = vunpack.c.l.b16 %v196
    %v1479 = vunpack.c.h.b16 %v196
    %v1480 = vunpack.c.l.b16 %v197
    %v1481 = vunpack.c.h.b16 %v197
    %v1482 = vunpack.c.l.b16 %v198
    %v1483 = vunpack.c.h.b16 %v198
    %v1484 = vunpack.c.l.b16 %v199
    %v1485 = vunpack.c.h.b16 %v199
    %v1486 = vunpack.c.l.b16 %v200
    %v1487 = vunpack.c.h.b16 %v200
    %v1488 = vunpack.c.l.b16 %v201
    %v1489 = vunpack.c.h.b16 %v201
    %v1490 = vunpack.c.l.b16 %v202
    %v1491 = vunpack.c.h.b16 %v202
    %v1492 = vunpack.c.l.b16 %v203
    %v1493 = vunpack.c.h.b16 %v203
    %v1494 = vunpack.c.l.b16 %v204
    %v1495 = vunpack.c.h.b16 %v204
    %v1496 = vunpack.c.l.b16 %v205
    %v1497 = vunpack.c.h.b16 %v205
    %v1498 = vunpack.c.l.b16 %v206
    %v1499 = vunpack.c.h.b16 %v206
    %v1500 = vunpack.c.l.b16 %v207
    %v1501 = vunpack.c.h.b16 %v207
    %v1502 = vunpack.c.l.b16 %v208
    %v1503 = vunpack.c.h.b16 %v208
    %v1504 = vunpack.c.l.b16 %v209
    %v1505 = vunpack.c.h.b16 %v209
    %v1506 = vunpack.c.l.b16 %v210
    %v1507 = vunpack.c.h.b16 %v210
    %v1508 = vunpack.c.l.b16 %v211
    %v1509 = vunpack.c.h.b16 %v211
    %v1510 = vunpack.c.l.b16 %v212
    %v1511 = vunpack.c.h.b16 %v212
    %v1512 = vunpack.c.l.b16 %v213
    %v1513 = vunpack.c.h.b16 %v213
    %v1514 = vunpack.c.l.b16 %v214
    %v1515 = vunpack.c.h.b16 %v214
    %v1516 = vunpack.c.l.b16 %v215
    %v1517 = vunpack.c.h.b16 %v215
    %v1518 = vunpack.c.l.b16 %v216
    %v1519 = vunpack.c.h.b16 %v216
    %v1520 = vunpack.c.l.b16 %v217
    %v1521 = vunpack.c.h.b16 %v217
    %v1522 = vunpack.c.l.b16 %v218
    %v1523 = vunpack.c.h.b16 %v218
    %v1524 = vunpack.c.l.b16 %v219
    %v1525 = vunpack.c.h.b16 %v219
    %v1526 = vunpack.c.l.b16 %v220
    %v1527 = vunpack.c.h.b16 %v220
    %v1528 = vunpack.c.l.b16 %v221
    %v1529 = vunpack.c.h.b16 %v221
    %v1530 = vunpack.c.l.b16 %v222
    %v1531 = vunpack.c.h.b16 %v222
    %v1532 = vunpack.c.l.b16 %v223
    %v1533 = vunpack.c.h.b16 %v223
    %v1534 = vunpack.c.l.b16 %v224
    %v1535 = vunpack.c.h.b16 %v224
    %v1536 = vunpack.c.l.b16 %v225
    %v1537 = vunpack.c.h.b16 %v225
    %v1538 = vunpack.c.l.b16 %v226
    %v1539 = vunpack.c.h.b16 %v226
    %v1540 = vunpack.c.l.b16 %v227
    %v1541 = vunpack.c.h.b16 %v227
    %v1542 = vunpack.c.l.b16 %v228
    %v1543 = vunpack.c.h.b16 %v228
    %v1544 = vunpack.c.l.b16 %v229
    %v1545 = vunpack.c.h.b16 %v229
    %v1546 = vunpack.c.l.b16 %v230
    %v1547 = vunpack.c.h.b16 %v230
    %v1548 = vunpack.c.l.b16 %v231
    %v1549 = vunpack.c.h.b16 %v231
    %v1550 = vunpack.c.l.b16 %v232
    %v1551 = vunpack.c.h.b16 %v232
    %v1552 = vunpack.c.l.b16 %v233
    %v1553 = vunpack.c.h.b16 %v233
    %v1554 = vunpack.c.l.b16 %v234
    %v1555 = vunpack.c.h.b16 %v234
    %v1556 = vunpack.c.l.b16 %v235
    %v1557 = vunpack.c.h.b16 %v235
    %v1558 = vunpack.c.l.b16 %v236
    %v1559 = vunpack.c.h.b16 %v236
    %v1560 = vunpack.c.l.b16 %v237
    %v1561 = vunpack.c.h.b16 %v237
    %v1562 = vunpack.c.l.b16 %v238
    %v1563 = vunpack.c.h.b16 %v238
    %v1564 = vunpack.c.l.b16 %v239
    %v1565 = vunpack.c.h.b16 %v239
    %v1566 = vunpack.c.l.b16 %v240
    %v1567 = vunpack.c.h.b16 %v240
    %v1568 = vunpack.c.l.b16 %v241
    %v1569 = vunpack.c.h.b16 %v241
    %v1570 = vunpack.c.l.b16 %v242
    %v1571 = vunpack.c.h.b16 %v242
    %v1572 = vunpack.c.l.b16 %v243
    %v1573 = vunpack.c.h.b16 %v243
    %v1574 = vunpack.c.l.b16 %v244
    %v1575 = vunpack.c.h.b16 %v244
    %v1576 = vunpack.c.l.b16 %v245
    %v1577 = vunpack.c.h.b16 %v245
    %v1578 = vunpack.c.l.b16 %v246
    %v1579 = vunpack.c.h.b16 %v246
    %v1580 = vunpack.c.l.b16 %v247
    %v1581 = vunpack.c.h.b16 %v247
    %v1582 = vunpack.c.l.b16 %v248
    %v1583 = vunpack.c.h.b16 %v248
    %v1584 = vunpack.c.l.b16 %v249
    %v1585 = vunpack.c.h.b16 %v249
    %v1586 = vunpack.c.l.b16 %v250
    %v1587 = vunpack.c.h.b16 %v250
    %v1588 = vunpack.c.l.b16 %v251
    %v1589 = vunpack.c.h.b16 %v251
    %v1590 = vunpack.c.l.b16 %v252
    %v1591 = vunpack.c.h.b16 %v252
    %v1592 = vunpack.c.l.b16 %v253
    %v1593 = vunpack.c.h.b16 %v253
    %v1594 = vunpack.c.l.b16 %v254
    %v1595 = vunpack.c.h.b16 %v254
    %v1596 = vunpack.c.l.b16 %v255
    %v1597 = vunpack.c.h.b16 %v255
    %v1598 = vunpack.c.l.b16 %v256
    %v1599 = vunpack.c.h.b16 %v256
    %v1600 = vunpack.c.l.b16 %v257
    %v1601 = vunpack.c.h.b16 %v257
    %v1602 = vunpack.c.l.b16 %v258
    %v1603 = vunpack.c.h.b16 %v258
    %v1604 = vunpack.c.l.b16 %v259
    %v1605 = vunpack.c.h.b16 %v259
    %v1606 = vunpack.c.l.b16 %v260
    %v1607 = vunpack.c.h.b16 %v260
    %v1608 = vunpack.c.l.b16 %v261
    %v1609 = vunpack.c.h.b16 %v261
    %v1610 = vunpack.c.l.b16 %v262
    %v1611 = vunpack.c.h.b16 %v262
    %v1612 = vunpack.c.l.b16 %v263
    %v1613 = vunpack.c.h.b16 %v263
    %v1614 = vunpack.c.l.b16 %v264
    %v1615 = vunpack.c.h.b16 %v264
    %v1616 = vunpack.c.l.b16 %v265
    %v1617 = vunpack.c.h.b16 %v265
    %v1618 = vunpack.c.l.b16 %v266
    %v1619 = vunpack.c.h.b16 %v266
    %v1620 = vunpack.c.l.b16 %v267
    %v1621 = vunpack.c.h.b16 %v267
    %v1622 = vunpack.c.l.b16 %v268
    %v1623 = vunpack.c.h.b16 %v268
    %v1624 = vunpack.c.l.b16 %v269
    %v1625 = vunpack.c.h.b16 %v269
    %v1626 = vunpack.c.l.b16 %v270
    %v1627 = vunpack.c.h.b16 %v270
    %v1628 = vunpack.c.l.b16 %v271
    %v1629 = vunpack.c.h.b16 %v271
    %v1630 = vunpack.c.l.b16 %v272
    %v1631 = vunpack.c.h.b16 %v272
    %v1632 = vunpack.c.l.b16 %v273
    %v1633 = vunpack.c.h.b16 %v273
    %v1634 = vunpack.c.l.b16 %v274
    %v1635 = vunpack.c.h.b16 %v274
    %v1636 = vunpack.c.l.b16 %v275
    %v1637 = vunpack.c.h.b16 %v275
    %v1638 = vunpack.c.l.b16 %v276
    %v1639 = vunpack.c.h.b16 %v276
    %v1640 = vunpack.c.l.b16 %v277
    %v1641 = vunpack.c.h.b16 %v277
    %v1642 = vunpack.c.l.b16 %v278
    %v1643 = vunpack.c.h.b16 %v278
    %v1644 = vunpack.c.l.b16 %v279
    %v1645 = vunpack.c.h.b16 %v279
    %v1646 = vunpack.c.l.b16 %v280
    %v1647 = vunpack.c.h.b16 %v280
    %v1648 = vunpack.c.l.b16 %v281
    %v1649 = vunpack.c.h.b16 %v281
    %v1650 = vpack.c.b16 %v1398, %v1394
    %v1651 = vpack.c.b16 %v1399, %v1395
    %v1652 = vpack.c.b16 %v1400, %v1396
    %v1653 = vpack.c.b16 %v1401, %v1397
    %v1654 = vpack.c.b16 %v1406, %v1402
    %v1655 = vpack.c.b16 %v1407, %v1403
    %v1656 = vpack.c.b16 %v1408, %v1404
    %v1657 = vpack.c.b16 %v1409, %v1405
    %v1658 = vpack.c.b16 %v1414, %v1410
    %v1659 = vpack.c.b16 %v1415, %v1411
    %v1660 = vpack.c.b16 %v1416, %v1412
    %v1661 = vpack.c.b16 %v1417, %v1413
    %v1662 = vpack.c.b16 %v1422, %v1418
    %v1663 = vpack.c.b16 %v1423, %v1419
    %v1664 = vpack.c.b16 %v1424, %v1420
    %v1665 = vpack.c.b16 %v1425, %v1421
    %v1666 = vpack.c.b16 %v1430, %v1426
    %v1667 = vpack.c.b16 %v1431, %v1427
    %v1668 = vpack.c.b16 %v1432, %v1428
    %v1669 = vpack.c.b16 %v1433, %v1429
    %v1670 = vpack.c.b16 %v1438, %v1434
    %v1671 = vpack.c.b16 %v1439, %v1435
    %v1672 = vpack.c.b16 %v1440, %v1436
    %v1673 = vpack.c.b16 %v1441, %v1437
    %v1674 = vpack.c.b16 %v1446, %v1442
    %v1675 = vpack.c.b16 %v1447, %v1443
    %v1676 = vpack.c.b16 %v1448, %v1444
    %v1677 = vpack.c.b16 %v1449, %v1445
    %v1678 = vpack.c.b16 %v1454, %v1450
    %v1679 = vpack.c.b16 %v1455, %v1451
    %v1680 = vpack.c.b16 %v1456, %v1452
    %v1681 = vpack.c.b16 %v1457, %v1453
    %v1682 = vpack.c.b16 %v1462, %v1458
    %v1683 = vpack.c.b16 %v1463, %v1459
    %v1684 = vpack.c.b16 %v1464, %v1460
    %v1685 = vpack.c.b16 %v1465, %v1461
    %v1686 = vpack.c.b16 %v1470, %v1466
    %v1687 = vpack.c.b16 %v1471, %v1467
    %v1688 = vpack.c.b16 %v1472, %v1468
    %v1689 = vpack.c.b16 %v1473, %v1469
    %v1690 = vpack.c.b16 %v1478, %v1474
    %v1691 = vpack.c.b16 %v1479, %v1475
    %v1692 = vpack.c.b16 %v1480, %v1476
    %v1693 = vpack.c.b16 %v1481, %v1477
    %v1694 = vpack.c.b16 %v1486, %v1482
    %v1695 = vpack.c.b16 %v1487, %v1483
    %v1696 = vpack.c.b16 %v1488, %v1484
    %v1697 = vpack.c.b16 %v1489, %v1485
    %v1698 = vpack.c.b16 %v1494, %v1490
    %v1699 = vpack.c.b16 %v1495, %v1491
    %v1700 = vpack.c.b16 %v1496, %v1492
    %v1701 = vpack.c.b16 %v1497, %v1493
    %v1702 = vpack.c.b16 %v1502, %v1498
    %v1703 = vpack.c.b16 %v1503, %v1499
    %v1704 = vpack.c.b16 %v1504, %v1500
    %v1705 = vpack.c.b16 %v1505, %v1501
    %v1706 = vpack.c.b16 %v1510, %v1506
    %v1707 = vpack.c.b16 %v1511, %v1507
    %v1708 = vpack.c.b16 %v1512, %v1508
    %v1709 = vpack.c.b16 %v1513, %v1509
    %v1710 = vpack.c.b16 %v1518, %v1514
    %v1711 = vpack.c.b16 %v1519, %v1515
    %v1712 = vpack.c.b16 %v1520, %v1516
    %v1713 = vpack.c.b16 %v1521, %v1517
    %v1714 = vpack.c.b16 %v1526, %v1522
    %v1715 = vpack.c.b16 %v1527, %v1523
    %v1716 = vpack.c.b16 %v1528, %v1524
    %v1717 = vpack.c.b16 %v1529, %v1525
    %v1718 = vpack.c.b16 %v1534, %v1530
    %v1719 = vpack.c.b16 %v1535, %v1531
    %v1720 = vpack.c.b16 %v1536, %v1532
    %v1721 = vpack.c.b16 %v1537, %v1533
    %v1722 = vpack.c.b16 %v1542, %v1538
    %v1723 = vpack.c.b16 %v1543, %v1539
    %v1724 = vpack.c.b16 %v1544, %v1540
    %v1725 = vpack.c.b16 %v1545, %v1541
    %v1726 = vpack.c.b16 %v1550, %v1546
    %v1727 = vpack.c.b16 %v1551, %v1547
    %v1728 = vpack.c.b16 %v1552, %v1548
    %v1729 = vpack.c.b16 %v1553, %v1549
    %v1730 = vpack.c.b16 %v1558, %v1554
    %v1731 = vpack.c.b16 %v1559, %v1555
    %v1732 = vpack.c.b16 %v1560, %v1556
    %v1733 = vpack.c.b16 %v1561, %v1557
    %v1734 = vpack.c.b16 %v1566, %v1562
    %v1735 = vpack.c.b16 %v1567, %v1563
    %v1736 = vpack.c.b16 %v1568, %v1564
    %v1737 = vpack.c.b16 %v1569, %v1565
    %v1738 = vpack.c.b16 %v1574, %v1570
    %v1739 = vpack.c.b16 %v1575, %v1571
    %v1740 = vpack.c.b16 %v1576, %v1572
    %v1741 = vpack.c.b16 %v1577, %v1573
    %v1742 = vpack.c.b16 %v1582, %v1578
    %v1743 = vpack.c.b16 %v1583, %v1579
    %v1744 = vpack.c.b16 %v1584, %v1580
    %v1745 = vpack.c.b16 %v1585, %v1581
    %v1746 = vpack.c.b16 %v1590, %v1586
    %v1747 = vpack.c.b16 %v1591, %v1587
    %v1748 = vpack.c.b16 %v1592, %v1588
    %v1749 = vpack.c.b16 %v1593, %v1589
    %v1750 = vpack.c.b16 %v1598, %v1594
    %v1751 = vpack.c.b16 %v1599, %v1595
    %v1752 = vpack.c.b16 %v1600, %v1596
    %v1753 = vpack.c.b16 %v1601, %v1597
    %v1754 = vpack.c.b16 %v1606, %v1602
    %v1755 = vpack.c.b16 %v1607, %v1603
    %v1756 = vpack.c.b16 %v1608, %v1604
    %v1757 = vpack.c.b16 %v1609, %v1605
    %v1758 = vpack.c.b16 %v1614, %v1610
    %v1759 = vpack.c.b16 %v1615, %v1611
    %v1760 = vpack.c.b16 %v1616, %v1612
    %v1761 = vpack.c.b16 %v1617, %v1613
    %v1762 = vpack.c.b16 %v1622, %v1618
    %v1763 = vpack.c.b16 %v1623, %v1619
    %v1764 = vpack.c.b16 %v1624, %v1620
    %v1765 = vpack.c.b16 %v1625, %v1621
    %v1766 = vpack.c.b16 %v1630, %v1626
    %v1767 = vpack.c.b16 %v1631, %v1627
    %v1768 = vpack.c.b16 %v1632, %v1628
    %v1769 = vpack.c.b16 %v1633, %v1629
    %v1770 = vpack.c.b16 %v1638, %v1634
    %v1771 = vpack.c.b16 %v1639, %v1635
    %v1772 = vpack.c.b16 %v1640, %v1636
    %v1773 = vpack.c.b16 %v1641, %v1637
    %v1774 = vpack.c.b16 %v1646, %v1642
    %v1775 = vpack.c.b16 %v1647, %v1643
    %v1776 = vpack.c.b16 %v1648, %v1644
    %v1777 = vpack.c.b16 %v1649, %v1645
    %1906 = vmatpush.bf16.msra.mxu0 %v1678
    %1907 = vmatpush.bf16.msra.mxu0 %v1674
    %1908 = vmatpush.bf16.msra.mxu0 %v1670
    %1909 = vmatpush.bf16.msra.mxu0 %v1666
    %1910 = vmatpush.bf16.msra.mxu0 %v1662
    %1911 = vmatpush.bf16.msra.mxu0 %v1658
    %1912 = vmatpush.bf16.msra.mxu0 %v1654
    %1913 = vmatpush.bf16.msra.mxu0 %v1650
    %1914 = vmatmul.bf16.gmra.mxu0 %v150
    %v1915 = vpop.f32.mrf.mxu0
    %v1916 = vadd.f32 %v1107, %v1915
    %v1917 = vpop.f32.mrf.mxu0
    %1918 = vdwg.mxu0
    %1919 = vmatpush.bf16.msra.mxu0 %v1710
    %1920 = vmatpush.bf16.msra.mxu0 %v1706
    %1921 = vmatpush.bf16.msra.mxu0 %v1702
    %1922 = vmatpush.bf16.msra.mxu0 %v1698
    %1923 = vmatpush.bf16.msra.mxu0 %v1694
    %1924 = vmatpush.bf16.msra.mxu0 %v1690
    %1925 = vmatpush.bf16.msra.mxu0 %v1686
    %1926 = vmatpush.bf16.msra.mxu0 %v1682
    %1927 = vmatmul.bf16.gmra.mxu0 %v151
    %v1928 = vpop.f32.mrf.mxu0
    %v1929 = vadd.f32 %v1916, %v1928
    %v1930 = vpop.f32.mrf.mxu0
    %1931 = vdwg.mxu0
    %1932 = vmatpush.bf16.msra.mxu0 %v1742
    %1933 = vmatpush.bf16.msra.mxu0 %v1738
    %1934 = vmatpush.bf16.msra.mxu0 %v1734
    %1935 = vmatpush.bf16.msra.mxu0 %v1730
    %1936 = vmatpush.bf16.msra.mxu0 %v1726
    %1937 = vmatpush.bf16.msra.mxu0 %v1722
    %1938 = vmatpush.bf16.msra.mxu0 %v1718
    %1939 = vmatpush.bf16.msra.mxu0 %v1714
    %1940 = vmatmul.bf16.gmra.mxu0 %v152
    %v1941 = vpop.f32.mrf.mxu0
    %v1942 = vadd.f32 %v1929, %v1941
    %v1943 = vpop.f32.mrf.mxu0
    %1944 = vdwg.mxu0
    %1945 = vmatpush.bf16.msra.mxu0 %v1774
    %1946 = vmatpush.bf16.msra.mxu0 %v1770
    %1947 = vmatpush.bf16.msra.mxu0 %v1766
    %1948 = vmatpush.bf16.msra.mxu0 %v1762
    %1949 = vmatpush.bf16.msra.mxu0 %v1758
    %1950 = vmatpush.bf16.msra.mxu0 %v1754
    %1951 = vmatpush.bf16.msra.mxu0 %v1750
    %1952 = vmatpush.bf16.msra.mxu0 %v1746
    %1953 = vmatmul.bf16.gmra.mxu0 %v153
    %v1954 = vpop.f32.mrf.mxu0
    %v1955 = vadd.f32 %v1942, %v1954
    %v1956 = vpop.f32.mrf.mxu0
    %1957 = vdwg.mxu0
    %1958 = vmatpush.bf16.msra.mxu0 %v1679
    %1959 = vmatpush.bf16.msra.mxu0 %v1675
    %1960 = vmatpush.bf16.msra.mxu0 %v1671
    %1961 = vmatpush.bf16.msra.mxu0 %v1667
    %1962 = vmatpush.bf16.msra.mxu0 %v1663
    %1963 = vmatpush.bf16.msra.mxu0 %v1659
    %1964 = vmatpush.bf16.msra.mxu0 %v1655
    %1965 = vmatpush.bf16.msra.mxu0 %v1651
    %1966 = vmatmul.bf16.gmra.mxu0 %v150
    %v1967 = vpop.f32.mrf.mxu0
    %v1968 = vadd.f32 %v1159, %v1967
    %v1969 = vpop.f32.mrf.mxu0
    %1970 = vdwg.mxu0
    %1971 = vmatpush.bf16.msra.mxu0 %v1711
    %1972 = vmatpush.bf16.msra.mxu0 %v1707
    %1973 = vmatpush.bf16.msra.mxu0 %v1703
    %1974 = vmatpush.bf16.msra.mxu0 %v1699
    %1975 = vmatpush.bf16.msra.mxu0 %v1695
    %1976 = vmatpush.bf16.msra.mxu0 %v1691
    %1977 = vmatpush.bf16.msra.mxu0 %v1687
    %1978 = vmatpush.bf16.msra.mxu0 %v1683
    %1979 = vmatmul.bf16.gmra.mxu0 %v151
    %v1980 = vpop.f32.mrf.mxu0
    %v1981 = vadd.f32 %v1968, %v1980
    %v1982 = vpop.f32.mrf.mxu0
    %1983 = vdwg.mxu0
    %1984 = vmatpush.bf16.msra.mxu0 %v1743
    %1985 = vmatpush.bf16.msra.mxu0 %v1739
    %1986 = vmatpush.bf16.msra.mxu0 %v1735
    %1987 = vmatpush.bf16.msra.mxu0 %v1731
    %1988 = vmatpush.bf16.msra.mxu0 %v1727
    %1989 = vmatpush.bf16.msra.mxu0 %v1723
    %1990 = vmatpush.bf16.msra.mxu0 %v1719
    %1991 = vmatpush.bf16.msra.mxu0 %v1715
    %1992 = vmatmul.bf16.gmra.mxu0 %v152
    %v1993 = vpop.f32.mrf.mxu0
    %v1994 = vadd.f32 %v1981, %v1993
    %v1995 = vpop.f32.mrf.mxu0
    %1996 = vdwg.mxu0
    %1997 = vmatpush.bf16.msra.mxu0 %v1775
    %1998 = vmatpush.bf16.msra.mxu0 %v1771
    %1999 = vmatpush.bf16.msra.mxu0 %v1767
    %2000 = vmatpush.bf16.msra.mxu0 %v1763
    %2001 = vmatpush.bf16.msra.mxu0 %v1759
    %2002 = vmatpush.bf16.msra.mxu0 %v1755
    %2003 = vmatpush.bf16.msra.mxu0 %v1751
    %2004 = vmatpush.bf16.msra.mxu0 %v1747
    %2005 = vmatmul.bf16.gmra.mxu0 %v153
    %v2006 = vpop.f32.mrf.mxu0
    %v2007 = vadd.f32 %v1994, %v2006
    %v2008 = vpop.f32.mrf.mxu0
    %2009 = vdwg.mxu0
    %2010 = vmatpush.bf16.msra.mxu0 %v1680
    %2011 = vmatpush.bf16.msra.mxu0 %v1676
    %2012 = vmatpush.bf16.msra.mxu0 %v1672
    %2013 = vmatpush.bf16.msra.mxu0 %v1668
    %2014 = vmatpush.bf16.msra.mxu0 %v1664
    %2015 = vmatpush.bf16.msra.mxu0 %v1660
    %2016 = vmatpush.bf16.msra.mxu0 %v1656
    %2017 = vmatpush.bf16.msra.mxu0 %v1652
    %2018 = vmatmul.bf16.gmra.mxu0 %v150
    %v2019 = vpop.f32.mrf.mxu0
    %v2020 = vadd.f32 %v1211, %v2019
    %v2021 = vpop.f32.mrf.mxu0
    %2022 = vdwg.mxu0
    %2023 = vmatpush.bf16.msra.mxu0 %v1712
    %2024 = vmatpush.bf16.msra.mxu0 %v1708
    %2025 = vmatpush.bf16.msra.mxu0 %v1704
    %2026 = vmatpush.bf16.msra.mxu0 %v1700
    %2027 = vmatpush.bf16.msra.mxu0 %v1696
    %2028 = vmatpush.bf16.msra.mxu0 %v1692
    %2029 = vmatpush.bf16.msra.mxu0 %v1688
    %2030 = vmatpush.bf16.msra.mxu0 %v1684
    %2031 = vmatmul.bf16.gmra.mxu0 %v151
    %v2032 = vpop.f32.mrf.mxu0
    %v2033 = vadd.f32 %v2020, %v2032
    %v2034 = vpop.f32.mrf.mxu0
    %2035 = vdwg.mxu0
    %2036 = vmatpush.bf16.msra.mxu0 %v1744
    %2037 = vmatpush.bf16.msra.mxu0 %v1740
    %2038 = vmatpush.bf16.msra.mxu0 %v1736
    %2039 = vmatpush.bf16.msra.mxu0 %v1732
    %2040 = vmatpush.bf16.msra.mxu0 %v1728
    %2041 = vmatpush.bf16.msra.mxu0 %v1724
    %2042 = vmatpush.bf16.msra.mxu0 %v1720
    %2043 = vmatpush.bf16.msra.mxu0 %v1716
    %2044 = vmatmul.bf16.gmra.mxu0 %v152
    %v2045 = vpop.f32.mrf.mxu0
    %v2046 = vadd.f32 %v2033, %v2045
    %v2047 = vpop.f32.mrf.mxu0
    %2048 = vdwg.mxu0
    %2049 = vmatpush.bf16.msra.mxu0 %v1776
    %2050 = vmatpush.bf16.msra.mxu0 %v1772
    %2051 = vmatpush.bf16.msra.mxu0 %v1768
    %2052 = vmatpush.bf16.msra.mxu0 %v1764
    %2053 = vmatpush.bf16.msra.mxu0 %v1760
    %2054 = vmatpush.bf16.msra.mxu0 %v1756
    %2055 = vmatpush.bf16.msra.mxu0 %v1752
    %2056 = vmatpush.bf16.msra.mxu0 %v1748
    %2057 = vmatmul.bf16.gmra.mxu0 %v153
    %v2058 = vpop.f32.mrf.mxu0
    %v2059 = vadd.f32 %v2046, %v2058
    %v2060 = vpop.f32.mrf.mxu0
    %2061 = vdwg.mxu0
    %2062 = vmatpush.bf16.msra.mxu0 %v1681
    %2063 = vmatpush.bf16.msra.mxu0 %v1677
    %2064 = vmatpush.bf16.msra.mxu0 %v1673
    %2065 = vmatpush.bf16.msra.mxu0 %v1669
    %2066 = vmatpush.bf16.msra.mxu0 %v1665
    %2067 = vmatpush.bf16.msra.mxu0 %v1661
    %2068 = vmatpush.bf16.msra.mxu0 %v1657
    %2069 = vmatpush.bf16.msra.mxu0 %v1653
    %2070 = vmatmul.bf16.gmra.mxu0 %v150
    %v2071 = vpop.f32.mrf.mxu0
    %v2072 = vadd.f32 %v1263, %v2071
    %v2073 = vpop.f32.mrf.mxu0
    %2074 = vdwg.mxu0
    %2075 = vmatpush.bf16.msra.mxu0 %v1713
    %2076 = vmatpush.bf16.msra.mxu0 %v1709
    %2077 = vmatpush.bf16.msra.mxu0 %v1705
    %2078 = vmatpush.bf16.msra.mxu0 %v1701
    %2079 = vmatpush.bf16.msra.mxu0 %v1697
    %2080 = vmatpush.bf16.msra.mxu0 %v1693
    %2081 = vmatpush.bf16.msra.mxu0 %v1689
    %2082 = vmatpush.bf16.msra.mxu0 %v1685
    %2083 = vmatmul.bf16.gmra.mxu0 %v151
    %v2084 = vpop.f32.mrf.mxu0
    %v2085 = vadd.f32 %v2072, %v2084
    %v2086 = vpop.f32.mrf.mxu0
    %2087 = vdwg.mxu0
    %2088 = vmatpush.bf16.msra.mxu0 %v1745
    %2089 = vmatpush.bf16.msra.mxu0 %v1741
    %2090 = vmatpush.bf16.msra.mxu0 %v1737
    %2091 = vmatpush.bf16.msra.mxu0 %v1733
    %2092 = vmatpush.bf16.msra.mxu0 %v1729
    %2093 = vmatpush.bf16.msra.mxu0 %v1725
    %2094 = vmatpush.bf16.msra.mxu0 %v1721
    %2095 = vmatpush.bf16.msra.mxu0 %v1717
    %2096 = vmatmul.bf16.gmra.mxu0 %v152
    %v2097 = vpop.f32.mrf.mxu0
    %v2098 = vadd.f32 %v2085, %v2097
    %v2099 = vpop.f32.mrf.mxu0
    %2100 = vdwg.mxu0
    %2101 = vmatpush.bf16.msra.mxu0 %v1777
    %2102 = vmatpush.bf16.msra.mxu0 %v1773
    %2103 = vmatpush.bf16.msra.mxu0 %v1769
    %2104 = vmatpush.bf16.msra.mxu0 %v1765
    %2105 = vmatpush.bf16.msra.mxu0 %v1761
    %2106 = vmatpush.bf16.msra.mxu0 %v1757
    %2107 = vmatpush.bf16.msra.mxu0 %v1753
    %2108 = vmatpush.bf16.msra.mxu0 %v1749
    %2109 = vmatmul.bf16.gmra.mxu0 %v153
    %v2110 = vpop.f32.mrf.mxu0
    %v2111 = vadd.f32 %v2098, %v2110
    %v2112 = vpop.f32.mrf.mxu0
    %2113 = vdwg.mxu0
    %v2114 = vld [vmem:[#allocation7] sm:$0xff]
    %v2115 = vld [vmem:[#allocation7 + $0x8] sm:$0xff]
    %v2116 = vld [vmem:[#allocation7 + $0x10] sm:$0xff]
    %v2117 = vld [vmem:[#allocation7 + $0x18] sm:$0xff]
    %v2118 = vpack.c.bf16 %v2114, %v2114
    %v2119 = vpack.c.bf16 %v2115, %v2115
    %v2120 = vpack.c.bf16 %v2116, %v2116
    %v2121 = vpack.c.bf16 %v2117, %v2117
    %v2122 = vld [vmem:[#allocation8 + $0x800] sm:$0xff]
    %v2123 = vld [vmem:[#allocation8 + $0x808] sm:$0xff]
    %v2124 = vld [vmem:[#allocation8 + $0x810] sm:$0xff]
    %v2125 = vld [vmem:[#allocation8 + $0x818] sm:$0xff]
    %v2126 = vld [vmem:[#allocation8 + $0x820] sm:$0xff]
    %v2127 = vld [vmem:[#allocation8 + $0x828] sm:$0xff]
    %v2128 = vld [vmem:[#allocation8 + $0x830] sm:$0xff]
    %v2129 = vld [vmem:[#allocation8 + $0x838] sm:$0xff]
    %v2130 = vld [vmem:[#allocation8 + $0x840] sm:$0xff]
    %v2131 = vld [vmem:[#allocation8 + $0x848] sm:$0xff]
    %v2132 = vld [vmem:[#allocation8 + $0x850] sm:$0xff]
    %v2133 = vld [vmem:[#allocation8 + $0x858] sm:$0xff]
    %v2134 = vld [vmem:[#allocation8 + $0x860] sm:$0xff]
    %v2135 = vld [vmem:[#allocation8 + $0x868] sm:$0xff]
    %v2136 = vld [vmem:[#allocation8 + $0x870] sm:$0xff]
    %v2137 = vld [vmem:[#allocation8 + $0x878] sm:$0xff]
    %v2138 = vld [vmem:[#allocation8 + $0x880] sm:$0xff]
    %v2139 = vld [vmem:[#allocation8 + $0x888] sm:$0xff]
    %v2140 = vld [vmem:[#allocation8 + $0x890] sm:$0xff]
    %v2141 = vld [vmem:[#allocation8 + $0x898] sm:$0xff]
    %v2142 = vld [vmem:[#allocation8 + $0x8a0] sm:$0xff]
    %v2143 = vld [vmem:[#allocation8 + $0x8a8] sm:$0xff]
    %v2144 = vld [vmem:[#allocation8 + $0x8b0] sm:$0xff]
    %v2145 = vld [vmem:[#allocation8 + $0x8b8] sm:$0xff]
    %v2146 = vld [vmem:[#allocation8 + $0x8c0] sm:$0xff]
    %v2147 = vld [vmem:[#allocation8 + $0x8c8] sm:$0xff]
    %v2148 = vld [vmem:[#allocation8 + $0x8d0] sm:$0xff]
    %v2149 = vld [vmem:[#allocation8 + $0x8d8] sm:$0xff]
    %v2150 = vld [vmem:[#allocation8 + $0x8e0] sm:$0xff]
    %v2151 = vld [vmem:[#allocation8 + $0x8e8] sm:$0xff]
    %v2152 = vld [vmem:[#allocation8 + $0x8f0] sm:$0xff]
    %v2153 = vld [vmem:[#allocation8 + $0x8f8] sm:$0xff]
    %v2154 = vld [vmem:[#allocation8 + $0x900] sm:$0xff]
    %v2155 = vld [vmem:[#allocation8 + $0x908] sm:$0xff]
    %v2156 = vld [vmem:[#allocation8 + $0x910] sm:$0xff]
    %v2157 = vld [vmem:[#allocation8 + $0x918] sm:$0xff]
    %v2158 = vld [vmem:[#allocation8 + $0x920] sm:$0xff]
    %v2159 = vld [vmem:[#allocation8 + $0x928] sm:$0xff]
    %v2160 = vld [vmem:[#allocation8 + $0x930] sm:$0xff]
    %v2161 = vld [vmem:[#allocation8 + $0x938] sm:$0xff]
    %v2162 = vld [vmem:[#allocation8 + $0x940] sm:$0xff]
    %v2163 = vld [vmem:[#allocation8 + $0x948] sm:$0xff]
    %v2164 = vld [vmem:[#allocation8 + $0x950] sm:$0xff]
    %v2165 = vld [vmem:[#allocation8 + $0x958] sm:$0xff]
    %v2166 = vld [vmem:[#allocation8 + $0x960] sm:$0xff]
    %v2167 = vld [vmem:[#allocation8 + $0x968] sm:$0xff]
    %v2168 = vld [vmem:[#allocation8 + $0x970] sm:$0xff]
    %v2169 = vld [vmem:[#allocation8 + $0x978] sm:$0xff]
    %v2170 = vld [vmem:[#allocation8 + $0x980] sm:$0xff]
    %v2171 = vld [vmem:[#allocation8 + $0x988] sm:$0xff]
    %v2172 = vld [vmem:[#allocation8 + $0x990] sm:$0xff]
    %v2173 = vld [vmem:[#allocation8 + $0x998] sm:$0xff]
    %v2174 = vld [vmem:[#allocation8 + $0x9a0] sm:$0xff]
    %v2175 = vld [vmem:[#allocation8 + $0x9a8] sm:$0xff]
    %v2176 = vld [vmem:[#allocation8 + $0x9b0] sm:$0xff]
    %v2177 = vld [vmem:[#allocation8 + $0x9b8] sm:$0xff]
    %v2178 = vld [vmem:[#allocation8 + $0x9c0] sm:$0xff]
    %v2179 = vld [vmem:[#allocation8 + $0x9c8] sm:$0xff]
    %v2180 = vld [vmem:[#allocation8 + $0x9d0] sm:$0xff]
    %v2181 = vld [vmem:[#allocation8 + $0x9d8] sm:$0xff]
    %v2182 = vld [vmem:[#allocation8 + $0x9e0] sm:$0xff]
    %v2183 = vld [vmem:[#allocation8 + $0x9e8] sm:$0xff]
    %v2184 = vld [vmem:[#allocation8 + $0x9f0] sm:$0xff]
    %v2185 = vld [vmem:[#allocation8 + $0x9f8] sm:$0xff]
    %v2186 = vld [vmem:[#allocation8 + $0xa00] sm:$0xff]
    %v2187 = vld [vmem:[#allocation8 + $0xa08] sm:$0xff]
    %v2188 = vld [vmem:[#allocation8 + $0xa10] sm:$0xff]
    %v2189 = vld [vmem:[#allocation8 + $0xa18] sm:$0xff]
    %v2190 = vld [vmem:[#allocation8 + $0xa20] sm:$0xff]
    %v2191 = vld [vmem:[#allocation8 + $0xa28] sm:$0xff]
    %v2192 = vld [vmem:[#allocation8 + $0xa30] sm:$0xff]
    %v2193 = vld [vmem:[#allocation8 + $0xa38] sm:$0xff]
    %v2194 = vld [vmem:[#allocation8 + $0xa40] sm:$0xff]
    %v2195 = vld [vmem:[#allocation8 + $0xa48] sm:$0xff]
    %v2196 = vld [vmem:[#allocation8 + $0xa50] sm:$0xff]
    %v2197 = vld [vmem:[#allocation8 + $0xa58] sm:$0xff]
    %v2198 = vld [vmem:[#allocation8 + $0xa60] sm:$0xff]
    %v2199 = vld [vmem:[#allocation8 + $0xa68] sm:$0xff]
    %v2200 = vld [vmem:[#allocation8 + $0xa70] sm:$0xff]
    %v2201 = vld [vmem:[#allocation8 + $0xa78] sm:$0xff]
    %v2202 = vld [vmem:[#allocation8 + $0xa80] sm:$0xff]
    %v2203 = vld [vmem:[#allocation8 + $0xa88] sm:$0xff]
    %v2204 = vld [vmem:[#allocation8 + $0xa90] sm:$0xff]
    %v2205 = vld [vmem:[#allocation8 + $0xa98] sm:$0xff]
    %v2206 = vld [vmem:[#allocation8 + $0xaa0] sm:$0xff]
    %v2207 = vld [vmem:[#allocation8 + $0xaa8] sm:$0xff]
    %v2208 = vld [vmem:[#allocation8 + $0xab0] sm:$0xff]
    %v2209 = vld [vmem:[#allocation8 + $0xab8] sm:$0xff]
    %v2210 = vld [vmem:[#allocation8 + $0xac0] sm:$0xff]
    %v2211 = vld [vmem:[#allocation8 + $0xac8] sm:$0xff]
    %v2212 = vld [vmem:[#allocation8 + $0xad0] sm:$0xff]
    %v2213 = vld [vmem:[#allocation8 + $0xad8] sm:$0xff]
    %v2214 = vld [vmem:[#allocation8 + $0xae0] sm:$0xff]
    %v2215 = vld [vmem:[#allocation8 + $0xae8] sm:$0xff]
    %v2216 = vld [vmem:[#allocation8 + $0xaf0] sm:$0xff]
    %v2217 = vld [vmem:[#allocation8 + $0xaf8] sm:$0xff]
    %v2218 = vld [vmem:[#allocation8 + $0xb00] sm:$0xff]
    %v2219 = vld [vmem:[#allocation8 + $0xb08] sm:$0xff]
    %v2220 = vld [vmem:[#allocation8 + $0xb10] sm:$0xff]
    %v2221 = vld [vmem:[#allocation8 + $0xb18] sm:$0xff]
    %v2222 = vld [vmem:[#allocation8 + $0xb20] sm:$0xff]
    %v2223 = vld [vmem:[#allocation8 + $0xb28] sm:$0xff]
    %v2224 = vld [vmem:[#allocation8 + $0xb30] sm:$0xff]
    %v2225 = vld [vmem:[#allocation8 + $0xb38] sm:$0xff]
    %v2226 = vld [vmem:[#allocation8 + $0xb40] sm:$0xff]
    %v2227 = vld [vmem:[#allocation8 + $0xb48] sm:$0xff]
    %v2228 = vld [vmem:[#allocation8 + $0xb50] sm:$0xff]
    %v2229 = vld [vmem:[#allocation8 + $0xb58] sm:$0xff]
    %v2230 = vld [vmem:[#allocation8 + $0xb60] sm:$0xff]
    %v2231 = vld [vmem:[#allocation8 + $0xb68] sm:$0xff]
    %v2232 = vld [vmem:[#allocation8 + $0xb70] sm:$0xff]
    %v2233 = vld [vmem:[#allocation8 + $0xb78] sm:$0xff]
    %v2234 = vld [vmem:[#allocation8 + $0xb80] sm:$0xff]
    %v2235 = vld [vmem:[#allocation8 + $0xb88] sm:$0xff]
    %v2236 = vld [vmem:[#allocation8 + $0xb90] sm:$0xff]
    %v2237 = vld [vmem:[#allocation8 + $0xb98] sm:$0xff]
    %v2238 = vld [vmem:[#allocation8 + $0xba0] sm:$0xff]
    %v2239 = vld [vmem:[#allocation8 + $0xba8] sm:$0xff]
    %v2240 = vld [vmem:[#allocation8 + $0xbb0] sm:$0xff]
    %v2241 = vld [vmem:[#allocation8 + $0xbb8] sm:$0xff]
    %v2242 = vld [vmem:[#allocation8 + $0xbc0] sm:$0xff]
    %v2243 = vld [vmem:[#allocation8 + $0xbc8] sm:$0xff]
    %v2244 = vld [vmem:[#allocation8 + $0xbd0] sm:$0xff]
    %v2245 = vld [vmem:[#allocation8 + $0xbd8] sm:$0xff]
    %v2246 = vld [vmem:[#allocation8 + $0xbe0] sm:$0xff]
    %v2247 = vld [vmem:[#allocation8 + $0xbe8] sm:$0xff]
    %v2248 = vld [vmem:[#allocation8 + $0xbf0] sm:$0xff]
    %v2249 = vld [vmem:[#allocation8 + $0xbf8] sm:$0xff]
    %v2378 = vunpack.c.l.b16 %v2122
    %v2379 = vunpack.c.h.b16 %v2122
    %v2380 = vunpack.c.l.b16 %v2123
    %v2381 = vunpack.c.h.b16 %v2123
    %v2382 = vunpack.c.l.b16 %v2124
    %v2383 = vunpack.c.h.b16 %v2124
    %v2384 = vunpack.c.l.b16 %v2125
    %v2385 = vunpack.c.h.b16 %v2125
    %v2386 = vunpack.c.l.b16 %v2126
    %v2387 = vunpack.c.h.b16 %v2126
    %v2388 = vunpack.c.l.b16 %v2127
    %v2389 = vunpack.c.h.b16 %v2127
    %v2390 = vunpack.c.l.b16 %v2128
    %v2391 = vunpack.c.h.b16 %v2128
    %v2392 = vunpack.c.l.b16 %v2129
    %v2393 = vunpack.c.h.b16 %v2129
    %v2394 = vunpack.c.l.b16 %v2130
    %v2395 = vunpack.c.h.b16 %v2130
    %v2396 = vunpack.c.l.b16 %v2131
    %v2397 = vunpack.c.h.b16 %v2131
    %v2398 = vunpack.c.l.b16 %v2132
    %v2399 = vunpack.c.h.b16 %v2132
    %v2400 = vunpack.c.l.b16 %v2133
    %v2401 = vunpack.c.h.b16 %v2133
    %v2402 = vunpack.c.l.b16 %v2134
    %v2403 = vunpack.c.h.b16 %v2134
    %v2404 = vunpack.c.l.b16 %v2135
    %v2405 = vunpack.c.h.b16 %v2135
    %v2406 = vunpack.c.l.b16 %v2136
    %v2407 = vunpack.c.h.b16 %v2136
    %v2408 = vunpack.c.l.b16 %v2137
    %v2409 = vunpack.c.h.b16 %v2137
    %v2410 = vunpack.c.l.b16 %v2138
    %v2411 = vunpack.c.h.b16 %v2138
    %v2412 = vunpack.c.l.b16 %v2139
    %v2413 = vunpack.c.h.b16 %v2139
    %v2414 = vunpack.c.l.b16 %v2140
    %v2415 = vunpack.c.h.b16 %v2140
    %v2416 = vunpack.c.l.b16 %v2141
    %v2417 = vunpack.c.h.b16 %v2141
    %v2418 = vunpack.c.l.b16 %v2142
    %v2419 = vunpack.c.h.b16 %v2142
    %v2420 = vunpack.c.l.b16 %v2143
    %v2421 = vunpack.c.h.b16 %v2143
    %v2422 = vunpack.c.l.b16 %v2144
    %v2423 = vunpack.c.h.b16 %v2144
    %v2424 = vunpack.c.l.b16 %v2145
    %v2425 = vunpack.c.h.b16 %v2145
    %v2426 = vunpack.c.l.b16 %v2146
    %v2427 = vunpack.c.h.b16 %v2146
    %v2428 = vunpack.c.l.b16 %v2147
    %v2429 = vunpack.c.h.b16 %v2147
    %v2430 = vunpack.c.l.b16 %v2148
    %v2431 = vunpack.c.h.b16 %v2148
    %v2432 = vunpack.c.l.b16 %v2149
    %v2433 = vunpack.c.h.b16 %v2149
    %v2434 = vunpack.c.l.b16 %v2150
    %v2435 = vunpack.c.h.b16 %v2150
    %v2436 = vunpack.c.l.b16 %v2151
    %v2437 = vunpack.c.h.b16 %v2151
    %v2438 = vunpack.c.l.b16 %v2152
    %v2439 = vunpack.c.h.b16 %v2152
    %v2440 = vunpack.c.l.b16 %v2153
    %v2441 = vunpack.c.h.b16 %v2153
    %v2442 = vunpack.c.l.b16 %v2154
    %v2443 = vunpack.c.h.b16 %v2154
    %v2444 = vunpack.c.l.b16 %v2155
    %v2445 = vunpack.c.h.b16 %v2155
    %v2446 = vunpack.c.l.b16 %v2156
    %v2447 = vunpack.c.h.b16 %v2156
    %v2448 = vunpack.c.l.b16 %v2157
    %v2449 = vunpack.c.h.b16 %v2157
    %v2450 = vunpack.c.l.b16 %v2158
    %v2451 = vunpack.c.h.b16 %v2158
    %v2452 = vunpack.c.l.b16 %v2159
    %v2453 = vunpack.c.h.b16 %v2159
    %v2454 = vunpack.c.l.b16 %v2160
    %v2455 = vunpack.c.h.b16 %v2160
    %v2456 = vunpack.c.l.b16 %v2161
    %v2457 = vunpack.c.h.b16 %v2161
    %v2458 = vunpack.c.l.b16 %v2162
    %v2459 = vunpack.c.h.b16 %v2162
    %v2460 = vunpack.c.l.b16 %v2163
    %v2461 = vunpack.c.h.b16 %v2163
    %v2462 = vunpack.c.l.b16 %v2164
    %v2463 = vunpack.c.h.b16 %v2164
    %v2464 = vunpack.c.l.b16 %v2165
    %v2465 = vunpack.c.h.b16 %v2165
    %v2466 = vunpack.c.l.b16 %v2166
    %v2467 = vunpack.c.h.b16 %v2166
    %v2468 = vunpack.c.l.b16 %v2167
    %v2469 = vunpack.c.h.b16 %v2167
    %v2470 = vunpack.c.l.b16 %v2168
    %v2471 = vunpack.c.h.b16 %v2168
    %v2472 = vunpack.c.l.b16 %v2169
    %v2473 = vunpack.c.h.b16 %v2169
    %v2474 = vunpack.c.l.b16 %v2170
    %v2475 = vunpack.c.h.b16 %v2170
    %v2476 = vunpack.c.l.b16 %v2171
    %v2477 = vunpack.c.h.b16 %v2171
    %v2478 = vunpack.c.l.b16 %v2172
    %v2479 = vunpack.c.h.b16 %v2172
    %v2480 = vunpack.c.l.b16 %v2173
    %v2481 = vunpack.c.h.b16 %v2173
    %v2482 = vunpack.c.l.b16 %v2174
    %v2483 = vunpack.c.h.b16 %v2174
    %v2484 = vunpack.c.l.b16 %v2175
    %v2485 = vunpack.c.h.b16 %v2175
    %v2486 = vunpack.c.l.b16 %v2176
    %v2487 = vunpack.c.h.b16 %v2176
    %v2488 = vunpack.c.l.b16 %v2177
    %v2489 = vunpack.c.h.b16 %v2177
    %v2490 = vunpack.c.l.b16 %v2178
    %v2491 = vunpack.c.h.b16 %v2178
    %v2492 = vunpack.c.l.b16 %v2179
    %v2493 = vunpack.c.h.b16 %v2179
    %v2494 = vunpack.c.l.b16 %v2180
    %v2495 = vunpack.c.h.b16 %v2180
    %v2496 = vunpack.c.l.b16 %v2181
    %v2497 = vunpack.c.h.b16 %v2181
    %v2498 = vunpack.c.l.b16 %v2182
    %v2499 = vunpack.c.h.b16 %v2182
    %v2500 = vunpack.c.l.b16 %v2183
    %v2501 = vunpack.c.h.b16 %v2183
    %v2502 = vunpack.c.l.b16 %v2184
    %v2503 = vunpack.c.h.b16 %v2184
    %v2504 = vunpack.c.l.b16 %v2185
    %v2505 = vunpack.c.h.b16 %v2185
    %v2506 = vunpack.c.l.b16 %v2186
    %v2507 = vunpack.c.h.b16 %v2186
    %v2508 = vunpack.c.l.b16 %v2187
    %v2509 = vunpack.c.h.b16 %v2187
    %v2510 = vunpack.c.l.b16 %v2188
    %v2511 = vunpack.c.h.b16 %v2188
    %v2512 = vunpack.c.l.b16 %v2189
    %v2513 = vunpack.c.h.b16 %v2189
    %v2514 = vunpack.c.l.b16 %v2190
    %v2515 = vunpack.c.h.b16 %v2190
    %v2516 = vunpack.c.l.b16 %v2191
    %v2517 = vunpack.c.h.b16 %v2191
    %v2518 = vunpack.c.l.b16 %v2192
    %v2519 = vunpack.c.h.b16 %v2192
    %v2520 = vunpack.c.l.b16 %v2193
    %v2521 = vunpack.c.h.b16 %v2193
    %v2522 = vunpack.c.l.b16 %v2194
    %v2523 = vunpack.c.h.b16 %v2194
    %v2524 = vunpack.c.l.b16 %v2195
    %v2525 = vunpack.c.h.b16 %v2195
    %v2526 = vunpack.c.l.b16 %v2196
    %v2527 = vunpack.c.h.b16 %v2196
    %v2528 = vunpack.c.l.b16 %v2197
    %v2529 = vunpack.c.h.b16 %v2197
    %v2530 = vunpack.c.l.b16 %v2198
    %v2531 = vunpack.c.h.b16 %v2198
    %v2532 = vunpack.c.l.b16 %v2199
    %v2533 = vunpack.c.h.b16 %v2199
    %v2534 = vunpack.c.l.b16 %v2200
    %v2535 = vunpack.c.h.b16 %v2200
    %v2536 = vunpack.c.l.b16 %v2201
    %v2537 = vunpack.c.h.b16 %v2201
    %v2538 = vunpack.c.l.b16 %v2202
    %v2539 = vunpack.c.h.b16 %v2202
    %v2540 = vunpack.c.l.b16 %v2203
    %v2541 = vunpack.c.h.b16 %v2203
    %v2542 = vunpack.c.l.b16 %v2204
    %v2543 = vunpack.c.h.b16 %v2204
    %v2544 = vunpack.c.l.b16 %v2205
    %v2545 = vunpack.c.h.b16 %v2205
    %v2546 = vunpack.c.l.b16 %v2206
    %v2547 = vunpack.c.h.b16 %v2206
    %v2548 = vunpack.c.l.b16 %v2207
    %v2549 = vunpack.c.h.b16 %v2207
    %v2550 = vunpack.c.l.b16 %v2208
    %v2551 = vunpack.c.h.b16 %v2208
    %v2552 = vunpack.c.l.b16 %v2209
    %v2553 = vunpack.c.h.b16 %v2209
    %v2554 = vunpack.c.l.b16 %v2210
    %v2555 = vunpack.c.h.b16 %v2210
    %v2556 = vunpack.c.l.b16 %v2211
    %v2557 = vunpack.c.h.b16 %v2211
    %v2558 = vunpack.c.l.b16 %v2212
    %v2559 = vunpack.c.h.b16 %v2212
    %v2560 = vunpack.c.l.b16 %v2213
    %v2561 = vunpack.c.h.b16 %v2213
    %v2562 = vunpack.c.l.b16 %v2214
    %v2563 = vunpack.c.h.b16 %v2214
    %v2564 = vunpack.c.l.b16 %v2215
    %v2565 = vunpack.c.h.b16 %v2215
    %v2566 = vunpack.c.l.b16 %v2216
    %v2567 = vunpack.c.h.b16 %v2216
    %v2568 = vunpack.c.l.b16 %v2217
    %v2569 = vunpack.c.h.b16 %v2217
    %v2570 = vunpack.c.l.b16 %v2218
    %v2571 = vunpack.c.h.b16 %v2218
    %v2572 = vunpack.c.l.b16 %v2219
    %v2573 = vunpack.c.h.b16 %v2219
    %v2574 = vunpack.c.l.b16 %v2220
    %v2575 = vunpack.c.h.b16 %v2220
    %v2576 = vunpack.c.l.b16 %v2221
    %v2577 = vunpack.c.h.b16 %v2221
    %v2578 = vunpack.c.l.b16 %v2222
    %v2579 = vunpack.c.h.b16 %v2222
    %v2580 = vunpack.c.l.b16 %v2223
    %v2581 = vunpack.c.h.b16 %v2223
    %v2582 = vunpack.c.l.b16 %v2224
    %v2583 = vunpack.c.h.b16 %v2224
    %v2584 = vunpack.c.l.b16 %v2225
    %v2585 = vunpack.c.h.b16 %v2225
    %v2586 = vunpack.c.l.b16 %v2226
    %v2587 = vunpack.c.h.b16 %v2226
    %v2588 = vunpack.c.l.b16 %v2227
    %v2589 = vunpack.c.h.b16 %v2227
    %v2590 = vunpack.c.l.b16 %v2228
    %v2591 = vunpack.c.h.b16 %v2228
    %v2592 = vunpack.c.l.b16 %v2229
    %v2593 = vunpack.c.h.b16 %v2229
    %v2594 = vunpack.c.l.b16 %v2230
    %v2595 = vunpack.c.h.b16 %v2230
    %v2596 = vunpack.c.l.b16 %v2231
    %v2597 = vunpack.c.h.b16 %v2231
    %v2598 = vunpack.c.l.b16 %v2232
    %v2599 = vunpack.c.h.b16 %v2232
    %v2600 = vunpack.c.l.b16 %v2233
    %v2601 = vunpack.c.h.b16 %v2233
    %v2602 = vunpack.c.l.b16 %v2234
    %v2603 = vunpack.c.h.b16 %v2234
    %v2604 = vunpack.c.l.b16 %v2235
    %v2605 = vunpack.c.h.b16 %v2235
    %v2606 = vunpack.c.l.b16 %v2236
    %v2607 = vunpack.c.h.b16 %v2236
    %v2608 = vunpack.c.l.b16 %v2237
    %v2609 = vunpack.c.h.b16 %v2237
    %v2610 = vunpack.c.l.b16 %v2238
    %v2611 = vunpack.c.h.b16 %v2238
    %v2612 = vunpack.c.l.b16 %v2239
    %v2613 = vunpack.c.h.b16 %v2239
    %v2614 = vunpack.c.l.b16 %v2240
    %v2615 = vunpack.c.h.b16 %v2240
    %v2616 = vunpack.c.l.b16 %v2241
    %v2617 = vunpack.c.h.b16 %v2241
    %v2618 = vunpack.c.l.b16 %v2242
    %v2619 = vunpack.c.h.b16 %v2242
    %v2620 = vunpack.c.l.b16 %v2243
    %v2621 = vunpack.c.h.b16 %v2243
    %v2622 = vunpack.c.l.b16 %v2244
    %v2623 = vunpack.c.h.b16 %v2244
    %v2624 = vunpack.c.l.b16 %v2245
    %v2625 = vunpack.c.h.b16 %v2245
    %v2626 = vunpack.c.l.b16 %v2246
    %v2627 = vunpack.c.h.b16 %v2246
    %v2628 = vunpack.c.l.b16 %v2247
    %v2629 = vunpack.c.h.b16 %v2247
    %v2630 = vunpack.c.l.b16 %v2248
    %v2631 = vunpack.c.h.b16 %v2248
    %v2632 = vunpack.c.l.b16 %v2249
    %v2633 = vunpack.c.h.b16 %v2249
    %v2634 = vpack.c.b16 %v2382, %v2378
    %v2635 = vpack.c.b16 %v2383, %v2379
    %v2636 = vpack.c.b16 %v2384, %v2380
    %v2637 = vpack.c.b16 %v2385, %v2381
    %v2638 = vpack.c.b16 %v2390, %v2386
    %v2639 = vpack.c.b16 %v2391, %v2387
    %v2640 = vpack.c.b16 %v2392, %v2388
    %v2641 = vpack.c.b16 %v2393, %v2389
    %v2642 = vpack.c.b16 %v2398, %v2394
    %v2643 = vpack.c.b16 %v2399, %v2395
    %v2644 = vpack.c.b16 %v2400, %v2396
    %v2645 = vpack.c.b16 %v2401, %v2397
    %v2646 = vpack.c.b16 %v2406, %v2402
    %v2647 = vpack.c.b16 %v2407, %v2403
    %v2648 = vpack.c.b16 %v2408, %v2404
    %v2649 = vpack.c.b16 %v2409, %v2405
    %v2650 = vpack.c.b16 %v2414, %v2410
    %v2651 = vpack.c.b16 %v2415, %v2411
    %v2652 = vpack.c.b16 %v2416, %v2412
    %v2653 = vpack.c.b16 %v2417, %v2413
    %v2654 = vpack.c.b16 %v2422, %v2418
    %v2655 = vpack.c.b16 %v2423, %v2419
    %v2656 = vpack.c.b16 %v2424, %v2420
    %v2657 = vpack.c.b16 %v2425, %v2421
    %v2658 = vpack.c.b16 %v2430, %v2426
    %v2659 = vpack.c.b16 %v2431, %v2427
    %v2660 = vpack.c.b16 %v2432, %v2428
    %v2661 = vpack.c.b16 %v2433, %v2429
    %v2662 = vpack.c.b16 %v2438, %v2434
    %v2663 = vpack.c.b16 %v2439, %v2435
    %v2664 = vpack.c.b16 %v2440, %v2436
    %v2665 = vpack.c.b16 %v2441, %v2437
    %v2666 = vpack.c.b16 %v2446, %v2442
    %v2667 = vpack.c.b16 %v2447, %v2443
    %v2668 = vpack.c.b16 %v2448, %v2444
    %v2669 = vpack.c.b16 %v2449, %v2445
    %v2670 = vpack.c.b16 %v2454, %v2450
    %v2671 = vpack.c.b16 %v2455, %v2451
    %v2672 = vpack.c.b16 %v2456, %v2452
    %v2673 = vpack.c.b16 %v2457, %v2453
    %v2674 = vpack.c.b16 %v2462, %v2458
    %v2675 = vpack.c.b16 %v2463, %v2459
    %v2676 = vpack.c.b16 %v2464, %v2460
    %v2677 = vpack.c.b16 %v2465, %v2461
    %v2678 = vpack.c.b16 %v2470, %v2466
    %v2679 = vpack.c.b16 %v2471, %v2467
    %v2680 = vpack.c.b16 %v2472, %v2468
    %v2681 = vpack.c.b16 %v2473, %v2469
    %v2682 = vpack.c.b16 %v2478, %v2474
    %v2683 = vpack.c.b16 %v2479, %v2475
    %v2684 = vpack.c.b16 %v2480, %v2476
    %v2685 = vpack.c.b16 %v2481, %v2477
    %v2686 = vpack.c.b16 %v2486, %v2482
    %v2687 = vpack.c.b16 %v2487, %v2483
    %v2688 = vpack.c.b16 %v2488, %v2484
    %v2689 = vpack.c.b16 %v2489, %v2485
    %v2690 = vpack.c.b16 %v2494, %v2490
    %v2691 = vpack.c.b16 %v2495, %v2491
    %v2692 = vpack.c.b16 %v2496, %v2492
    %v2693 = vpack.c.b16 %v2497, %v2493
    %v2694 = vpack.c.b16 %v2502, %v2498
    %v2695 = vpack.c.b16 %v2503, %v2499
    %v2696 = vpack.c.b16 %v2504, %v2500
    %v2697 = vpack.c.b16 %v2505, %v2501
    %v2698 = vpack.c.b16 %v2510, %v2506
    %v2699 = vpack.c.b16 %v2511, %v2507
    %v2700 = vpack.c.b16 %v2512, %v2508
    %v2701 = vpack.c.b16 %v2513, %v2509
    %v2702 = vpack.c.b16 %v2518, %v2514
    %v2703 = vpack.c.b16 %v2519, %v2515
    %v2704 = vpack.c.b16 %v2520, %v2516
    %v2705 = vpack.c.b16 %v2521, %v2517
    %v2706 = vpack.c.b16 %v2526, %v2522
    %v2707 = vpack.c.b16 %v2527, %v2523
    %v2708 = vpack.c.b16 %v2528, %v2524
    %v2709 = vpack.c.b16 %v2529, %v2525
    %v2710 = vpack.c.b16 %v2534, %v2530
    %v2711 = vpack.c.b16 %v2535, %v2531
    %v2712 = vpack.c.b16 %v2536, %v2532
    %v2713 = vpack.c.b16 %v2537, %v2533
    %v2714 = vpack.c.b16 %v2542, %v2538
    %v2715 = vpack.c.b16 %v2543, %v2539
    %v2716 = vpack.c.b16 %v2544, %v2540
    %v2717 = vpack.c.b16 %v2545, %v2541
    %v2718 = vpack.c.b16 %v2550, %v2546
    %v2719 = vpack.c.b16 %v2551, %v2547
    %v2720 = vpack.c.b16 %v2552, %v2548
    %v2721 = vpack.c.b16 %v2553, %v2549
    %v2722 = vpack.c.b16 %v2558, %v2554
    %v2723 = vpack.c.b16 %v2559, %v2555
    %v2724 = vpack.c.b16 %v2560, %v2556
    %v2725 = vpack.c.b16 %v2561, %v2557
    %v2726 = vpack.c.b16 %v2566, %v2562
    %v2727 = vpack.c.b16 %v2567, %v2563
    %v2728 = vpack.c.b16 %v2568, %v2564
    %v2729 = vpack.c.b16 %v2569, %v2565
    %v2730 = vpack.c.b16 %v2574, %v2570
    %v2731 = vpack.c.b16 %v2575, %v2571
    %v2732 = vpack.c.b16 %v2576, %v2572
    %v2733 = vpack.c.b16 %v2577, %v2573
    %v2734 = vpack.c.b16 %v2582, %v2578
    %v2735 = vpack.c.b16 %v2583, %v2579
    %v2736 = vpack.c.b16 %v2584, %v2580
    %v2737 = vpack.c.b16 %v2585, %v2581
    %v2738 = vpack.c.b16 %v2590, %v2586
    %v2739 = vpack.c.b16 %v2591, %v2587
    %v2740 = vpack.c.b16 %v2592, %v2588
    %v2741 = vpack.c.b16 %v2593, %v2589
    %v2742 = vpack.c.b16 %v2598, %v2594
    %v2743 = vpack.c.b16 %v2599, %v2595
    %v2744 = vpack.c.b16 %v2600, %v2596
    %v2745 = vpack.c.b16 %v2601, %v2597
    %v2746 = vpack.c.b16 %v2606, %v2602
    %v2747 = vpack.c.b16 %v2607, %v2603
    %v2748 = vpack.c.b16 %v2608, %v2604
    %v2749 = vpack.c.b16 %v2609, %v2605
    %v2750 = vpack.c.b16 %v2614, %v2610
    %v2751 = vpack.c.b16 %v2615, %v2611
    %v2752 = vpack.c.b16 %v2616, %v2612
    %v2753 = vpack.c.b16 %v2617, %v2613
    %v2754 = vpack.c.b16 %v2622, %v2618
    %v2755 = vpack.c.b16 %v2623, %v2619
    %v2756 = vpack.c.b16 %v2624, %v2620
    %v2757 = vpack.c.b16 %v2625, %v2621
    %v2758 = vpack.c.b16 %v2630, %v2626
    %v2759 = vpack.c.b16 %v2631, %v2627
    %v2760 = vpack.c.b16 %v2632, %v2628
    %v2761 = vpack.c.b16 %v2633, %v2629
    %2890 = vmatpush.bf16.msra.mxu0 %v2662
    %2891 = vmatpush.bf16.msra.mxu0 %v2658
    %2892 = vmatpush.bf16.msra.mxu0 %v2654
    %2893 = vmatpush.bf16.msra.mxu0 %v2650
    %2894 = vmatpush.bf16.msra.mxu0 %v2646
    %2895 = vmatpush.bf16.msra.mxu0 %v2642
    %2896 = vmatpush.bf16.msra.mxu0 %v2638
    %2897 = vmatpush.bf16.msra.mxu0 %v2634
    %2898 = vmatmul.bf16.gmra.mxu0 %v2118
    %v2899 = vpop.f32.mrf.mxu0
    %v2900 = vadd.f32 0.0, %v2899
    %v2901 = vpop.f32.mrf.mxu0
    %2902 = vdwg.mxu0
    %2903 = vmatpush.bf16.msra.mxu0 %v2694
    %2904 = vmatpush.bf16.msra.mxu0 %v2690
    %2905 = vmatpush.bf16.msra.mxu0 %v2686
    %2906 = vmatpush.bf16.msra.mxu0 %v2682
    %2907 = vmatpush.bf16.msra.mxu0 %v2678
    %2908 = vmatpush.bf16.msra.mxu0 %v2674
    %2909 = vmatpush.bf16.msra.mxu0 %v2670
    %2910 = vmatpush.bf16.msra.mxu0 %v2666
    %2911 = vmatmul.bf16.gmra.mxu0 %v2119
    %v2912 = vpop.f32.mrf.mxu0
    %v2913 = vadd.f32 %v2900, %v2912
    %v2914 = vpop.f32.mrf.mxu0
    %2915 = vdwg.mxu0
    %2916 = vmatpush.bf16.msra.mxu0 %v2726
    %2917 = vmatpush.bf16.msra.mxu0 %v2722
    %2918 = vmatpush.bf16.msra.mxu0 %v2718
    %2919 = vmatpush.bf16.msra.mxu0 %v2714
    %2920 = vmatpush.bf16.msra.mxu0 %v2710
    %2921 = vmatpush.bf16.msra.mxu0 %v2706
    %2922 = vmatpush.bf16.msra.mxu0 %v2702
    %2923 = vmatpush.bf16.msra.mxu0 %v2698
    %2924 = vmatmul.bf16.gmra.mxu0 %v2120
    %v2925 = vpop.f32.mrf.mxu0
    %v2926 = vadd.f32 %v2913, %v2925
    %v2927 = vpop.f32.mrf.mxu0
    %2928 = vdwg.mxu0
    %2929 = vmatpush.bf16.msra.mxu0 %v2758
    %2930 = vmatpush.bf16.msra.mxu0 %v2754
    %2931 = vmatpush.bf16.msra.mxu0 %v2750
    %2932 = vmatpush.bf16.msra.mxu0 %v2746
    %2933 = vmatpush.bf16.msra.mxu0 %v2742
    %2934 = vmatpush.bf16.msra.mxu0 %v2738
    %2935 = vmatpush.bf16.msra.mxu0 %v2734
    %2936 = vmatpush.bf16.msra.mxu0 %v2730
    %2937 = vmatmul.bf16.gmra.mxu0 %v2121
    %v2938 = vpop.f32.mrf.mxu0
    %v2939 = vadd.f32 %v2926, %v2938
    %v2940 = vpop.f32.mrf.mxu0
    %2941 = vdwg.mxu0
    %2942 = vmatpush.bf16.msra.mxu0 %v2663
    %2943 = vmatpush.bf16.msra.mxu0 %v2659
    %2944 = vmatpush.bf16.msra.mxu0 %v2655
    %2945 = vmatpush.bf16.msra.mxu0 %v2651
    %2946 = vmatpush.bf16.msra.mxu0 %v2647
    %2947 = vmatpush.bf16.msra.mxu0 %v2643
    %2948 = vmatpush.bf16.msra.mxu0 %v2639
    %2949 = vmatpush.bf16.msra.mxu0 %v2635
    %2950 = vmatmul.bf16.gmra.mxu0 %v2118
    %v2951 = vpop.f32.mrf.mxu0
    %v2952 = vadd.f32 0.0, %v2951
    %v2953 = vpop.f32.mrf.mxu0
    %2954 = vdwg.mxu0
    %2955 = vmatpush.bf16.msra.mxu0 %v2695
    %2956 = vmatpush.bf16.msra.mxu0 %v2691
    %2957 = vmatpush.bf16.msra.mxu0 %v2687
    %2958 = vmatpush.bf16.msra.mxu0 %v2683
    %2959 = vmatpush.bf16.msra.mxu0 %v2679
    %2960 = vmatpush.bf16.msra.mxu0 %v2675
    %2961 = vmatpush.bf16.msra.mxu0 %v2671
    %2962 = vmatpush.bf16.msra.mxu0 %v2667
    %2963 = vmatmul.bf16.gmra.mxu0 %v2119
    %v2964 = vpop.f32.mrf.mxu0
    %v2965 = vadd.f32 %v2952, %v2964
    %v2966 = vpop.f32.mrf.mxu0
    %2967 = vdwg.mxu0
    %2968 = vmatpush.bf16.msra.mxu0 %v2727
    %2969 = vmatpush.bf16.msra.mxu0 %v2723
    %2970 = vmatpush.bf16.msra.mxu0 %v2719
    %2971 = vmatpush.bf16.msra.mxu0 %v2715
    %2972 = vmatpush.bf16.msra.mxu0 %v2711
    %2973 = vmatpush.bf16.msra.mxu0 %v2707
    %2974 = vmatpush.bf16.msra.mxu0 %v2703
    %2975 = vmatpush.bf16.msra.mxu0 %v2699
    %2976 = vmatmul.bf16.gmra.mxu0 %v2120
    %v2977 = vpop.f32.mrf.mxu0
    %v2978 = vadd.f32 %v2965, %v2977
    %v2979 = vpop.f32.mrf.mxu0
    %2980 = vdwg.mxu0
    %2981 = vmatpush.bf16.msra.mxu0 %v2759
    %2982 = vmatpush.bf16.msra.mxu0 %v2755
    %2983 = vmatpush.bf16.msra.mxu0 %v2751
    %2984 = vmatpush.bf16.msra.mxu0 %v2747
    %2985 = vmatpush.bf16.msra.mxu0 %v2743
    %2986 = vmatpush.bf16.msra.mxu0 %v2739
    %2987 = vmatpush.bf16.msra.mxu0 %v2735
    %2988 = vmatpush.bf16.msra.mxu0 %v2731
    %2989 = vmatmul.bf16.gmra.mxu0 %v2121
    %v2990 = vpop.f32.mrf.mxu0
    %v2991 = vadd.f32 %v2978, %v2990
    %v2992 = vpop.f32.mrf.mxu0
    %2993 = vdwg.mxu0
    %2994 = vmatpush.bf16.msra.mxu0 %v2664
    %2995 = vmatpush.bf16.msra.mxu0 %v2660
    %2996 = vmatpush.bf16.msra.mxu0 %v2656
    %2997 = vmatpush.bf16.msra.mxu0 %v2652
    %2998 = vmatpush.bf16.msra.mxu0 %v2648
    %2999 = vmatpush.bf16.msra.mxu0 %v2644
    %3000 = vmatpush.bf16.msra.mxu0 %v2640
    %3001 = vmatpush.bf16.msra.mxu0 %v2636
    %3002 = vmatmul.bf16.gmra.mxu0 %v2118
    %v3003 = vpop.f32.mrf.mxu0
    %v3004 = vadd.f32 0.0, %v3003
    %v3005 = vpop.f32.mrf.mxu0
    %3006 = vdwg.mxu0
    %3007 = vmatpush.bf16.msra.mxu0 %v2696
    %3008 = vmatpush.bf16.msra.mxu0 %v2692
    %3009 = vmatpush.bf16.msra.mxu0 %v2688
    %3010 = vmatpush.bf16.msra.mxu0 %v2684
    %3011 = vmatpush.bf16.msra.mxu0 %v2680
    %3012 = vmatpush.bf16.msra.mxu0 %v2676
    %3013 = vmatpush.bf16.msra.mxu0 %v2672
    %3014 = vmatpush.bf16.msra.mxu0 %v2668
    %3015 = vmatmul.bf16.gmra.mxu0 %v2119
    %v3016 = vpop.f32.mrf.mxu0
    %v3017 = vadd.f32 %v3004, %v3016
    %v3018 = vpop.f32.mrf.mxu0
    %3019 = vdwg.mxu0
    %3020 = vmatpush.bf16.msra.mxu0 %v2728
    %3021 = vmatpush.bf16.msra.mxu0 %v2724
    %3022 = vmatpush.bf16.msra.mxu0 %v2720
    %3023 = vmatpush.bf16.msra.mxu0 %v2716
    %3024 = vmatpush.bf16.msra.mxu0 %v2712
    %3025 = vmatpush.bf16.msra.mxu0 %v2708
    %3026 = vmatpush.bf16.msra.mxu0 %v2704
    %3027 = vmatpush.bf16.msra.mxu0 %v2700
    %3028 = vmatmul.bf16.gmra.mxu0 %v2120
    %v3029 = vpop.f32.mrf.mxu0
    %v3030 = vadd.f32 %v3017, %v3029
    %v3031 = vpop.f32.mrf.mxu0
    %3032 = vdwg.mxu0
    %3033 = vmatpush.bf16.msra.mxu0 %v2760
    %3034 = vmatpush.bf16.msra.mxu0 %v2756
    %3035 = vmatpush.bf16.msra.mxu0 %v2752
    %3036 = vmatpush.bf16.msra.mxu0 %v2748
    %3037 = vmatpush.bf16.msra.mxu0 %v2744
    %3038 = vmatpush.bf16.msra.mxu0 %v2740
    %3039 = vmatpush.bf16.msra.mxu0 %v2736
    %3040 = vmatpush.bf16.msra.mxu0 %v2732
    %3041 = vmatmul.bf16.gmra.mxu0 %v2121
    %v3042 = vpop.f32.mrf.mxu0
    %v3043 = vadd.f32 %v3030, %v3042
    %v3044 = vpop.f32.mrf.mxu0
    %3045 = vdwg.mxu0
    %3046 = vmatpush.bf16.msra.mxu0 %v2665
    %3047 = vmatpush.bf16.msra.mxu0 %v2661
    %3048 = vmatpush.bf16.msra.mxu0 %v2657
    %3049 = vmatpush.bf16.msra.mxu0 %v2653
    %3050 = vmatpush.bf16.msra.mxu0 %v2649
    %3051 = vmatpush.bf16.msra.mxu0 %v2645
    %3052 = vmatpush.bf16.msra.mxu0 %v2641
    %3053 = vmatpush.bf16.msra.mxu0 %v2637
    %3054 = vmatmul.bf16.gmra.mxu0 %v2118
    %v3055 = vpop.f32.mrf.mxu0
    %v3056 = vadd.f32 0.0, %v3055
    %v3057 = vpop.f32.mrf.mxu0
    %3058 = vdwg.mxu0
    %3059 = vmatpush.bf16.msra.mxu0 %v2697
    %3060 = vmatpush.bf16.msra.mxu0 %v2693
    %3061 = vmatpush.bf16.msra.mxu0 %v2689
    %3062 = vmatpush.bf16.msra.mxu0 %v2685
    %3063 = vmatpush.bf16.msra.mxu0 %v2681
    %3064 = vmatpush.bf16.msra.mxu0 %v2677
    %3065 = vmatpush.bf16.msra.mxu0 %v2673
    %3066 = vmatpush.bf16.msra.mxu0 %v2669
    %3067 = vmatmul.bf16.gmra.mxu0 %v2119
    %v3068 = vpop.f32.mrf.mxu0
    %v3069 = vadd.f32 %v3056, %v3068
    %v3070 = vpop.f32.mrf.mxu0
    %3071 = vdwg.mxu0
    %3072 = vmatpush.bf16.msra.mxu0 %v2729
    %3073 = vmatpush.bf16.msra.mxu0 %v2725
    %3074 = vmatpush.bf16.msra.mxu0 %v2721
    %3075 = vmatpush.bf16.msra.mxu0 %v2717
    %3076 = vmatpush.bf16.msra.mxu0 %v2713
    %3077 = vmatpush.bf16.msra.mxu0 %v2709
    %3078 = vmatpush.bf16.msra.mxu0 %v2705
    %3079 = vmatpush.bf16.msra.mxu0 %v2701
    %3080 = vmatmul.bf16.gmra.mxu0 %v2120
    %v3081 = vpop.f32.mrf.mxu0
    %v3082 = vadd.f32 %v3069, %v3081
    %v3083 = vpop.f32.mrf.mxu0
    %3084 = vdwg.mxu0
    %3085 = vmatpush.bf16.msra.mxu0 %v2761
    %3086 = vmatpush.bf16.msra.mxu0 %v2757
    %3087 = vmatpush.bf16.msra.mxu0 %v2753
    %3088 = vmatpush.bf16.msra.mxu0 %v2749
    %3089 = vmatpush.bf16.msra.mxu0 %v2745
    %3090 = vmatpush.bf16.msra.mxu0 %v2741
    %3091 = vmatpush.bf16.msra.mxu0 %v2737
    %3092 = vmatpush.bf16.msra.mxu0 %v2733
    %3093 = vmatmul.bf16.gmra.mxu0 %v2121
    %v3094 = vpop.f32.mrf.mxu0
    %v3095 = vadd.f32 %v3082, %v3094
    %v3096 = vpop.f32.mrf.mxu0
    %3097 = vdwg.mxu0
    %v3098 = vadd.f32 %v1955, %v2939
    %v3099 = vadd.f32 %v2007, %v2991
    %v3100 = vadd.f32 %v2059, %v3043
    %v3101 = vadd.f32 %v2111, %v3095
    %v3102 = vld [vmem:[#allocation10] sm:$0xf]
    %v3104 = vperm.slane %v3102, 0
    %v3105 = vperm.slane %v3102, 1
    %v3106 = vperm.slane %v3102, 2
    %v3107 = vperm.slane %v3102, 3
    %v3112 = vadd.f32 %v3098, %v3104
    %v3113 = vadd.f32 %v3099, %v3105
    %v3114 = vadd.f32 %v3100, %v3106
    %v3115 = vadd.f32 %v3101, %v3107
    %v3116 = vmax.f32 %v3112, 0.0
    %v3117 = vmax.f32 %v3113, 0.0
    %v3118 = vmax.f32 %v3114, 0.0
    %v3119 = vmax.f32 %v3115, 0.0
    %v3120 = vpack.c.bf16 %v3116, %v3116
    %v3121 = vpack.c.bf16 %v3117, %v3117
    %v3122 = vpack.c.bf16 %v3118, %v3118
    %v3123 = vpack.c.bf16 %v3119, %v3119
    %v3124 = vld [vmem:[#allocation11] sm:$0xff]
    %v3125 = vld [vmem:[#allocation11 + $0x8] sm:$0xff]
    %v3126 = vld [vmem:[#allocation11 + $0x10] sm:$0xff]
    %v3127 = vld [vmem:[#allocation11 + $0x18] sm:$0xff]
    %v3128 = vld [vmem:[#allocation11 + $0x20] sm:$0xff]
    %v3129 = vld [vmem:[#allocation11 + $0x28] sm:$0xff]
    %v3130 = vld [vmem:[#allocation11 + $0x30] sm:$0xff]
    %v3131 = vld [vmem:[#allocation11 + $0x38] sm:$0xff]
    %v3132 = vld [vmem:[#allocation11 + $0x40] sm:$0xff]
    %v3133 = vld [vmem:[#allocation11 + $0x48] sm:$0xff]
    %v3134 = vld [vmem:[#allocation11 + $0x50] sm:$0xff]
    %v3135 = vld [vmem:[#allocation11 + $0x58] sm:$0xff]
    %v3136 = vld [vmem:[#allocation11 + $0x60] sm:$0xff]
    %v3137 = vld [vmem:[#allocation11 + $0x68] sm:$0xff]
    %v3138 = vld [vmem:[#allocation11 + $0x70] sm:$0xff]
    %v3139 = vld [vmem:[#allocation11 + $0x78] sm:$0xff]
    %v3140 = vld [vmem:[#allocation11 + $0x80] sm:$0xff]
    %v3141 = vld [vmem:[#allocation11 + $0x88] sm:$0xff]
    %v3142 = vld [vmem:[#allocation11 + $0x90] sm:$0xff]
    %v3143 = vld [vmem:[#allocation11 + $0x98] sm:$0xff]
    %v3144 = vld [vmem:[#allocation11 + $0xa0] sm:$0xff]
    %v3145 = vld [vmem:[#allocation11 + $0xa8] sm:$0xff]
    %v3146 = vld [vmem:[#allocation11 + $0xb0] sm:$0xff]
    %v3147 = vld [vmem:[#allocation11 + $0xb8] sm:$0xff]
    %v3148 = vld [vmem:[#allocation11 + $0xc0] sm:$0xff]
    %v3149 = vld [vmem:[#allocation11 + $0xc8] sm:$0xff]
    %v3150 = vld [vmem:[#allocation11 + $0xd0] sm:$0xff]
    %v3151 = vld [vmem:[#allocation11 + $0xd8] sm:$0xff]
    %v3152 = vld [vmem:[#allocation11 + $0xe0] sm:$0xff]
    %v3153 = vld [vmem:[#allocation11 + $0xe8] sm:$0xff]
    %v3154 = vld [vmem:[#allocation11 + $0xf0] sm:$0xff]
    %v3155 = vld [vmem:[#allocation11 + $0xf8] sm:$0xff]
    %v3156 = vld [vmem:[#allocation11 + $0x100] sm:$0xff]
    %v3157 = vld [vmem:[#allocation11 + $0x108] sm:$0xff]
    %v3158 = vld [vmem:[#allocation11 + $0x110] sm:$0xff]
    %v3159 = vld [vmem:[#allocation11 + $0x118] sm:$0xff]
    %v3160 = vld [vmem:[#allocation11 + $0x120] sm:$0xff]
    %v3161 = vld [vmem:[#allocation11 + $0x128] sm:$0xff]
    %v3162 = vld [vmem:[#allocation11 + $0x130] sm:$0xff]
    %v3163 = vld [vmem:[#allocation11 + $0x138] sm:$0xff]
    %v3164 = vld [vmem:[#allocation11 + $0x140] sm:$0xff]
    %v3165 = vld [vmem:[#allocation11 + $0x148] sm:$0xff]
    %v3166 = vld [vmem:[#allocation11 + $0x150] sm:$0xff]
    %v3167 = vld [vmem:[#allocation11 + $0x158] sm:$0xff]
    %v3168 = vld [vmem:[#allocation11 + $0x160] sm:$0xff]
    %v3169 = vld [vmem:[#allocation11 + $0x168] sm:$0xff]
    %v3170 = vld [vmem:[#allocation11 + $0x170] sm:$0xff]
    %v3171 = vld [vmem:[#allocation11 + $0x178] sm:$0xff]
    %v3172 = vld [vmem:[#allocation11 + $0x180] sm:$0xff]
    %v3173 = vld [vmem:[#allocation11 + $0x188] sm:$0xff]
    %v3174 = vld [vmem:[#allocation11 + $0x190] sm:$0xff]
    %v3175 = vld [vmem:[#allocation11 + $0x198] sm:$0xff]
    %v3176 = vld [vmem:[#allocation11 + $0x1a0] sm:$0xff]
    %v3177 = vld [vmem:[#allocation11 + $0x1a8] sm:$0xff]
    %v3178 = vld [vmem:[#allocation11 + $0x1b0] sm:$0xff]
    %v3179 = vld [vmem:[#allocation11 + $0x1b8] sm:$0xff]
    %v3180 = vld [vmem:[#allocation11 + $0x1c0] sm:$0xff]
    %v3181 = vld [vmem:[#allocation11 + $0x1c8] sm:$0xff]
    %v3182 = vld [vmem:[#allocation11 + $0x1d0] sm:$0xff]
    %v3183 = vld [vmem:[#allocation11 + $0x1d8] sm:$0xff]
    %v3184 = vld [vmem:[#allocation11 + $0x1e0] sm:$0xff]
    %v3185 = vld [vmem:[#allocation11 + $0x1e8] sm:$0xff]
    %v3186 = vld [vmem:[#allocation11 + $0x1f0] sm:$0xff]
    %v3187 = vld [vmem:[#allocation11 + $0x1f8] sm:$0xff]
    %v3188 = vld [vmem:[#allocation11 + $0x200] sm:$0xff]
    %v3189 = vld [vmem:[#allocation11 + $0x208] sm:$0xff]
    %v3190 = vld [vmem:[#allocation11 + $0x210] sm:$0xff]
    %v3191 = vld [vmem:[#allocation11 + $0x218] sm:$0xff]
    %v3192 = vld [vmem:[#allocation11 + $0x220] sm:$0xff]
    %v3193 = vld [vmem:[#allocation11 + $0x228] sm:$0xff]
    %v3194 = vld [vmem:[#allocation11 + $0x230] sm:$0xff]
    %v3195 = vld [vmem:[#allocation11 + $0x238] sm:$0xff]
    %v3196 = vld [vmem:[#allocation11 + $0x240] sm:$0xff]
    %v3197 = vld [vmem:[#allocation11 + $0x248] sm:$0xff]
    %v3198 = vld [vmem:[#allocation11 + $0x250] sm:$0xff]
    %v3199 = vld [vmem:[#allocation11 + $0x258] sm:$0xff]
    %v3200 = vld [vmem:[#allocation11 + $0x260] sm:$0xff]
    %v3201 = vld [vmem:[#allocation11 + $0x268] sm:$0xff]
    %v3202 = vld [vmem:[#allocation11 + $0x270] sm:$0xff]
    %v3203 = vld [vmem:[#allocation11 + $0x278] sm:$0xff]
    %v3204 = vld [vmem:[#allocation11 + $0x280] sm:$0xff]
    %v3205 = vld [vmem:[#allocation11 + $0x288] sm:$0xff]
    %v3206 = vld [vmem:[#allocation11 + $0x290] sm:$0xff]
    %v3207 = vld [vmem:[#allocation11 + $0x298] sm:$0xff]
    %v3208 = vld [vmem:[#allocation11 + $0x2a0] sm:$0xff]
    %v3209 = vld [vmem:[#allocation11 + $0x2a8] sm:$0xff]
    %v3210 = vld [vmem:[#allocation11 + $0x2b0] sm:$0xff]
    %v3211 = vld [vmem:[#allocation11 + $0x2b8] sm:$0xff]
    %v3212 = vld [vmem:[#allocation11 + $0x2c0] sm:$0xff]
    %v3213 = vld [vmem:[#allocation11 + $0x2c8] sm:$0xff]
    %v3214 = vld [vmem:[#allocation11 + $0x2d0] sm:$0xff]
    %v3215 = vld [vmem:[#allocation11 + $0x2d8] sm:$0xff]
    %v3216 = vld [vmem:[#allocation11 + $0x2e0] sm:$0xff]
    %v3217 = vld [vmem:[#allocation11 + $0x2e8] sm:$0xff]
    %v3218 = vld [vmem:[#allocation11 + $0x2f0] sm:$0xff]
    %v3219 = vld [vmem:[#allocation11 + $0x2f8] sm:$0xff]
    %v3220 = vld [vmem:[#allocation11 + $0x300] sm:$0xff]
    %v3221 = vld [vmem:[#allocation11 + $0x308] sm:$0xff]
    %v3222 = vld [vmem:[#allocation11 + $0x310] sm:$0xff]
    %v3223 = vld [vmem:[#allocation11 + $0x318] sm:$0xff]
    %v3224 = vld [vmem:[#allocation11 + $0x320] sm:$0xff]
    %v3225 = vld [vmem:[#allocation11 + $0x328] sm:$0xff]
    %v3226 = vld [vmem:[#allocation11 + $0x330] sm:$0xff]
    %v3227 = vld [vmem:[#allocation11 + $0x338] sm:$0xff]
    %v3228 = vld [vmem:[#allocation11 + $0x340] sm:$0xff]
    %v3229 = vld [vmem:[#allocation11 + $0x348] sm:$0xff]
    %v3230 = vld [vmem:[#allocation11 + $0x350] sm:$0xff]
    %v3231 = vld [vmem:[#allocation11 + $0x358] sm:$0xff]
    %v3232 = vld [vmem:[#allocation11 + $0x360] sm:$0xff]
    %v3233 = vld [vmem:[#allocation11 + $0x368] sm:$0xff]
    %v3234 = vld [vmem:[#allocation11 + $0x370] sm:$0xff]
    %v3235 = vld [vmem:[#allocation11 + $0x378] sm:$0xff]
    %v3236 = vld [vmem:[#allocation11 + $0x380] sm:$0xff]
    %v3237 = vld [vmem:[#allocation11 + $0x388] sm:$0xff]
    %v3238 = vld [vmem:[#allocation11 + $0x390] sm:$0xff]
    %v3239 = vld [vmem:[#allocation11 + $0x398] sm:$0xff]
    %v3240 = vld [vmem:[#allocation11 + $0x3a0] sm:$0xff]
    %v3241 = vld [vmem:[#allocation11 + $0x3a8] sm:$0xff]
    %v3242 = vld [vmem:[#allocation11 + $0x3b0] sm:$0xff]
    %v3243 = vld [vmem:[#allocation11 + $0x3b8] sm:$0xff]
    %v3244 = vld [vmem:[#allocation11 + $0x3c0] sm:$0xff]
    %v3245 = vld [vmem:[#allocation11 + $0x3c8] sm:$0xff]
    %v3246 = vld [vmem:[#allocation11 + $0x3d0] sm:$0xff]
    %v3247 = vld [vmem:[#allocation11 + $0x3d8] sm:$0xff]
    %v3248 = vld [vmem:[#allocation11 + $0x3e0] sm:$0xff]
    %v3249 = vld [vmem:[#allocation11 + $0x3e8] sm:$0xff]
    %v3250 = vld [vmem:[#allocation11 + $0x3f0] sm:$0xff]
    %v3251 = vld [vmem:[#allocation11 + $0x3f8] sm:$0xff]
    %v3252 = vld [vmem:[#allocation13] sm:$0xf]
    %v3254 = vperm.slane %v3252, 0
    %v3255 = vperm.slane %v3252, 1
    %v3256 = vperm.slane %v3252, 2
    %v3257 = vperm.slane %v3252, 3
    %v3390 = vunpack.c.l.b16 %v3124
    %v3391 = vunpack.c.h.b16 %v3124
    %v3392 = vunpack.c.l.b16 %v3125
    %v3393 = vunpack.c.h.b16 %v3125
    %v3394 = vunpack.c.l.b16 %v3126
    %v3395 = vunpack.c.h.b16 %v3126
    %v3396 = vunpack.c.l.b16 %v3127
    %v3397 = vunpack.c.h.b16 %v3127
    %v3398 = vunpack.c.l.b16 %v3128
    %v3399 = vunpack.c.h.b16 %v3128
    %v3400 = vunpack.c.l.b16 %v3129
    %v3401 = vunpack.c.h.b16 %v3129
    %v3402 = vunpack.c.l.b16 %v3130
    %v3403 = vunpack.c.h.b16 %v3130
    %v3404 = vunpack.c.l.b16 %v3131
    %v3405 = vunpack.c.h.b16 %v3131
    %v3406 = vunpack.c.l.b16 %v3132
    %v3407 = vunpack.c.h.b16 %v3132
    %v3408 = vunpack.c.l.b16 %v3133
    %v3409 = vunpack.c.h.b16 %v3133
    %v3410 = vunpack.c.l.b16 %v3134
    %v3411 = vunpack.c.h.b16 %v3134
    %v3412 = vunpack.c.l.b16 %v3135
    %v3413 = vunpack.c.h.b16 %v3135
    %v3414 = vunpack.c.l.b16 %v3136
    %v3415 = vunpack.c.h.b16 %v3136
    %v3416 = vunpack.c.l.b16 %v3137
    %v3417 = vunpack.c.h.b16 %v3137
    %v3418 = vunpack.c.l.b16 %v3138
    %v3419 = vunpack.c.h.b16 %v3138
    %v3420 = vunpack.c.l.b16 %v3139
    %v3421 = vunpack.c.h.b16 %v3139
    %v3422 = vunpack.c.l.b16 %v3140
    %v3423 = vunpack.c.h.b16 %v3140
    %v3424 = vunpack.c.l.b16 %v3141
    %v3425 = vunpack.c.h.b16 %v3141
    %v3426 = vunpack.c.l.b16 %v3142
    %v3427 = vunpack.c.h.b16 %v3142
    %v3428 = vunpack.c.l.b16 %v3143
    %v3429 = vunpack.c.h.b16 %v3143
    %v3430 = vunpack.c.l.b16 %v3144
    %v3431 = vunpack.c.h.b16 %v3144
    %v3432 = vunpack.c.l.b16 %v3145
    %v3433 = vunpack.c.h.b16 %v3145
    %v3434 = vunpack.c.l.b16 %v3146
    %v3435 = vunpack.c.h.b16 %v3146
    %v3436 = vunpack.c.l.b16 %v3147
    %v3437 = vunpack.c.h.b16 %v3147
    %v3438 = vunpack.c.l.b16 %v3148
    %v3439 = vunpack.c.h.b16 %v3148
    %v3440 = vunpack.c.l.b16 %v3149
    %v3441 = vunpack.c.h.b16 %v3149
    %v3442 = vunpack.c.l.b16 %v3150
    %v3443 = vunpack.c.h.b16 %v3150
    %v3444 = vunpack.c.l.b16 %v3151
    %v3445 = vunpack.c.h.b16 %v3151
    %v3446 = vunpack.c.l.b16 %v3152
    %v3447 = vunpack.c.h.b16 %v3152
    %v3448 = vunpack.c.l.b16 %v3153
    %v3449 = vunpack.c.h.b16 %v3153
    %v3450 = vunpack.c.l.b16 %v3154
    %v3451 = vunpack.c.h.b16 %v3154
    %v3452 = vunpack.c.l.b16 %v3155
    %v3453 = vunpack.c.h.b16 %v3155
    %v3454 = vunpack.c.l.b16 %v3156
    %v3455 = vunpack.c.h.b16 %v3156
    %v3456 = vunpack.c.l.b16 %v3157
    %v3457 = vunpack.c.h.b16 %v3157
    %v3458 = vunpack.c.l.b16 %v3158
    %v3459 = vunpack.c.h.b16 %v3158
    %v3460 = vunpack.c.l.b16 %v3159
    %v3461 = vunpack.c.h.b16 %v3159
    %v3462 = vunpack.c.l.b16 %v3160
    %v3463 = vunpack.c.h.b16 %v3160
    %v3464 = vunpack.c.l.b16 %v3161
    %v3465 = vunpack.c.h.b16 %v3161
    %v3466 = vunpack.c.l.b16 %v3162
    %v3467 = vunpack.c.h.b16 %v3162
    %v3468 = vunpack.c.l.b16 %v3163
    %v3469 = vunpack.c.h.b16 %v3163
    %v3470 = vunpack.c.l.b16 %v3164
    %v3471 = vunpack.c.h.b16 %v3164
    %v3472 = vunpack.c.l.b16 %v3165
    %v3473 = vunpack.c.h.b16 %v3165
    %v3474 = vunpack.c.l.b16 %v3166
    %v3475 = vunpack.c.h.b16 %v3166
    %v3476 = vunpack.c.l.b16 %v3167
    %v3477 = vunpack.c.h.b16 %v3167
    %v3478 = vunpack.c.l.b16 %v3168
    %v3479 = vunpack.c.h.b16 %v3168
    %v3480 = vunpack.c.l.b16 %v3169
    %v3481 = vunpack.c.h.b16 %v3169
    %v3482 = vunpack.c.l.b16 %v3170
    %v3483 = vunpack.c.h.b16 %v3170
    %v3484 = vunpack.c.l.b16 %v3171
    %v3485 = vunpack.c.h.b16 %v3171
    %v3486 = vunpack.c.l.b16 %v3172
    %v3487 = vunpack.c.h.b16 %v3172
    %v3488 = vunpack.c.l.b16 %v3173
    %v3489 = vunpack.c.h.b16 %v3173
    %v3490 = vunpack.c.l.b16 %v3174
    %v3491 = vunpack.c.h.b16 %v3174
    %v3492 = vunpack.c.l.b16 %v3175
    %v3493 = vunpack.c.h.b16 %v3175
    %v3494 = vunpack.c.l.b16 %v3176
    %v3495 = vunpack.c.h.b16 %v3176
    %v3496 = vunpack.c.l.b16 %v3177
    %v3497 = vunpack.c.h.b16 %v3177
    %v3498 = vunpack.c.l.b16 %v3178
    %v3499 = vunpack.c.h.b16 %v3178
    %v3500 = vunpack.c.l.b16 %v3179
    %v3501 = vunpack.c.h.b16 %v3179
    %v3502 = vunpack.c.l.b16 %v3180
    %v3503 = vunpack.c.h.b16 %v3180
    %v3504 = vunpack.c.l.b16 %v3181
    %v3505 = vunpack.c.h.b16 %v3181
    %v3506 = vunpack.c.l.b16 %v3182
    %v3507 = vunpack.c.h.b16 %v3182
    %v3508 = vunpack.c.l.b16 %v3183
    %v3509 = vunpack.c.h.b16 %v3183
    %v3510 = vunpack.c.l.b16 %v3184
    %v3511 = vunpack.c.h.b16 %v3184
    %v3512 = vunpack.c.l.b16 %v3185
    %v3513 = vunpack.c.h.b16 %v3185
    %v3514 = vunpack.c.l.b16 %v3186
    %v3515 = vunpack.c.h.b16 %v3186
    %v3516 = vunpack.c.l.b16 %v3187
    %v3517 = vunpack.c.h.b16 %v3187
    %v3518 = vunpack.c.l.b16 %v3188
    %v3519 = vunpack.c.h.b16 %v3188
    %v3520 = vunpack.c.l.b16 %v3189
    %v3521 = vunpack.c.h.b16 %v3189
    %v3522 = vunpack.c.l.b16 %v3190
    %v3523 = vunpack.c.h.b16 %v3190
    %v3524 = vunpack.c.l.b16 %v3191
    %v3525 = vunpack.c.h.b16 %v3191
    %v3526 = vunpack.c.l.b16 %v3192
    %v3527 = vunpack.c.h.b16 %v3192
    %v3528 = vunpack.c.l.b16 %v3193
    %v3529 = vunpack.c.h.b16 %v3193
    %v3530 = vunpack.c.l.b16 %v3194
    %v3531 = vunpack.c.h.b16 %v3194
    %v3532 = vunpack.c.l.b16 %v3195
    %v3533 = vunpack.c.h.b16 %v3195
    %v3534 = vunpack.c.l.b16 %v3196
    %v3535 = vunpack.c.h.b16 %v3196
    %v3536 = vunpack.c.l.b16 %v3197
    %v3537 = vunpack.c.h.b16 %v3197
    %v3538 = vunpack.c.l.b16 %v3198
    %v3539 = vunpack.c.h.b16 %v3198
    %v3540 = vunpack.c.l.b16 %v3199
    %v3541 = vunpack.c.h.b16 %v3199
    %v3542 = vunpack.c.l.b16 %v3200
    %v3543 = vunpack.c.h.b16 %v3200
    %v3544 = vunpack.c.l.b16 %v3201
    %v3545 = vunpack.c.h.b16 %v3201
    %v3546 = vunpack.c.l.b16 %v3202
    %v3547 = vunpack.c.h.b16 %v3202
    %v3548 = vunpack.c.l.b16 %v3203
    %v3549 = vunpack.c.h.b16 %v3203
    %v3550 = vunpack.c.l.b16 %v3204
    %v3551 = vunpack.c.h.b16 %v3204
    %v3552 = vunpack.c.l.b16 %v3205
    %v3553 = vunpack.c.h.b16 %v3205
    %v3554 = vunpack.c.l.b16 %v3206
    %v3555 = vunpack.c.h.b16 %v3206
    %v3556 = vunpack.c.l.b16 %v3207
    %v3557 = vunpack.c.h.b16 %v3207
    %v3558 = vunpack.c.l.b16 %v3208
    %v3559 = vunpack.c.h.b16 %v3208
    %v3560 = vunpack.c.l.b16 %v3209
    %v3561 = vunpack.c.h.b16 %v3209
    %v3562 = vunpack.c.l.b16 %v3210
    %v3563 = vunpack.c.h.b16 %v3210
    %v3564 = vunpack.c.l.b16 %v3211
    %v3565 = vunpack.c.h.b16 %v3211
    %v3566 = vunpack.c.l.b16 %v3212
    %v3567 = vunpack.c.h.b16 %v3212
    %v3568 = vunpack.c.l.b16 %v3213
    %v3569 = vunpack.c.h.b16 %v3213
    %v3570 = vunpack.c.l.b16 %v3214
    %v3571 = vunpack.c.h.b16 %v3214
    %v3572 = vunpack.c.l.b16 %v3215
    %v3573 = vunpack.c.h.b16 %v3215
    %v3574 = vunpack.c.l.b16 %v3216
    %v3575 = vunpack.c.h.b16 %v3216
    %v3576 = vunpack.c.l.b16 %v3217
    %v3577 = vunpack.c.h.b16 %v3217
    %v3578 = vunpack.c.l.b16 %v3218
    %v3579 = vunpack.c.h.b16 %v3218
    %v3580 = vunpack.c.l.b16 %v3219
    %v3581 = vunpack.c.h.b16 %v3219
    %v3582 = vunpack.c.l.b16 %v3220
    %v3583 = vunpack.c.h.b16 %v3220
    %v3584 = vunpack.c.l.b16 %v3221
    %v3585 = vunpack.c.h.b16 %v3221
    %v3586 = vunpack.c.l.b16 %v3222
    %v3587 = vunpack.c.h.b16 %v3222
    %v3588 = vunpack.c.l.b16 %v3223
    %v3589 = vunpack.c.h.b16 %v3223
    %v3590 = vunpack.c.l.b16 %v3224
    %v3591 = vunpack.c.h.b16 %v3224
    %v3592 = vunpack.c.l.b16 %v3225
    %v3593 = vunpack.c.h.b16 %v3225
    %v3594 = vunpack.c.l.b16 %v3226
    %v3595 = vunpack.c.h.b16 %v3226
    %v3596 = vunpack.c.l.b16 %v3227
    %v3597 = vunpack.c.h.b16 %v3227
    %v3598 = vunpack.c.l.b16 %v3228
    %v3599 = vunpack.c.h.b16 %v3228
    %v3600 = vunpack.c.l.b16 %v3229
    %v3601 = vunpack.c.h.b16 %v3229
    %v3602 = vunpack.c.l.b16 %v3230
    %v3603 = vunpack.c.h.b16 %v3230
    %v3604 = vunpack.c.l.b16 %v3231
    %v3605 = vunpack.c.h.b16 %v3231
    %v3606 = vunpack.c.l.b16 %v3232
    %v3607 = vunpack.c.h.b16 %v3232
    %v3608 = vunpack.c.l.b16 %v3233
    %v3609 = vunpack.c.h.b16 %v3233
    %v3610 = vunpack.c.l.b16 %v3234
    %v3611 = vunpack.c.h.b16 %v3234
    %v3612 = vunpack.c.l.b16 %v3235
    %v3613 = vunpack.c.h.b16 %v3235
    %v3614 = vunpack.c.l.b16 %v3236
    %v3615 = vunpack.c.h.b16 %v3236
    %v3616 = vunpack.c.l.b16 %v3237
    %v3617 = vunpack.c.h.b16 %v3237
    %v3618 = vunpack.c.l.b16 %v3238
    %v3619 = vunpack.c.h.b16 %v3238
    %v3620 = vunpack.c.l.b16 %v3239
    %v3621 = vunpack.c.h.b16 %v3239
    %v3622 = vunpack.c.l.b16 %v3240
    %v3623 = vunpack.c.h.b16 %v3240
    %v3624 = vunpack.c.l.b16 %v3241
    %v3625 = vunpack.c.h.b16 %v3241
    %v3626 = vunpack.c.l.b16 %v3242
    %v3627 = vunpack.c.h.b16 %v3242
    %v3628 = vunpack.c.l.b16 %v3243
    %v3629 = vunpack.c.h.b16 %v3243
    %v3630 = vunpack.c.l.b16 %v3244
    %v3631 = vunpack.c.h.b16 %v3244
    %v3632 = vunpack.c.l.b16 %v3245
    %v3633 = vunpack.c.h.b16 %v3245
    %v3634 = vunpack.c.l.b16 %v3246
    %v3635 = vunpack.c.h.b16 %v3246
    %v3636 = vunpack.c.l.b16 %v3247
    %v3637 = vunpack.c.h.b16 %v3247
    %v3638 = vunpack.c.l.b16 %v3248
    %v3639 = vunpack.c.h.b16 %v3248
    %v3640 = vunpack.c.l.b16 %v3249
    %v3641 = vunpack.c.h.b16 %v3249
    %v3642 = vunpack.c.l.b16 %v3250
    %v3643 = vunpack.c.h.b16 %v3250
    %v3644 = vunpack.c.l.b16 %v3251
    %v3645 = vunpack.c.h.b16 %v3251
    %v3646 = vpack.c.b16 %v3394, %v3390
    %v3647 = vpack.c.b16 %v3395, %v3391
    %v3648 = vpack.c.b16 %v3396, %v3392
    %v3649 = vpack.c.b16 %v3397, %v3393
    %v3650 = vpack.c.b16 %v3402, %v3398
    %v3651 = vpack.c.b16 %v3403, %v3399
    %v3652 = vpack.c.b16 %v3404, %v3400
    %v3653 = vpack.c.b16 %v3405, %v3401
    %v3654 = vpack.c.b16 %v3410, %v3406
    %v3655 = vpack.c.b16 %v3411, %v3407
    %v3656 = vpack.c.b16 %v3412, %v3408
    %v3657 = vpack.c.b16 %v3413, %v3409
    %v3658 = vpack.c.b16 %v3418, %v3414
    %v3659 = vpack.c.b16 %v3419, %v3415
    %v3660 = vpack.c.b16 %v3420, %v3416
    %v3661 = vpack.c.b16 %v3421, %v3417
    %v3662 = vpack.c.b16 %v3426, %v3422
    %v3663 = vpack.c.b16 %v3427, %v3423
    %v3664 = vpack.c.b16 %v3428, %v3424
    %v3665 = vpack.c.b16 %v3429, %v3425
    %v3666 = vpack.c.b16 %v3434, %v3430
    %v3667 = vpack.c.b16 %v3435, %v3431
    %v3668 = vpack.c.b16 %v3436, %v3432
    %v3669 = vpack.c.b16 %v3437, %v3433
    %v3670 = vpack.c.b16 %v3442, %v3438
    %v3671 = vpack.c.b16 %v3443, %v3439
    %v3672 = vpack.c.b16 %v3444, %v3440
    %v3673 = vpack.c.b16 %v3445, %v3441
    %v3674 = vpack.c.b16 %v3450, %v3446
    %v3675 = vpack.c.b16 %v3451, %v3447
    %v3676 = vpack.c.b16 %v3452, %v3448
    %v3677 = vpack.c.b16 %v3453, %v3449
    %v3678 = vpack.c.b16 %v3458, %v3454
    %v3679 = vpack.c.b16 %v3459, %v3455
    %v3680 = vpack.c.b16 %v3460, %v3456
    %v3681 = vpack.c.b16 %v3461, %v3457
    %v3682 = vpack.c.b16 %v3466, %v3462
    %v3683 = vpack.c.b16 %v3467, %v3463
    %v3684 = vpack.c.b16 %v3468, %v3464
    %v3685 = vpack.c.b16 %v3469, %v3465
    %v3686 = vpack.c.b16 %v3474, %v3470
    %v3687 = vpack.c.b16 %v3475, %v3471
    %v3688 = vpack.c.b16 %v3476, %v3472
    %v3689 = vpack.c.b16 %v3477, %v3473
    %v3690 = vpack.c.b16 %v3482, %v3478
    %v3691 = vpack.c.b16 %v3483, %v3479
    %v3692 = vpack.c.b16 %v3484, %v3480
    %v3693 = vpack.c.b16 %v3485, %v3481
    %v3694 = vpack.c.b16 %v3490, %v3486
    %v3695 = vpack.c.b16 %v3491, %v3487
    %v3696 = vpack.c.b16 %v3492, %v3488
    %v3697 = vpack.c.b16 %v3493, %v3489
    %v3698 = vpack.c.b16 %v3498, %v3494
    %v3699 = vpack.c.b16 %v3499, %v3495
    %v3700 = vpack.c.b16 %v3500, %v3496
    %v3701 = vpack.c.b16 %v3501, %v3497
    %v3702 = vpack.c.b16 %v3506, %v3502
    %v3703 = vpack.c.b16 %v3507, %v3503
    %v3704 = vpack.c.b16 %v3508, %v3504
    %v3705 = vpack.c.b16 %v3509, %v3505
    %v3706 = vpack.c.b16 %v3514, %v3510
    %v3707 = vpack.c.b16 %v3515, %v3511
    %v3708 = vpack.c.b16 %v3516, %v3512
    %v3709 = vpack.c.b16 %v3517, %v3513
    %v3710 = vpack.c.b16 %v3522, %v3518
    %v3711 = vpack.c.b16 %v3523, %v3519
    %v3712 = vpack.c.b16 %v3524, %v3520
    %v3713 = vpack.c.b16 %v3525, %v3521
    %v3714 = vpack.c.b16 %v3530, %v3526
    %v3715 = vpack.c.b16 %v3531, %v3527
    %v3716 = vpack.c.b16 %v3532, %v3528
    %v3717 = vpack.c.b16 %v3533, %v3529
    %v3718 = vpack.c.b16 %v3538, %v3534
    %v3719 = vpack.c.b16 %v3539, %v3535
    %v3720 = vpack.c.b16 %v3540, %v3536
    %v3721 = vpack.c.b16 %v3541, %v3537
    %v3722 = vpack.c.b16 %v3546, %v3542
    %v3723 = vpack.c.b16 %v3547, %v3543
    %v3724 = vpack.c.b16 %v3548, %v3544
    %v3725 = vpack.c.b16 %v3549, %v3545
    %v3726 = vpack.c.b16 %v3554, %v3550
    %v3727 = vpack.c.b16 %v3555, %v3551
    %v3728 = vpack.c.b16 %v3556, %v3552
    %v3729 = vpack.c.b16 %v3557, %v3553
    %v3730 = vpack.c.b16 %v3562, %v3558
    %v3731 = vpack.c.b16 %v3563, %v3559
    %v3732 = vpack.c.b16 %v3564, %v3560
    %v3733 = vpack.c.b16 %v3565, %v3561
    %v3734 = vpack.c.b16 %v3570, %v3566
    %v3735 = vpack.c.b16 %v3571, %v3567
    %v3736 = vpack.c.b16 %v3572, %v3568
    %v3737 = vpack.c.b16 %v3573, %v3569
    %v3738 = vpack.c.b16 %v3578, %v3574
    %v3739 = vpack.c.b16 %v3579, %v3575
    %v3740 = vpack.c.b16 %v3580, %v3576
    %v3741 = vpack.c.b16 %v3581, %v3577
    %v3742 = vpack.c.b16 %v3586, %v3582
    %v3743 = vpack.c.b16 %v3587, %v3583
    %v3744 = vpack.c.b16 %v3588, %v3584
    %v3745 = vpack.c.b16 %v3589, %v3585
    %v3746 = vpack.c.b16 %v3594, %v3590
    %v3747 = vpack.c.b16 %v3595, %v3591
    %v3748 = vpack.c.b16 %v3596, %v3592
    %v3749 = vpack.c.b16 %v3597, %v3593
    %v3750 = vpack.c.b16 %v3602, %v3598
    %v3751 = vpack.c.b16 %v3603, %v3599
    %v3752 = vpack.c.b16 %v3604, %v3600
    %v3753 = vpack.c.b16 %v3605, %v3601
    %v3754 = vpack.c.b16 %v3610, %v3606
    %v3755 = vpack.c.b16 %v3611, %v3607
    %v3756 = vpack.c.b16 %v3612, %v3608
    %v3757 = vpack.c.b16 %v3613, %v3609
    %v3758 = vpack.c.b16 %v3618, %v3614
    %v3759 = vpack.c.b16 %v3619, %v3615
    %v3760 = vpack.c.b16 %v3620, %v3616
    %v3761 = vpack.c.b16 %v3621, %v3617
    %v3762 = vpack.c.b16 %v3626, %v3622
    %v3763 = vpack.c.b16 %v3627, %v3623
    %v3764 = vpack.c.b16 %v3628, %v3624
    %v3765 = vpack.c.b16 %v3629, %v3625
    %v3766 = vpack.c.b16 %v3634, %v3630
    %v3767 = vpack.c.b16 %v3635, %v3631
    %v3768 = vpack.c.b16 %v3636, %v3632
    %v3769 = vpack.c.b16 %v3637, %v3633
    %v3770 = vpack.c.b16 %v3642, %v3638
    %v3771 = vpack.c.b16 %v3643, %v3639
    %v3772 = vpack.c.b16 %v3644, %v3640
    %v3773 = vpack.c.b16 %v3645, %v3641
    %3902 = vmatpush.bf16.msra.mxu0 %v3674
    %3903 = vmatpush.bf16.msra.mxu0 %v3670
    %3904 = vmatpush.bf16.msra.mxu0 %v3666
    %3905 = vmatpush.bf16.msra.mxu0 %v3662
    %3906 = vmatpush.bf16.msra.mxu0 %v3658
    %3907 = vmatpush.bf16.msra.mxu0 %v3654
    %3908 = vmatpush.bf16.msra.mxu0 %v3650
    %3909 = vmatpush.bf16.msra.mxu0 %v3646
    %3910 = vmatmul.bf16.gmra.mxu0 %v3120
    %v3911 = vpop.f32.mrf.mxu0
    %v3912 = vadd.f32 %v3254, %v3911
    %v3913 = vpop.f32.mrf.mxu0
    %3914 = vdwg.mxu0
    %3915 = vmatpush.bf16.msra.mxu0 %v3706
    %3916 = vmatpush.bf16.msra.mxu0 %v3702
    %3917 = vmatpush.bf16.msra.mxu0 %v3698
    %3918 = vmatpush.bf16.msra.mxu0 %v3694
    %3919 = vmatpush.bf16.msra.mxu0 %v3690
    %3920 = vmatpush.bf16.msra.mxu0 %v3686
    %3921 = vmatpush.bf16.msra.mxu0 %v3682
    %3922 = vmatpush.bf16.msra.mxu0 %v3678
    %3923 = vmatmul.bf16.gmra.mxu0 %v3121
    %v3924 = vpop.f32.mrf.mxu0
    %v3925 = vadd.f32 %v3912, %v3924
    %v3926 = vpop.f32.mrf.mxu0
    %3927 = vdwg.mxu0
    %3928 = vmatpush.bf16.msra.mxu0 %v3738
    %3929 = vmatpush.bf16.msra.mxu0 %v3734
    %3930 = vmatpush.bf16.msra.mxu0 %v3730
    %3931 = vmatpush.bf16.msra.mxu0 %v3726
    %3932 = vmatpush.bf16.msra.mxu0 %v3722
    %3933 = vmatpush.bf16.msra.mxu0 %v3718
    %3934 = vmatpush.bf16.msra.mxu0 %v3714
    %3935 = vmatpush.bf16.msra.mxu0 %v3710
    %3936 = vmatmul.bf16.gmra.mxu0 %v3122
    %v3937 = vpop.f32.mrf.mxu0
    %v3938 = vadd.f32 %v3925, %v3937
    %v3939 = vpop.f32.mrf.mxu0
    %3940 = vdwg.mxu0
    %3941 = vmatpush.bf16.msra.mxu0 %v3770
    %3942 = vmatpush.bf16.msra.mxu0 %v3766
    %3943 = vmatpush.bf16.msra.mxu0 %v3762
    %3944 = vmatpush.bf16.msra.mxu0 %v3758
    %3945 = vmatpush.bf16.msra.mxu0 %v3754
    %3946 = vmatpush.bf16.msra.mxu0 %v3750
    %3947 = vmatpush.bf16.msra.mxu0 %v3746
    %3948 = vmatpush.bf16.msra.mxu0 %v3742
    %3949 = vmatmul.bf16.gmra.mxu0 %v3123
    %v3950 = vpop.f32.mrf.mxu0
    %v3951 = vadd.f32 %v3938, %v3950
    %v3952 = vpop.f32.mrf.mxu0
    %3953 = vdwg.mxu0
    %3954 = vmatpush.bf16.msra.mxu0 %v3675
    %3955 = vmatpush.bf16.msra.mxu0 %v3671
    %3956 = vmatpush.bf16.msra.mxu0 %v3667
    %3957 = vmatpush.bf16.msra.mxu0 %v3663
    %3958 = vmatpush.bf16.msra.mxu0 %v3659
    %3959 = vmatpush.bf16.msra.mxu0 %v3655
    %3960 = vmatpush.bf16.msra.mxu0 %v3651
    %3961 = vmatpush.bf16.msra.mxu0 %v3647
    %3962 = vmatmul.bf16.gmra.mxu0 %v3120
    %v3963 = vpop.f32.mrf.mxu0
    %v3964 = vadd.f32 %v3255, %v3963
    %v3965 = vpop.f32.mrf.mxu0
    %3966 = vdwg.mxu0
    %3967 = vmatpush.bf16.msra.mxu0 %v3707
    %3968 = vmatpush.bf16.msra.mxu0 %v3703
    %3969 = vmatpush.bf16.msra.mxu0 %v3699
    %3970 = vmatpush.bf16.msra.mxu0 %v3695
    %3971 = vmatpush.bf16.msra.mxu0 %v3691
    %3972 = vmatpush.bf16.msra.mxu0 %v3687
    %3973 = vmatpush.bf16.msra.mxu0 %v3683
    %3974 = vmatpush.bf16.msra.mxu0 %v3679
    %3975 = vmatmul.bf16.gmra.mxu0 %v3121
    %v3976 = vpop.f32.mrf.mxu0
    %v3977 = vadd.f32 %v3964, %v3976
    %v3978 = vpop.f32.mrf.mxu0
    %3979 = vdwg.mxu0
    %3980 = vmatpush.bf16.msra.mxu0 %v3739
    %3981 = vmatpush.bf16.msra.mxu0 %v3735
    %3982 = vmatpush.bf16.msra.mxu0 %v3731
    %3983 = vmatpush.bf16.msra.mxu0 %v3727
    %3984 = vmatpush.bf16.msra.mxu0 %v3723
    %3985 = vmatpush.bf16.msra.mxu0 %v3719
    %3986 = vmatpush.bf16.msra.mxu0 %v3715
    %3987 = vmatpush.bf16.msra.mxu0 %v3711
    %3988 = vmatmul.bf16.gmra.mxu0 %v3122
    %v3989 = vpop.f32.mrf.mxu0
    %v3990 = vadd.f32 %v3977, %v3989
    %v3991 = vpop.f32.mrf.mxu0
    %3992 = vdwg.mxu0
    %3993 = vmatpush.bf16.msra.mxu0 %v3771
    %3994 = vmatpush.bf16.msra.mxu0 %v3767
    %3995 = vmatpush.bf16.msra.mxu0 %v3763
    %3996 = vmatpush.bf16.msra.mxu0 %v3759
    %3997 = vmatpush.bf16.msra.mxu0 %v3755
    %3998 = vmatpush.bf16.msra.mxu0 %v3751
    %3999 = vmatpush.bf16.msra.mxu0 %v3747
    %4000 = vmatpush.bf16.msra.mxu0 %v3743
    %4001 = vmatmul.bf16.gmra.mxu0 %v3123
    %v4002 = vpop.f32.mrf.mxu0
    %v4003 = vadd.f32 %v3990, %v4002
    %v4004 = vpop.f32.mrf.mxu0
    %4005 = vdwg.mxu0
    %4006 = vmatpush.bf16.msra.mxu0 %v3676
    %4007 = vmatpush.bf16.msra.mxu0 %v3672
    %4008 = vmatpush.bf16.msra.mxu0 %v3668
    %4009 = vmatpush.bf16.msra.mxu0 %v3664
    %4010 = vmatpush.bf16.msra.mxu0 %v3660
    %4011 = vmatpush.bf16.msra.mxu0 %v3656
    %4012 = vmatpush.bf16.msra.mxu0 %v3652
    %4013 = vmatpush.bf16.msra.mxu0 %v3648
    %4014 = vmatmul.bf16.gmra.mxu0 %v3120
    %v4015 = vpop.f32.mrf.mxu0
    %v4016 = vadd.f32 %v3256, %v4015
    %v4017 = vpop.f32.mrf.mxu0
    %4018 = vdwg.mxu0
    %4019 = vmatpush.bf16.msra.mxu0 %v3708
    %4020 = vmatpush.bf16.msra.mxu0 %v3704
    %4021 = vmatpush.bf16.msra.mxu0 %v3700
    %4022 = vmatpush.bf16.msra.mxu0 %v3696
    %4023 = vmatpush.bf16.msra.mxu0 %v3692
    %4024 = vmatpush.bf16.msra.mxu0 %v3688
    %4025 = vmatpush.bf16.msra.mxu0 %v3684
    %4026 = vmatpush.bf16.msra.mxu0 %v3680
    %4027 = vmatmul.bf16.gmra.mxu0 %v3121
    %v4028 = vpop.f32.mrf.mxu0
    %v4029 = vadd.f32 %v4016, %v4028
    %v4030 = vpop.f32.mrf.mxu0
    %4031 = vdwg.mxu0
    %4032 = vmatpush.bf16.msra.mxu0 %v3740
    %4033 = vmatpush.bf16.msra.mxu0 %v3736
    %4034 = vmatpush.bf16.msra.mxu0 %v3732
    %4035 = vmatpush.bf16.msra.mxu0 %v3728
    %4036 = vmatpush.bf16.msra.mxu0 %v3724
    %4037 = vmatpush.bf16.msra.mxu0 %v3720
    %4038 = vmatpush.bf16.msra.mxu0 %v3716
    %4039 = vmatpush.bf16.msra.mxu0 %v3712
    %4040 = vmatmul.bf16.gmra.mxu0 %v3122
    %v4041 = vpop.f32.mrf.mxu0
    %v4042 = vadd.f32 %v4029, %v4041
    %v4043 = vpop.f32.mrf.mxu0
    %4044 = vdwg.mxu0
    %4045 = vmatpush.bf16.msra.mxu0 %v3772
    %4046 = vmatpush.bf16.msra.mxu0 %v3768
    %4047 = vmatpush.bf16.msra.mxu0 %v3764
    %4048 = vmatpush.bf16.msra.mxu0 %v3760
    %4049 = vmatpush.bf16.msra.mxu0 %v3756
    %4050 = vmatpush.bf16.msra.mxu0 %v3752
    %4051 = vmatpush.bf16.msra.mxu0 %v3748
    %4052 = vmatpush.bf16.msra.mxu0 %v3744
    %4053 = vmatmul.bf16.gmra.mxu0 %v3123
    %v4054 = vpop.f32.mrf.mxu0
    %v4055 = vadd.f32 %v4042, %v4054
    %v4056 = vpop.f32.mrf.mxu0
    %4057 = vdwg.mxu0
    %4058 = vmatpush.bf16.msra.mxu0 %v3677
    %4059 = vmatpush.bf16.msra.mxu0 %v3673
    %4060 = vmatpush.bf16.msra.mxu0 %v3669
    %4061 = vmatpush.bf16.msra.mxu0 %v3665
    %4062 = vmatpush.bf16.msra.mxu0 %v3661
    %4063 = vmatpush.bf16.msra.mxu0 %v3657
    %4064 = vmatpush.bf16.msra.mxu0 %v3653
    %4065 = vmatpush.bf16.msra.mxu0 %v3649
    %4066 = vmatmul.bf16.gmra.mxu0 %v3120
    %v4067 = vpop.f32.mrf.mxu0
    %v4068 = vadd.f32 %v3257, %v4067
    %v4069 = vpop.f32.mrf.mxu0
    %4070 = vdwg.mxu0
    %4071 = vmatpush.bf16.msra.mxu0 %v3709
    %4072 = vmatpush.bf16.msra.mxu0 %v3705
    %4073 = vmatpush.bf16.msra.mxu0 %v3701
    %4074 = vmatpush.bf16.msra.mxu0 %v3697
    %4075 = vmatpush.bf16.msra.mxu0 %v3693
    %4076 = vmatpush.bf16.msra.mxu0 %v3689
    %4077 = vmatpush.bf16.msra.mxu0 %v3685
    %4078 = vmatpush.bf16.msra.mxu0 %v3681
    %4079 = vmatmul.bf16.gmra.mxu0 %v3121
    %v4080 = vpop.f32.mrf.mxu0
    %v4081 = vadd.f32 %v4068, %v4080
    %v4082 = vpop.f32.mrf.mxu0
    %4083 = vdwg.mxu0
    %4084 = vmatpush.bf16.msra.mxu0 %v3741
    %4085 = vmatpush.bf16.msra.mxu0 %v3737
    %4086 = vmatpush.bf16.msra.mxu0 %v3733
    %4087 = vmatpush.bf16.msra.mxu0 %v3729
    %4088 = vmatpush.bf16.msra.mxu0 %v3725
    %4089 = vmatpush.bf16.msra.mxu0 %v3721
    %4090 = vmatpush.bf16.msra.mxu0 %v3717
    %4091 = vmatpush.bf16.msra.mxu0 %v3713
    %4092 = vmatmul.bf16.gmra.mxu0 %v3122
    %v4093 = vpop.f32.mrf.mxu0
    %v4094 = vadd.f32 %v4081, %v4093
    %v4095 = vpop.f32.mrf.mxu0
    %4096 = vdwg.mxu0
    %4097 = vmatpush.bf16.msra.mxu0 %v3773
    %4098 = vmatpush.bf16.msra.mxu0 %v3769
    %4099 = vmatpush.bf16.msra.mxu0 %v3765
    %4100 = vmatpush.bf16.msra.mxu0 %v3761
    %4101 = vmatpush.bf16.msra.mxu0 %v3757
    %4102 = vmatpush.bf16.msra.mxu0 %v3753
    %4103 = vmatpush.bf16.msra.mxu0 %v3749
    %4104 = vmatpush.bf16.msra.mxu0 %v3745
    %4105 = vmatmul.bf16.gmra.mxu0 %v3123
    %v4106 = vpop.f32.mrf.mxu0
    %v4107 = vadd.f32 %v4094, %v4106
    %v4108 = vpop.f32.mrf.mxu0
    %4109 = vdwg.mxu0
    %v4110 = vmax.f32 %v3951, 0.0
    %v4111 = vmax.f32 %v4003, 0.0
    %v4112 = vmax.f32 %v4055, 0.0
    %v4113 = vmax.f32 %v4107, 0.0
    %v4114 = vld [vmem:[#allocation14] sm:$0xf]
    %v4116 = vperm.slane %v4114, 0
    %v4117 = vperm.slane %v4114, 1
    %v4118 = vperm.slane %v4114, 2
    %v4119 = vperm.slane %v4114, 3
    %v4124 = vmul.f32 %v4110, %v4116
    %v4125 = vmul.f32 %v4111, %v4117
    %v4126 = vmul.f32 %v4112, %v4118
    %v4127 = vmul.f32 %v4113, %v4119
    %v4128 = vadd.f32 %v4124, %v4125
    %v4129 = vadd.f32 %v4128, %v4126
    %v4130 = vadd.f32 %v4129, %v4127
    %4131 = vadd.xlane.f32.xlu0 %v4130
    %v4132 = vpop.xlane.xlu0 %4131
    %s4133 = sld [smem:[#allocation2]]
    %v4134 = vstv %s4133
    %v4135 = vadd.f32 %v4132, %v4134
    %vm4136 = vcmask 7168
    %4137 = vst.msk [vmem:[%s9] sm:$0xff] %vm4136, %v4135
    // Predicated region
    $region70: #{tpu_custom_call.1} parent=1 // pred_check
      _
    $region71: #{tpu_custom_call.1} parent=1 // pred_check_branch
      %4139 = sbr.rel (0) target = $region73
    $region72: #{tpu_custom_call.1} parent=1 // pred_region
      _
    $region73: #{tpu_custom_call.1} parent=1 // pred_fallthru
      _
    // Predicated region
    $region74: #{tpu_custom_call.1} parent=1 // pred_check
      _
    $region75: #{tpu_custom_call.1} parent=1 // pred_check_branch
      %4141 = sbr.rel (0) target = $region77
    $region76: #{tpu_custom_call.1} parent=1 // pred_region
      _
    $region77: #{tpu_custom_call.1} parent=1 // pred_fallthru
      _
    %4142 = vsyncpa [#allocation4], 1
    %4143 = vsyncpa [#allocation6], 1
    %4144 = vsyncpa [#allocation9], 1
    %4145 = vsyncpa [#allocation12], 1
    %4146 = vsyncpa [#allocation15], 1

</llo_original>
